<compile_context>
chip_gen: v7x
topology: tpu7x:2x2x1
jax: 0.10.0
libtpu: 0.0.40
codegen_flags: <defaults>
</compile_context>

<pallas_src>
import functools
import math

import jax
import jax.numpy as jnp
from jax.experimental import pallas as pl
from jax.experimental.pallas import tpu as pltpu

_EPS = 1e-5
_VMEM_LIMIT = 40 * 1024 * 1024  # explicit scoped-VMEM cap, safe on v7x (64 MiB)


# -----------------------------------------------------------------------------
# exact (erf-based) GELU.  erf via the Abramowitz & Stegun 7.1.26 polynomial
# (|err| < 1.5e-7, float32-close to nn.GELU(approximate='none')).
def _erf(x):
    a1, a2, a3, a4, a5 = (0.254829592, -0.284496736, 1.421413741,
                          -1.453152027, 1.061405429)
    p = 0.3275911
    ax = jnp.abs(x)
    t = 1.0 / (1.0 + p * ax)
    poly = ((((a5 * t + a4) * t + a3) * t + a2) * t + a1) * t
    y = 1.0 - poly * jnp.exp(-ax * ax)
    return jnp.where(x >= 0, y, -y)


def _gelu(x):
    return 0.5 * x * (1.0 + _erf(x * (1.0 / math.sqrt(2.0))))


def _pick_tile(n):
    """Largest multiple-of-128 divisor of n (capped at 2048); else n itself.
    Multiples >= 512 are preferred implicitly (we keep the largest)."""
    best = None
    t = 128
    while t <= min(n, 2048):
        if n % t == 0:
            best = t
        t += 128
    if best is not None:
        return best
    # TODO(synk): no multiple-of-128 divisor of N -> single full-extent block.
    return n


def _pick_dh_tile(dh, nx, ny):
    """dim_head tile for the factorized-kernel stage: largest divisor of dh whose
    per-step VMEM footprint keeps double-buffering alive on v7x (64 MiB)."""
    per_ch = nx * ny * 14 + 64   # ~bytes/channel of live data incl. dbl-buffered IO
    budget = 6 * 1024 * 1024
    for cand in range(dh, 0, -1):
        if dh % cand != 0:
            continue
        if cand * per_ch > budget:
            continue
        if cand != dh and (cand * nx) % 8 != 0:
            continue
        return cand
    return 1


# -----------------------------------------------------------------------------
# Kernel 1: GroupNorm(1, dim) (stats precomputed, folded into scale/shift)
#           + in_proj (1x1 conv).  channel-major tiles: (C, TN) in, (HD, TN) out
#           (lane-dense along the spatial axis).
def _in_proj_kernel(u_ref, scale_ref, shift_ref, w_ref, uphi_ref):
    xn = u_ref[0] * scale_ref[0] + shift_ref[0]             # GroupNorm, folded
    r = jnp.dot(w_ref[...], xn.astype(jnp.bfloat16),        # (HD, TN) f32 acc
                preferred_element_type=jnp.float32)
    uphi_ref[0] = r.astype(jnp.bfloat16)


# -----------------------------------------------------------------------------
# Kernel 2: PoolingReducer tail + LowRankKernel, both spatial axes in ONE call
# (grid=(2, B), axis-stacked weights):
#   Linear(no bias, `to_in` conv pre-folded) -> LayerNorm -> Linear -> GELU
#   -> Linear(+bias) -> to_qk (single fused matmul, all heads, q & k)
#   -> continuous-coordinate RoPE -> K_h = q_h k_h^T  (scaling folded into wq).
# All matmul operands bf16, f32 accumulation; norms / GELU in f32.
# TODO(synk): RotaryEmbedding / apply_rotary_pos_emb source was not provided;
# implemented the FactFormer-style split-half RoPE (min_freq=1/64, scale=1,
# pos = linspace(0, 1, n)).
def _reduce_lowrank_kernel(p_ref, w1_ref, lng_ref, lnb_ref, w2_ref, w3_ref,
                           b3_ref, wqk_ref, cos_ref, sin_ref, k_ref,
                           *, heads, dk):
    p = p_ref[0, 0].astype(jnp.bfloat16)                    # (Nk, C)
    h = jnp.dot(p, w1_ref[0], preferred_element_type=jnp.float32)
    mu = jnp.mean(h, axis=-1, keepdims=True)
    var = jnp.mean((h - mu) ** 2, axis=-1, keepdims=True)
    hn = (h - mu) * jax.lax.rsqrt(var + _EPS) * lng_ref[0] + lnb_ref[0]
    h2 = _gelu(jnp.dot(hn.astype(jnp.bfloat16), w2_ref[0],
                       preferred_element_type=jnp.float32))
    ux = (jnp.dot(h2.astype(jnp.bfloat16), w3_ref[0],
                  preferred_element_type=jnp.float32) + b3_ref[0])
    qk = jnp.dot(ux.astype(jnp.bfloat16), wqk_ref[0],
                 preferred_element_type=jnp.float32)        # (Nk, 2*H*dk)
    c = cos_ref[0]                                          # (Nk, dk//2)
    s = sin_ref[0]
    d2 = dk // 2
    dn = (((1,), (1,)), ((), ()))                           # contract last dims
    for hh in range(heads):                                 # tiny static loop
        q = qk[:, hh * dk:(hh + 1) * dk]
        k = qk[:, (heads + hh) * dk:(heads + hh + 1) * dk]
        q1, q2 = q[:, :d2], q[:, d2:]
        k1, k2 = k[:, :d2], k[:, d2:]
        qc = jnp.concatenate([q1 * c - q2 * s, q2 * c + q1 * s],
                             axis=-1).astype(jnp.bfloat16)
        kc = jnp.concatenate([k1 * c - k2 * s, k2 * c + k1 * s],
                             axis=-1).astype(jnp.bfloat16)
        km = jax.lax.dot_general(qc, kc, dn,                # one dot per head
                                 preferred_element_type=jnp.float32)
        k_ref[0, 0, hh] = km.astype(k_ref.dtype)


# -----------------------------------------------------------------------------
# Kernel 3: apply the factorized kernels along both spatial axes, tiled over
# dim_head (grid=(B, heads, Dh//TD)), plus fused InstanceNorm partial stats:
#   s[c,j,l]   = sum_m u_phi[c,j,m] * k_y[l,m]      (one wide matmul)
#   out[c,i,l] = sum_j k_x[i,j]     * s[c,j,l]      (per-channel 2D matmuls,
#                                                    no kx broadcast, no relayout)
# Output lands directly in channel-major (TD, NX, NY) layout.
def _apply_kernels_kernel(kx_ref, ky_ref, x_ref, o_ref, sum_ref, sq_ref,
                          *, td, nx, ny):
    kx = kx_ref[0, 0]                                       # (NX, NX) bf16
    ky = ky_ref[0, 0]                                       # (NY, NY) bf16
    x = x_ref[0, 0]                                         # (TD*NX, NY) bf16
    dn = (((1,), (1,)), ((), ()))
    s = jax.lax.dot_general(x, ky, dn,                      # (TD*NX, NY_l) f32
                            preferred_element_type=jnp.float32)
    s = s.astype(jnp.bfloat16)
    for c in range(td):                                     # static, no broadcast
        oc = jnp.dot(kx, s[c * nx:(c + 1) * nx, :],
                     preferred_element_type=jnp.float32)    # (NX, NY)
        o_ref[0, 0, c] = oc.astype(o_ref.dtype)
    # InstanceNorm partial stats on the stored (rounded) values: saves a full
    # HBM re-read of the chain activation.
    of = o_ref[0, 0].astype(jnp.float32)                    # (TD, NX, NY)
    rs = jnp.sum(of, axis=2)                                # (TD, NX)
    sum_ref[0, 0, 0] = jnp.sum(rs, axis=1, keepdims=True)   # (TD, 1)
    rq = jnp.sum(of * of, axis=2)
    sq_ref[0, 0, 0] = jnp.sum(rq, axis=1, keepdims=True)


# -----------------------------------------------------------------------------
# Kernel 4: to_out — InstanceNorm2d (stats from kernel 3, folded) + 1x1 conv +
# GELU + 1x1 conv, plus the residual add.  channel-major, N-tiled, lane-dense.
def _out_proj_kernel(y_ref, nsc_ref, nsh_ref, w4_ref, w5_ref, skip_ref, o_ref):
    y = y_ref[0].astype(jnp.float32)                        # (HD, TN)
    yn = y * nsc_ref[0] + nsh_ref[0]                        # InstanceNorm folded
    h = _gelu(jnp.dot(w4_ref[...], yn.astype(jnp.bfloat16),
                      preferred_element_type=jnp.float32))  # (dim_out, TN)
    o = jnp.dot(w5_ref[...], h.astype(jnp.bfloat16),
                preferred_element_type=jnp.float32)
    o_ref[0] = o + skip_ref[0]


# -----------------------------------------------------------------------------
# glue
def _rope_half_cos_sin(n, dk):
    min_freq = 1.0 / 64.0
    pos = jnp.linspace(0.0, 1.0, n)
    inv_freq = 1.0 / (10000.0 ** (jnp.arange(0, dk, 2, dtype=jnp.float32) / dk))
    freqs = (pos / min_freq)[:, None] * inv_freq[None, :]   # (n, dk//2)
    return jnp.cos(freqs), jnp.sin(freqs)


def fa_block_2d(u, params, *, heads, dim_head, latent_dim,
                kernel_multiplier=2, scaling=1.0):
    B, C, NX, NY = u.shape
    N = NX * NY
    HD = heads * dim_head
    Dh = dim_head
    L = latent_dim
    dk = dim_head * kernel_multiplier
    d2 = dk // 2
    dim_out = params["w_out2"].shape[0]
    assert dim_out == C, "residual add requires dim_out == dim"

    TN = _pick_tile(N)
    NT = N // TN
    f32, bf16 = jnp.float32, jnp.bfloat16

    # channel-major (NCHW is native -> no transpose for input / skip / output)
    u_cm = u.reshape(B, C, N)
    um = u.reshape(B, C, NX, NY)

    # ---- GroupNorm(1, dim) stats + pooled row/col means of u (XLA prologue).
    # mean_y / sq_mean_y share the same reduce dims (one fused pass), and the
    # global mean / E[u^2] are derived from them without re-reading u.
    mean_y = jnp.mean(um, axis=3)                    # (B, C, NX)
    sq_mean_y = jnp.mean(um * um, axis=3)            # (B, C, NX)
    mean_x = jnp.mean(um, axis=2)                    # (B, C, NY)
    gmean = jnp.mean(mean_y, axis=(1, 2))            # (B,)
    gvar = jnp.mean(sq_mean_y, axis=(1, 2)) - gmean * gmean
    rstd = jax.lax.rsqrt(gvar + _EPS)
    gn_scale = rstd[:, None] * params["gn_gamma"][None, :]          # (B, C)
    gn_shift = params["gn_beta"][None, :] - gmean[:, None] * gn_scale

    # ---- kernel 1: GroupNorm + in_proj only (the `uin` tensor is eliminated) --
    w_inproj = params["w_in_proj"].T.astype(bf16)                    # (HD, C)
    uphi_cm = pl.pallas_call(
        _in_proj_kernel,
        grid=(B, NT),
        in_specs=[
            pl.BlockSpec((1, C, TN), lambda b, t: (b, 0, t)),
            pl.BlockSpec((1, C, 1), lambda b, t: (b, 0, 0)),
            pl.BlockSpec((1, C, 1), lambda b, t: (b, 0, 0)),
            pl.BlockSpec((HD, C), lambda b, t: (0, 0)),
        ],
        out_specs=pl.BlockSpec((1, HD, TN), lambda b, t: (b, 0, t)),
        out_shape=jax.ShapeDtypeStruct((B, HD, N), bf16),
        compiler_params=pltpu.CompilerParams(
            dimension_semantics=("parallel", "parallel"),
            vmem_limit_bytes=_VMEM_LIMIT),
    )(u_cm, gn_scale.reshape(B, C, 1), gn_shift.reshape(B, C, 1), w_inproj)

    # ---- pooled means straight from u: GroupNorm affine applied here, the
    #      `to_in` conv commuted into the PoolingReducer weights below ---------
    pooled_x = jnp.transpose(gn_scale[:, :, None] * mean_y
                             + gn_shift[:, :, None], (0, 2, 1))      # (B, NX, C)
    pooled_y = jnp.transpose(gn_scale[:, :, None] * mean_x
                             + gn_shift[:, :, None], (0, 2, 1))      # (B, NY, C)

    # ---- PoolingReducer + LowRankKernel: both axes in ONE pallas_call --------
    NkM = max(NX, NY)

    def _pad_rows3(a):
        return a if a.shape[1] == NkM else jnp.pad(
            a, ((0, 0), (0, NkM - a.shape[1]), (0, 0)))

    def _pad_rows2(a):
        return a if a.shape[0] == NkM else jnp.pad(
            a, ((0, NkM - a.shape[0]), (0, 0)))

    w_to_in = params["w_to_in"]
    w1s = jnp.stack([w_to_in @ params["x_w1"],
                     w_to_in @ params["y_w1"]]).astype(bf16)         # (2, C, C)
    lngs = jnp.stack([params["x_ln_g"], params["y_ln_g"]]).reshape(2, 1, C)
    lnbs = jnp.stack([params["x_ln_b"], params["y_ln_b"]]).reshape(2, 1, C)
    w2s = jnp.stack([params["x_w2"], params["y_w2"]]).astype(bf16)   # (2, C, 2C)
    w3s = jnp.stack([params["x_w3"], params["y_w3"]]).astype(bf16)   # (2, 2C, L)
    b3s = jnp.stack([params["x_b3"], params["y_b3"]]).reshape(2, 1, L)

    def _wqk(ax):
        wq = jnp.transpose(params[f"{ax}_wq"], (1, 0, 2)).reshape(L, heads * dk)
        wk = jnp.transpose(params[f"{ax}_wk"], (1, 0, 2)).reshape(L, heads * dk)
        return jnp.concatenate([wq * scaling, wk], axis=1)           # (L, 2H*dk)

    wqks = jnp.stack([_wqk("x"), _wqk("y")]).astype(bf16)
    cos_x, sin_x = _rope_half_cos_sin(NX, dk)
    cos_y, sin_y = _rope_half_cos_sin(NY, dk)
    coss = jnp.stack([_pad_rows2(cos_x), _pad_rows2(cos_y)])         # (2, NkM, d2)
    sins = jnp.stack([_pad_rows2(sin_x), _pad_rows2(sin_y)])
    pooled = jnp.stack([_pad_rows3(pooled_x), _pad_rows3(pooled_y)]) # (2, B, NkM, C)

    kmat = pl.pallas_call(
        functools.partial(_reduce_lowrank_kernel, heads=heads, dk=dk),
        grid=(2, B),
        in_specs=[
            pl.BlockSpec((1, 1, NkM, C), lambda a, b: (a, b, 0, 0)),
            pl.BlockSpec((1, C, C), lambda a, b: (a, 0, 0)),
            pl.BlockSpec((1, 1, C), lambda a, b: (a, 0, 0)),
            pl.BlockSpec((1, 1, C), lambda a, b: (a, 0, 0)),
            pl.BlockSpec((1, C, 2 * C), lambda a, b: (a, 0, 0)),
            pl.BlockSpec((1, 2 * C, L), lambda a, b: (a, 0, 0)),
            pl.BlockSpec((1, 1, L), lambda a, b: (a, 0, 0)),
            pl.BlockSpec((1, L, 2 * heads * dk), lambda a, b: (a, 0, 0)),
            pl.BlockSpec((1, NkM, d2), lambda a, b: (a, 0, 0)),
            pl.BlockSpec((1, NkM, d2), lambda a, b: (a, 0, 0)),
        ],
        out_specs=pl.BlockSpec((1, 1, heads, NkM, NkM),
                               lambda a, b: (a, b, 0, 0, 0)),
        out_shape=jax.ShapeDtypeStruct((2, B, heads, NkM, NkM), bf16),
        compiler_params=pltpu.CompilerParams(
            dimension_semantics=("parallel", "parallel"),
            vmem_limit_bytes=_VMEM_LIMIT),
    )(pooled, w1s, lngs, lnbs, w2s, w3s, b3s, wqks, coss, sins)
    k_x = kmat[0, :, :, :NX, :NX]                                    # (B, H, NX, NX)
    k_y = kmat[1, :, :, :NY, :NY]                                    # (B, H, NY, NY)

    # ---- apply factorized kernels, tiled over dim_head, fused IN stats -------
    TD = _pick_dh_tile(Dh, NX, NY)
    ND = Dh // TD
    xphi = uphi_cm.reshape(B, heads, Dh * NX, NY)
    chain, ch_sum, ch_sq = pl.pallas_call(
        functools.partial(_apply_kernels_kernel, td=TD, nx=NX, ny=NY),
        grid=(B, heads, ND),
        in_specs=[
            pl.BlockSpec((1, 1, NX, NX), lambda b, h, d: (b, h, 0, 0)),
            pl.BlockSpec((1, 1, NY, NY), lambda b, h, d: (b, h, 0, 0)),
            pl.BlockSpec((1, 1, TD * NX, NY), lambda b, h, d: (b, h, d, 0)),
        ],
        out_specs=[
            pl.BlockSpec((1, 1, TD, NX, NY), lambda b, h, d: (b, h, d, 0, 0)),
            pl.BlockSpec((1, 1, 1, TD, 1), lambda b, h, d: (b, h, d, 0, 0)),
            pl.BlockSpec((1, 1, 1, TD, 1), lambda b, h, d: (b, h, d, 0, 0)),
        ],
        out_shape=(jax.ShapeDtypeStruct((B, heads, Dh, NX, NY), bf16),
                   jax.ShapeDtypeStruct((B, heads, ND, TD, 1), f32),
                   jax.ShapeDtypeStruct((B, heads, ND, TD, 1), f32)),
        compiler_params=pltpu.CompilerParams(
            dimension_semantics=("parallel", "parallel", "arbitrary"),
            vmem_limit_bytes=_VMEM_LIMIT),
    )(k_x, k_y, xphi)

    # chain is channel-major (b, h*Dh+c, i, l): no transpose needed.
    y_cm = chain.reshape(B, HD, N)

    # ---- InstanceNorm2d stats from the fused per-channel sums ---------------
    cnt = float(N)
    in_mean = ch_sum.reshape(B, HD) / cnt
    in_var = jnp.maximum(ch_sq.reshape(B, HD) / cnt - in_mean * in_mean, 0.0)
    in_scale = jax.lax.rsqrt(in_var + _EPS)
    in_shift = -in_mean * in_scale

    # ---- to_out (norm + conv1x1 + GELU + conv1x1) + residual ----------------
    out_cm = pl.pallas_call(
        _out_proj_kernel,
        grid=(B, NT),
        in_specs=[
            pl.BlockSpec((1, HD, TN), lambda b, t: (b, 0, t)),
            pl.BlockSpec((1, HD, 1), lambda b, t: (b, 0, 0)),
            pl.BlockSpec((1, HD, 1), lambda b, t: (b, 0, 0)),
            pl.BlockSpec((dim_out, HD), lambda b, t: (0, 0)),
            pl.BlockSpec((dim_out, dim_out), lambda b, t: (0, 0)),
            pl.BlockSpec((1, C, TN), lambda b, t: (b, 0, t)),
        ],
        out_specs=pl.BlockSpec((1, dim_out, TN), lambda b, t: (b, 0, t)),
        out_shape=jax.ShapeDtypeStruct((B, dim_out, N), f32),
        compiler_params=pltpu.CompilerParams(
            dimension_semantics=("parallel", "parallel"),
            vmem_limit_bytes=_VMEM_LIMIT),
    )(y_cm, in_scale.reshape(B, HD, 1), in_shift.reshape(B, HD, 1),
      params["w_out1"].T.astype(bf16), params["w_out2"].T.astype(bf16), u_cm)

    return out_cm.reshape(B, dim_out, NX, NY)


# -----------------------------------------------------------------------------
# deterministic synthetic parameters (shapes from FABlock2D.__init__),
# stored in (in, out) orientation; the wrapper transposes/concats/casts.
def init_params(key, dim, dim_head, latent_dim, heads, dim_out,
                kernel_multiplier=2):
    hd = heads * dim_head
    dk = dim_head * kernel_multiplier
    keys = iter(jax.random.split(key, 24))

    def nrm(shape, scale=0.25):
        return scale * jax.random.normal(next(keys), shape, jnp.float32)

    p = {
        "gn_gamma": 1.0 + nrm((dim,), 0.1),
        "gn_beta": nrm((dim,), 0.1),
        "w_in_proj": nrm((dim, hd)),            # Conv2d(dim, hd, 1), no bias
        "w_to_in": nrm((dim, dim)),             # Conv2d(dim, dim, 1), no bias
        "w_out1": nrm((hd, dim_out)),           # Conv2d(hd, dim_out, 1), no bias
        "w_out2": nrm((dim_out, dim_out)),      # Conv2d(dim_out, dim_out, 1), no bias
    }
    for ax in ("x", "y"):
        p[f"{ax}_w1"] = nrm((dim, dim))                 # PoolingReducer.to_in
        p[f"{ax}_ln_g"] = 1.0 + nrm((dim,), 0.1)        # LayerNorm affine
        p[f"{ax}_ln_b"] = nrm((dim,), 0.1)
        p[f"{ax}_w2"] = nrm((dim, 2 * dim))             # Linear(dim, 2*dim)
        p[f"{ax}_w3"] = nrm((2 * dim, latent_dim))      # Linear(2*dim, latent)
        p[f"{ax}_b3"] = nrm((latent_dim,), 0.1)
        p[f"{ax}_wq"] = nrm((heads, latent_dim, dk))    # to_qk (q half)
        p[f"{ax}_wk"] = nrm((heads, latent_dim, dk))    # to_qk (k half)
    return p


if __name__ == "__main__":
    B, dim, NX, NY = 2, 8, 16, 16
    heads, dim_head, latent_dim, dim_out = 2, 8, 16, 8   # dim_out == dim
    kernel_multiplier = 2

    key = jax.random.PRNGKey(0)
    k_u, k_p = jax.random.split(key)
    u = jax.random.normal(k_u, (B, dim, NX, NY), jnp.float32)
    params = init_params(k_p, dim, dim_head, latent_dim, heads, dim_out,
                         kernel_multiplier)

    fwd = jax.jit(functools.partial(
        fa_block_2d, heads=heads, dim_head=dim_head,
        latent_dim=latent_dim, kernel_multiplier=kernel_multiplier))
    out = jax.block_until_ready(fwd(u, params))

    assert out.shape == (B, dim_out, NX, NY), out.shape
    assert bool(jnp.all(jnp.isfinite(out)))
    print("KERNEL_OK")
</pallas_src>

<mosaic_0001>
module attributes {stable_mosaic.version = 11 : i64} {
  func.func @_in_proj_kernel(%arg0: i32, %arg1: i32, %arg2: memref<1x8x256xf32, #tpu.memory_space<vmem>>, %arg3: memref<1x8x1xf32, #tpu.memory_space<vmem>>, %arg4: memref<1x8x1xf32, #tpu.memory_space<vmem>>, %arg5: memref<16x8xbf16, #tpu.memory_space<vmem>>, %arg6: memref<1x16x256xbf16, #tpu.memory_space<vmem>>) attributes {dimension_semantics = [#tpu.dimension_semantics<parallel>, #tpu.dimension_semantics<parallel>], iteration_bounds = array<i64: 2, 1>, scalar_prefetch = 0 : i64, scratch_operands = 0 : i64, tpu.core_type = #tpu.core_type<tc>, window_params = [{transform_indices = @transform_0, window_bounds = array<i64: 1, 8, 256>}, {transform_indices = @transform_1, window_bounds = array<i64: 1, 8, 1>}, {transform_indices = @transform_2, window_bounds = array<i64: 1, 8, 1>}, {pipeline_mode = #tpu.pipeline_mode<synchronous>, transform_indices = @transform_3, window_bounds = array<i64: 16, 8>}, {transform_indices = @transform_4, window_bounds = array<i64: 1, 16, 256>}]} {
    %c0 = arith.constant 0 : index
    %c0_0 = arith.constant 0 : index
    %c0_1 = arith.constant 0 : index
    %0 = vector.load %arg2[%c0, %c0_0, %c0_1] : memref<1x8x256xf32, #tpu.memory_space<vmem>>, vector<1x8x256xf32>
    %1 = vector.shape_cast %0 : vector<1x8x256xf32> to vector<8x256xf32>
    %c0_2 = arith.constant 0 : index
    %c0_3 = arith.constant 0 : index
    %c0_4 = arith.constant 0 : index
    %2 = vector.load %arg3[%c0_2, %c0_3, %c0_4] : memref<1x8x1xf32, #tpu.memory_space<vmem>>, vector<1x8x1xf32>
    %3 = vector.shape_cast %2 : vector<1x8x1xf32> to vector<8x1xf32>
    %4 = vector.broadcast %3 : vector<8x1xf32> to vector<8x256xf32>
    %5 = arith.mulf %1, %4 : vector<8x256xf32>
    %c0_5 = arith.constant 0 : index
    %c0_6 = arith.constant 0 : index
    %c0_7 = arith.constant 0 : index
    %6 = vector.load %arg4[%c0_5, %c0_6, %c0_7] : memref<1x8x1xf32, #tpu.memory_space<vmem>>, vector<1x8x1xf32>
    %7 = vector.shape_cast %6 : vector<1x8x1xf32> to vector<8x1xf32>
    %8 = vector.broadcast %7 : vector<8x1xf32> to vector<8x256xf32>
    %9 = arith.addf %5, %8 : vector<8x256xf32>
    %c0_8 = arith.constant 0 : index
    %c0_9 = arith.constant 0 : index
    %10 = vector.load %arg5[%c0_8, %c0_9] : memref<16x8xbf16, #tpu.memory_space<vmem>>, vector<16x8xbf16>
    %11 = arith.truncf %9 : vector<8x256xf32> to vector<8x256xbf16>
    %cst = arith.constant dense<0.000000e+00> : vector<16x256xf32>
    %12 = tpu.matmul %10, %11, %cst {dimension_numbers = #tpu.dot_dimension_numbers<[1], [0], [0], [1], [0, 0, 1, 1], [], []>} : vector<16x8xbf16>, vector<8x256xbf16>, vector<16x256xf32> -> vector<16x256xf32>
    %13 = arith.truncf %12 : vector<16x256xf32> to vector<16x256xbf16>
    %c0_10 = arith.constant 0 : index
    %c0_11 = arith.constant 0 : index
    %c0_12 = arith.constant 0 : index
    %14 = vector.load %arg6[%c0_10, %c0_11, %c0_12] : memref<1x16x256xbf16, #tpu.memory_space<vmem>>, vector<1x16x256xbf16>
    %15 = vector.shape_cast %14 : vector<1x16x256xbf16> to vector<16x256xbf16>
    %16 = vector.shape_cast %13 : vector<16x256xbf16> to vector<1x16x256xbf16>
    tpu.vector_store %arg6[%c0_10, %c0_11, %c0_12], %16 {strides = array<i32>} : memref<1x16x256xbf16, #tpu.memory_space<vmem>>, vector<1x16x256xbf16>,
    return
  }
  func.func @transform_0(%arg0: i32, %arg1: i32) -> (i32, i32, i32) {
    %c0_i32 = arith.constant 0 : i32
    %c0_i32_0 = arith.constant 0 : i32
    return %arg0, %c0_i32, %arg1 : i32, i32, i32
  }
  func.func @transform_1(%arg0: i32, %arg1: i32) -> (i32, i32, i32) {
    %c0_i32 = arith.constant 0 : i32
    %c0_i32_0 = arith.constant 0 : i32
    %c0_i32_1 = arith.constant 0 : i32
    return %arg0, %c0_i32, %c0_i32_0 : i32, i32, i32
  }
  func.func @transform_2(%arg0: i32, %arg1: i32) -> (i32, i32, i32) {
    %c0_i32 = arith.constant 0 : i32
    %c0_i32_0 = arith.constant 0 : i32
    %c0_i32_1 = arith.constant 0 : i32
    return %arg0, %c0_i32, %c0_i32_0 : i32, i32, i32
  }
  func.func @transform_3(%arg0: i32, %arg1: i32) -> (i32, i32) {
    %c0_i32 = arith.constant 0 : i32
    %c0_i32_0 = arith.constant 0 : i32
    %c0_i32_1 = arith.constant 0 : i32
    return %c0_i32, %c0_i32_0 : i32, i32
  }
  func.func @transform_4(%arg0: i32, %arg1: i32) -> (i32, i32, i32) {
    %c0_i32 = arith.constant 0 : i32
    %c0_i32_0 = arith.constant 0 : i32
    return %arg0, %c0_i32, %arg1 : i32, i32, i32
  }
}

module attributes {stable_mosaic.version = 11 : i64} {
  func.func @_reduce_lowrank_kernel(%arg0: i32, %arg1: i32, %arg2: memref<1x1x16x8xf32, #tpu.memory_space<vmem>>, %arg3: memref<1x8x8xbf16, #tpu.memory_space<vmem>>, %arg4: memref<1x1x8xf32, #tpu.memory_space<vmem>>, %arg5: memref<1x1x8xf32, #tpu.memory_space<vmem>>, %arg6: memref<1x8x16xbf16, #tpu.memory_space<vmem>>, %arg7: memref<1x16x16xbf16, #tpu.memory_space<vmem>>, %arg8: memref<1x1x16xf32, #tpu.memory_space<vmem>>, %arg9: memref<1x16x64xbf16, #tpu.memory_space<vmem>>, %arg10: memref<1x16x8xf32, #tpu.memory_space<vmem>>, %arg11: memref<1x16x8xf32, #tpu.memory_space<vmem>>, %arg12: memref<1x1x2x16x16xbf16, #tpu.memory_space<vmem>>) attributes {dimension_semantics = [#tpu.dimension_semantics<parallel>, #tpu.dimension_semantics<parallel>], iteration_bounds = array<i64: 2, 2>, scalar_prefetch = 0 : i64, scratch_operands = 0 : i64, tpu.core_type = #tpu.core_type<tc>, window_params = [{transform_indices = @transform_0, window_bounds = array<i64: 1, 1, 16, 8>}, {transform_indices = @transform_1, window_bounds = array<i64: 1, 8, 8>}, {transform_indices = @transform_2, window_bounds = array<i64: 1, 1, 8>}, {transform_indices = @transform_3, window_bounds = array<i64: 1, 1, 8>}, {transform_indices = @transform_4, window_bounds = array<i64: 1, 8, 16>}, {transform_indices = @transform_5, window_bounds = array<i64: 1, 16, 16>}, {transform_indices = @transform_6, window_bounds = array<i64: 1, 1, 16>}, {transform_indices = @transform_7, window_bounds = array<i64: 1, 16, 64>}, {transform_indices = @transform_8, window_bounds = array<i64: 1, 16, 8>}, {transform_indices = @transform_9, window_bounds = array<i64: 1, 16, 8>}, {transform_indices = @transform_10, window_bounds = array<i64: 1, 1, 2, 16, 16>}]} {
    %c0 = arith.constant 0 : index
    %c0_0 = arith.constant 0 : index
    %c0_1 = arith.constant 0 : index
    %c0_2 = arith.constant 0 : index
    %0 = vector.load %arg2[%c0, %c0_0, %c0_1, %c0_2] : memref<1x1x16x8xf32, #tpu.memory_space<vmem>>, vector<1x1x16x8xf32>
    %1 = vector.shape_cast %0 : vector<1x1x16x8xf32> to vector<16x8xf32>
    %2 = arith.truncf %1 : vector<16x8xf32> to vector<16x8xbf16>
    %c0_3 = arith.constant 0 : index
    %c0_4 = arith.constant 0 : index
    %c0_5 = arith.constant 0 : index
    %3 = vector.load %arg3[%c0_3, %c0_4, %c0_5] : memref<1x8x8xbf16, #tpu.memory_space<vmem>>, vector<1x8x8xbf16>
    %4 = vector.shape_cast %3 : vector<1x8x8xbf16> to vector<8x8xbf16>
    %cst = arith.constant dense<0.000000e+00> : vector<16x8xf32>
    %5 = tpu.matmul %2, %4, %cst {dimension_numbers = #tpu.dot_dimension_numbers<[1], [0], [0], [1], [0, 0, 1, 1], [], []>} : vector<16x8xbf16>, vector<8x8xbf16>, vector<16x8xf32> -> vector<16x8xf32>
    %cst_6 = arith.constant dense<0.000000e+00> : vector<16xf32>
    %6 = vector.multi_reduction <add>, %5, %cst_6 [1] : vector<16x8xf32> to vector<16xf32>
    %7 = vector.shape_cast %6 : vector<16xf32> to vector<16x1xf32>
    %cst_7 = arith.constant 8.000000e+00 : f32
    %8 = vector.broadcast %cst_7 : f32 to vector<16x1xf32>
    %9 = arith.divf %7, %8 : vector<16x1xf32>
    %10 = vector.broadcast %9 : vector<16x1xf32> to vector<16x8xf32>
    %11 = arith.subf %5, %10 : vector<16x8xf32>
    %12 = arith.mulf %11, %11 : vector<16x8xf32>
    %cst_8 = arith.constant dense<0.000000e+00> : vector<16xf32>
    %13 = vector.multi_reduction <add>, %12, %cst_8 [1] : vector<16x8xf32> to vector<16xf32>
    %14 = vector.shape_cast %13 : vector<16xf32> to vector<16x1xf32>
    %cst_9 = arith.constant 8.000000e+00 : f32
    %15 = vector.broadcast %cst_9 : f32 to vector<16x1xf32>
    %16 = arith.divf %14, %15 : vector<16x1xf32>
    %17 = vector.broadcast %9 : vector<16x1xf32> to vector<16x8xf32>
    %18 = arith.subf %5, %17 : vector<16x8xf32>
    %cst_10 = arith.constant 9.99999974E-6 : f32
    %19 = vector.broadcast %cst_10 : f32 to vector<16x1xf32>
    %20 = arith.addf %16, %19 : vector<16x1xf32>
    %21 = math.rsqrt %20 : vector<16x1xf32>
    %22 = vector.broadcast %21 : vector<16x1xf32> to vector<16x8xf32>
    %23 = arith.mulf %18, %22 : vector<16x8xf32>
    %c0_11 = arith.constant 0 : index
    %c0_12 = arith.constant 0 : index
    %c0_13 = arith.constant 0 : index
    %24 = vector.load %arg4[%c0_11, %c0_12, %c0_13] : memref<1x1x8xf32, #tpu.memory_space<vmem>>, vector<1x1x8xf32>
    %25 = vector.shape_cast %24 : vector<1x1x8xf32> to vector<1x8xf32>
    %26 = vector.broadcast %25 : vector<1x8xf32> to vector<16x8xf32>
    %27 = arith.mulf %23, %26 : vector<16x8xf32>
    %c0_14 = arith.constant 0 : index
    %c0_15 = arith.constant 0 : index
    %c0_16 = arith.constant 0 : index
    %28 = vector.load %arg5[%c0_14, %c0_15, %c0_16] : memref<1x1x8xf32, #tpu.memory_space<vmem>>, vector<1x1x8xf32>
    %29 = vector.shape_cast %28 : vector<1x1x8xf32> to vector<1x8xf32>
    %30 = vector.broadcast %29 : vector<1x8xf32> to vector<16x8xf32>
    %31 = arith.addf %27, %30 : vector<16x8xf32>
    %32 = arith.truncf %31 : vector<16x8xf32> to vector<16x8xbf16>
    %c0_17 = arith.constant 0 : index
    %c0_18 = arith.constant 0 : index
    %c0_19 = arith.constant 0 : index
    %33 = vector.load %arg6[%c0_17, %c0_18, %c0_19] : memref<1x8x16xbf16, #tpu.memory_space<vmem>>, vector<1x8x16xbf16>
    %34 = vector.shape_cast %33 : vector<1x8x16xbf16> to vector<8x16xbf16>
    %cst_20 = arith.constant dense<0.000000e+00> : vector<16x16xf32>
    %35 = tpu.matmul %32, %34, %cst_20 {dimension_numbers = #tpu.dot_dimension_numbers<[1], [0], [0], [1], [0, 0, 1, 1], [], []>} : vector<16x8xbf16>, vector<8x16xbf16>, vector<16x16xf32> -> vector<16x16xf32>
    %cst_21 = arith.constant 5.000000e-01 : f32
    %36 = vector.broadcast %cst_21 : f32 to vector<16x16xf32>
    %37 = arith.mulf %36, %35 : vector<16x16xf32>
    %cst_22 = arith.constant 0.707106769 : f32
    %38 = vector.broadcast %cst_22 : f32 to vector<16x16xf32>
    %39 = arith.mulf %35, %38 : vector<16x16xf32>
    %40 = math.absf %39 : vector<16x16xf32>
    %cst_23 = arith.constant 0.327591091 : f32
    %41 = vector.broadcast %cst_23 : f32 to vector<16x16xf32>
    %42 = arith.mulf %41, %40 : vector<16x16xf32>
    %cst_24 = arith.constant 1.000000e+00 : f32
    %43 = vector.broadcast %cst_24 : f32 to vector<16x16xf32>
    %44 = arith.addf %43, %42 : vector<16x16xf32>
    %cst_25 = arith.constant 1.000000e+00 : f32
    %45 = vector.broadcast %cst_25 : f32 to vector<16x16xf32>
    %46 = arith.divf %45, %44 : vector<16x16xf32>
    %cst_26 = arith.constant 1.06140542 : f32
    %47 = vector.broadcast %cst_26 : f32 to vector<16x16xf32>
    %48 = arith.mulf %47, %46 : vector<16x16xf32>
    %cst_27 = arith.constant -1.45315206 : f32
    %49 = vector.broadcast %cst_27 : f32 to vector<16x16xf32>
    %50 = arith.addf %48, %49 : vector<16x16xf32>
    %51 = arith.mulf %50, %46 : vector<16x16xf32>
    %cst_28 = arith.constant 1.42141378 : f32
    %52 = vector.broadcast %cst_28 : f32 to vector<16x16xf32>
    %53 = arith.addf %51, %52 : vector<16x16xf32>
    %54 = arith.mulf %53, %46 : vector<16x16xf32>
    %cst_29 = arith.constant -0.284496725 : f32
    %55 = vector.broadcast %cst_29 : f32 to vector<16x16xf32>
    %56 = arith.addf %54, %55 : vector<16x16xf32>
    %57 = arith.mulf %56, %46 : vector<16x16xf32>
    %cst_30 = arith.constant 0.254829586 : f32
    %58 = vector.broadcast %cst_30 : f32 to vector<16x16xf32>
    %59 = arith.addf %57, %58 : vector<16x16xf32>
    %60 = arith.mulf %59, %46 : vector<16x16xf32>
    %cst_31 = arith.constant 0.000000e+00 : f32
    %61 = vector.broadcast %cst_31 : f32 to vector<16x16xf32>
    %62 = arith.subf %61, %40 : vector<16x16xf32>
    %63 = arith.mulf %62, %40 : vector<16x16xf32>
    %64 = math.exp %63 : vector<16x16xf32>
    %65 = arith.mulf %60, %64 : vector<16x16xf32>
    %cst_32 = arith.constant 1.000000e+00 : f32
    %66 = vector.broadcast %cst_32 : f32 to vector<16x16xf32>
    %67 = arith.subf %66, %65 : vector<16x16xf32>
    %cst_33 = arith.constant 0.000000e+00 : f32
    %68 = vector.broadcast %cst_33 : f32 to vector<16x16xf32>
    %69 = arith.cmpf oge, %39, %68 : vector<16x16xf32>
    %cst_34 = arith.constant 0.000000e+00 : f32
    %70 = vector.broadcast %cst_34 : f32 to vector<16x16xf32>
    %71 = arith.subf %70, %67 : vector<16x16xf32>
    %72 = arith.select %69, %67, %71 : vector<16x16xi1>, vector<16x16xf32>
    %cst_35 = arith.constant 1.000000e+00 : f32
    %73 = vector.broadcast %cst_35 : f32 to vector<16x16xf32>
    %74 = arith.addf %73, %72 : vector<16x16xf32>
    %75 = arith.mulf %37, %74 : vector<16x16xf32>
    %76 = arith.truncf %75 : vector<16x16xf32> to vector<16x16xbf16>
    %c0_36 = arith.constant 0 : index
    %c0_37 = arith.constant 0 : index
    %c0_38 = arith.constant 0 : index
    %77 = vector.load %arg7[%c0_36, %c0_37, %c0_38] : memref<1x16x16xbf16, #tpu.memory_space<vmem>>, vector<1x16x16xbf16>
    %78 = vector.shape_cast %77 : vector<1x16x16xbf16> to vector<16x16xbf16>
    %cst_39 = arith.constant dense<0.000000e+00> : vector<16x16xf32>
    %79 = tpu.matmul %76, %78, %cst_39 {dimension_numbers = #tpu.dot_dimension_numbers<[1], [0], [0], [1], [0, 0, 1, 1], [], []>} : vector<16x16xbf16>, vector<16x16xbf16>, vector<16x16xf32> -> vector<16x16xf32>
    %c0_40 = arith.constant 0 : index
    %c0_41 = arith.constant 0 : index
    %c0_42 = arith.constant 0 : index
    %80 = vector.load %arg8[%c0_40, %c0_41, %c0_42] : memref<1x1x16xf32, #tpu.memory_space<vmem>>, vector<1x1x16xf32>
    %81 = vector.shape_cast %80 : vector<1x1x16xf32> to vector<1x16xf32>
    %82 = vector.broadcast %81 : vector<1x16xf32> to vector<16x16xf32>
    %83 = arith.addf %79, %82 : vector<16x16xf32>
    %84 = arith.truncf %83 : vector<16x16xf32> to vector<16x16xbf16>
    %c0_43 = arith.constant 0 : index
    %c0_44 = arith.constant 0 : index
    %c0_45 = arith.constant 0 : index
    %85 = vector.load %arg9[%c0_43, %c0_44, %c0_45] : memref<1x16x64xbf16, #tpu.memory_space<vmem>>, vector<1x16x64xbf16>
    %86 = vector.shape_cast %85 : vector<1x16x64xbf16> to vector<16x64xbf16>
    %cst_46 = arith.constant dense<0.000000e+00> : vector<16x64xf32>
    %87 = tpu.matmul %84, %86, %cst_46 {dimension_numbers = #tpu.dot_dimension_numbers<[1], [0], [0], [1], [0, 0, 1, 1], [], []>} : vector<16x16xbf16>, vector<16x64xbf16>, vector<16x64xf32> -> vector<16x64xf32>
    %c0_47 = arith.constant 0 : index
    %c0_48 = arith.constant 0 : index
    %c0_49 = arith.constant 0 : index
    %88 = vector.load %arg10[%c0_47, %c0_48, %c0_49] : memref<1x16x8xf32, #tpu.memory_space<vmem>>, vector<1x16x8xf32>
    %89 = vector.shape_cast %88 : vector<1x16x8xf32> to vector<16x8xf32>
    %c0_50 = arith.constant 0 : index
    %c0_51 = arith.constant 0 : index
    %c0_52 = arith.constant 0 : index
    %90 = vector.load %arg11[%c0_50, %c0_51, %c0_52] : memref<1x16x8xf32, #tpu.memory_space<vmem>>, vector<1x16x8xf32>
    %91 = vector.shape_cast %90 : vector<1x16x8xf32> to vector<16x8xf32>
    %92 = vector.extract_strided_slice %87 {offsets = [0, 0], sizes = [16, 16], strides = [1, 1]} : vector<16x64xf32> to vector<16x16xf32>
    %93 = vector.extract_strided_slice %87 {offsets = [0, 32], sizes = [16, 16], strides = [1, 1]} : vector<16x64xf32> to vector<16x16xf32>
    %94 = vector.extract_strided_slice %92 {offsets = [0, 0], sizes = [16, 8], strides = [1, 1]} : vector<16x16xf32> to vector<16x8xf32>
    %95 = vector.extract_strided_slice %92 {offsets = [0, 8], sizes = [16, 8], strides = [1, 1]} : vector<16x16xf32> to vector<16x8xf32>
    %96 = vector.extract_strided_slice %93 {offsets = [0, 0], sizes = [16, 8], strides = [1, 1]} : vector<16x16xf32> to vector<16x8xf32>
    %97 = vector.extract_strided_slice %93 {offsets = [0, 8], sizes = [16, 8], strides = [1, 1]} : vector<16x16xf32> to vector<16x8xf32>
    %98 = arith.mulf %94, %89 : vector<16x8xf32>
    %99 = arith.mulf %95, %91 : vector<16x8xf32>
    %100 = arith.subf %98, %99 : vector<16x8xf32>
    %101 = arith.mulf %95, %89 : vector<16x8xf32>
    %102 = arith.mulf %94, %91 : vector<16x8xf32>
    %103 = arith.addf %101, %102 : vector<16x8xf32>
    %104 = tpu.concatenate %100, %103 in 1 : vector<16x8xf32>, vector<16x8xf32> -> vector<16x16xf32>
    %105 = arith.truncf %104 : vector<16x16xf32> to vector<16x16xbf16>
    %106 = arith.mulf %96, %89 : vector<16x8xf32>
    %107 = arith.mulf %97, %91 : vector<16x8xf32>
    %108 = arith.subf %106, %107 : vector<16x8xf32>
    %109 = arith.mulf %97, %89 : vector<16x8xf32>
    %110 = arith.mulf %96, %91 : vector<16x8xf32>
    %111 = arith.addf %109, %110 : vector<16x8xf32>
    %112 = tpu.concatenate %108, %111 in 1 : vector<16x8xf32>, vector<16x8xf32> -> vector<16x16xf32>
    %113 = arith.truncf %112 : vector<16x16xf32> to vector<16x16xbf16>
    %cst_53 = arith.constant dense<0.000000e+00> : vector<16x16xf32>
    %114 = tpu.matmul %105, %113, %cst_53 {dimension_numbers = #tpu.dot_dimension_numbers<[1], [1], [0], [0], [0, 0, 1, 0], [], []>} : vector<16x16xbf16>, vector<16x16xbf16>, vector<16x16xf32> -> vector<16x16xf32>
    %115 = arith.truncf %114 : vector<16x16xf32> to vector<16x16xbf16>
    %c0_54 = arith.constant 0 : index
    %c0_55 = arith.constant 0 : index
    %c0_56 = arith.constant 0 : index
    %c0_57 = arith.constant 0 : index
    %c0_58 = arith.constant 0 : index
    %116 = vector.load %arg12[%c0_54, %c0_55, %c0_56, %c0_57, %c0_58] : memref<1x1x2x16x16xbf16, #tpu.memory_space<vmem>>, vector<1x1x1x16x16xbf16>
    %117 = vector.shape_cast %116 : vector<1x1x1x16x16xbf16> to vector<16x16xbf16>
    %118 = vector.shape_cast %115 : vector<16x16xbf16> to vector<1x1x1x16x16xbf16>
    tpu.vector_store %arg12[%c0_54, %c0_55, %c0_56, %c0_57, %c0_58], %118 {strides = array<i32>} : memref<1x1x2x16x16xbf16, #tpu.memory_space<vmem>>, vector<1x1x1x16x16xbf16>,
    %119 = vector.extract_strided_slice %87 {offsets = [0, 16], sizes = [16, 16], strides = [1, 1]} : vector<16x64xf32> to vector<16x16xf32>
    %120 = vector.extract_strided_slice %87 {offsets = [0, 48], sizes = [16, 16], strides = [1, 1]} : vector<16x64xf32> to vector<16x16xf32>
    %121 = vector.extract_strided_slice %119 {offsets = [0, 0], sizes = [16, 8], strides = [1, 1]} : vector<16x16xf32> to vector<16x8xf32>
    %122 = vector.extract_strided_slice %119 {offsets = [0, 8], sizes = [16, 8], strides = [1, 1]} : vector<16x16xf32> to vector<16x8xf32>
    %123 = vector.extract_strided_slice %120 {offsets = [0, 0], sizes = [16, 8], strides = [1, 1]} : vector<16x16xf32> to vector<16x8xf32>
    %124 = vector.extract_strided_slice %120 {offsets = [0, 8], sizes = [16, 8], strides = [1, 1]} : vector<16x16xf32> to vector<16x8xf32>
    %125 = arith.mulf %121, %89 : vector<16x8xf32>
    %126 = arith.mulf %122, %91 : vector<16x8xf32>
    %127 = arith.subf %125, %126 : vector<16x8xf32>
    %128 = arith.mulf %122, %89 : vector<16x8xf32>
    %129 = arith.mulf %121, %91 : vector<16x8xf32>
    %130 = arith.addf %128, %129 : vector<16x8xf32>
    %131 = tpu.concatenate %127, %130 in 1 : vector<16x8xf32>, vector<16x8xf32> -> vector<16x16xf32>
    %132 = arith.truncf %131 : vector<16x16xf32> to vector<16x16xbf16>
    %133 = arith.mulf %123, %89 : vector<16x8xf32>
    %134 = arith.mulf %124, %91 : vector<16x8xf32>
    %135 = arith.subf %133, %134 : vector<16x8xf32>
    %136 = arith.mulf %124, %89 : vector<16x8xf32>
    %137 = arith.mulf %123, %91 : vector<16x8xf32>
    %138 = arith.addf %136, %137 : vector<16x8xf32>
    %139 = tpu.concatenate %135, %138 in 1 : vector<16x8xf32>, vector<16x8xf32> -> vector<16x16xf32>
    %140 = arith.truncf %139 : vector<16x16xf32> to vector<16x16xbf16>
    %cst_59 = arith.constant dense<0.000000e+00> : vector<16x16xf32>
    %141 = tpu.matmul %132, %140, %cst_59 {dimension_numbers = #tpu.dot_dimension_numbers<[1], [1], [0], [0], [0, 0, 1, 0], [], []>} : vector<16x16xbf16>, vector<16x16xbf16>, vector<16x16xf32> -> vector<16x16xf32>
    %142 = arith.truncf %141 : vector<16x16xf32> to vector<16x16xbf16>
    %c0_60 = arith.constant 0 : index
    %c0_61 = arith.constant 0 : index
    %c1 = arith.constant 1 : index
    %c0_62 = arith.constant 0 : index
    %c0_63 = arith.constant 0 : index
    %143 = vector.load %arg12[%c0_60, %c0_61, %c1, %c0_62, %c0_63] : memref<1x1x2x16x16xbf16, #tpu.memory_space<vmem>>, vector<1x1x1x16x16xbf16>
    %144 = vector.shape_cast %143 : vector<1x1x1x16x16xbf16> to vector<16x16xbf16>
    %145 = vector.shape_cast %142 : vector<16x16xbf16> to vector<1x1x1x16x16xbf16>
    tpu.vector_store %arg12[%c0_60, %c0_61, %c1, %c0_62, %c0_63], %145 {strides = array<i32>} : memref<1x1x2x16x16xbf16, #tpu.memory_space<vmem>>, vector<1x1x1x16x16xbf16>,
    return
  }
  func.func @transform_0(%arg0: i32, %arg1: i32) -> (i32, i32, i32, i32) {
    %c0_i32 = arith.constant 0 : i32
    %c0_i32_0 = arith.constant 0 : i32
    %c0_i32_1 = arith.constant 0 : i32
    return %arg0, %arg1, %c0_i32, %c0_i32_0 : i32, i32, i32, i32
  }
  func.func @transform_1(%arg0: i32, %arg1: i32) -> (i32, i32, i32) {
    %c0_i32 = arith.constant 0 : i32
    %c0_i32_0 = arith.constant 0 : i32
    %c0_i32_1 = arith.constant 0 : i32
    return %arg0, %c0_i32, %c0_i32_0 : i32, i32, i32
  }
  func.func @transform_2(%arg0: i32, %arg1: i32) -> (i32, i32, i32) {
    %c0_i32 = arith.constant 0 : i32
    %c0_i32_0 = arith.constant 0 : i32
    %c0_i32_1 = arith.constant 0 : i32
    return %arg0, %c0_i32, %c0_i32_0 : i32, i32, i32
  }
  func.func @transform_3(%arg0: i32, %arg1: i32) -> (i32, i32, i32) {
    %c0_i32 = arith.constant 0 : i32
    %c0_i32_0 = arith.constant 0 : i32
    %c0_i32_1 = arith.constant 0 : i32
    return %arg0, %c0_i32, %c0_i32_0 : i32, i32, i32
  }
  func.func @transform_4(%arg0: i32, %arg1: i32) -> (i32, i32, i32) {
    %c0_i32 = arith.constant 0 : i32
    %c0_i32_0 = arith.constant 0 : i32
    %c0_i32_1 = arith.constant 0 : i32
    return %arg0, %c0_i32, %c0_i32_0 : i32, i32, i32
  }
  func.func @transform_5(%arg0: i32, %arg1: i32) -> (i32, i32, i32) {
    %c0_i32 = arith.constant 0 : i32
    %c0_i32_0 = arith.constant 0 : i32
    %c0_i32_1 = arith.constant 0 : i32
    return %arg0, %c0_i32, %c0_i32_0 : i32, i32, i32
  }
  func.func @transform_6(%arg0: i32, %arg1: i32) -> (i32, i32, i32) {
    %c0_i32 = arith.constant 0 : i32
    %c0_i32_0 = arith.constant 0 : i32
    %c0_i32_1 = arith.constant 0 : i32
    return %arg0, %c0_i32, %c0_i32_0 : i32, i32, i32
  }
  func.func @transform_7(%arg0: i32, %arg1: i32) -> (i32, i32, i32) {
    %c0_i32 = arith.constant 0 : i32
    %c0_i32_0 = arith.constant 0 : i32
    %c0_i32_1 = arith.constant 0 : i32
    return %arg0, %c0_i32, %c0_i32_0 : i32, i32, i32
  }
  func.func @transform_8(%arg0: i32, %arg1: i32) -> (i32, i32, i32) {
    %c0_i32 = arith.constant 0 : i32
    %c0_i32_0 = arith.constant 0 : i32
    %c0_i32_1 = arith.constant 0 : i32
    return %arg0, %c0_i32, %c0_i32_0 : i32, i32, i32
  }
  func.func @transform_9(%arg0: i32, %arg1: i32) -> (i32, i32, i32) {
    %c0_i32 = arith.constant 0 : i32
    %c0_i32_0 = arith.constant 0 : i32
    %c0_i32_1 = arith.constant 0 : i32
    return %arg0, %c0_i32, %c0_i32_0 : i32, i32, i32
  }
  func.func @transform_10(%arg0: i32, %arg1: i32) -> (i32, i32, i32, i32, i32) {
    %c0_i32 = arith.constant 0 : i32
    %c0_i32_0 = arith.constant 0 : i32
    %c0_i32_1 = arith.constant 0 : i32
    %c0_i32_2 = arith.constant 0 : i32
    return %arg0, %arg1, %c0_i32, %c0_i32_0, %c0_i32_1 : i32, i32, i32, i32, i32
  }
}

module attributes {stable_mosaic.version = 11 : i64} {
  func.func @_apply_kernels_kernel(%arg0: i32, %arg1: i32, %arg2: i32, %arg3: memref<1x1x16x16xbf16, #tpu.memory_space<vmem>>, %arg4: memref<1x1x16x16xbf16, #tpu.memory_space<vmem>>, %arg5: memref<1x1x128x16xbf16, #tpu.memory_space<vmem>>, %arg6: memref<1x1x8x16x16xbf16, #tpu.memory_space<vmem>>, %arg7: memref<1x1x1x8x1xf32, #tpu.memory_space<vmem>>, %arg8: memref<1x1x1x8x1xf32, #tpu.memory_space<vmem>>) attributes {dimension_semantics = [#tpu.dimension_semantics<parallel>, #tpu.dimension_semantics<parallel>, #tpu.dimension_semantics<arbitrary>], iteration_bounds = array<i64: 2, 2, 1>, scalar_prefetch = 0 : i64, scratch_operands = 0 : i64, tpu.core_type = #tpu.core_type<tc>, window_params = [{transform_indices = @transform_0, window_bounds = array<i64: 1, 1, 16, 16>}, {transform_indices = @transform_1, window_bounds = array<i64: 1, 1, 16, 16>}, {transform_indices = @transform_2, window_bounds = array<i64: 1, 1, 128, 16>}, {transform_indices = @transform_3, window_bounds = array<i64: 1, 1, 8, 16, 16>}, {transform_indices = @transform_4, window_bounds = array<i64: 1, 1, 1, 8, 1>}, {transform_indices = @transform_5, window_bounds = array<i64: 1, 1, 1, 8, 1>}]} {
    %c0 = arith.constant 0 : index
    %c0_0 = arith.constant 0 : index
    %c0_1 = arith.constant 0 : index
    %c0_2 = arith.constant 0 : index
    %0 = vector.load %arg3[%c0, %c0_0, %c0_1, %c0_2] : memref<1x1x16x16xbf16, #tpu.memory_space<vmem>>, vector<1x1x16x16xbf16>
    %1 = vector.shape_cast %0 : vector<1x1x16x16xbf16> to vector<16x16xbf16>
    %c0_3 = arith.constant 0 : index
    %c0_4 = arith.constant 0 : index
    %c0_5 = arith.constant 0 : index
    %c0_6 = arith.constant 0 : index
    %2 = vector.load %arg4[%c0_3, %c0_4, %c0_5, %c0_6] : memref<1x1x16x16xbf16, #tpu.memory_space<vmem>>, vector<1x1x16x16xbf16>
    %3 = vector.shape_cast %2 : vector<1x1x16x16xbf16> to vector<16x16xbf16>
    %c0_7 = arith.constant 0 : index
    %c0_8 = arith.constant 0 : index
    %c0_9 = arith.constant 0 : index
    %c0_10 = arith.constant 0 : index
    %4 = vector.load %arg5[%c0_7, %c0_8, %c0_9, %c0_10] : memref<1x1x128x16xbf16, #tpu.memory_space<vmem>>, vector<1x1x128x16xbf16>
    %5 = vector.shape_cast %4 : vector<1x1x128x16xbf16> to vector<128x16xbf16>
    %cst = arith.constant dense<0.000000e+00> : vector<128x16xf32>
    %6 = tpu.matmul %5, %3, %cst {dimension_numbers = #tpu.dot_dimension_numbers<[1], [1], [0], [0], [0, 0, 1, 0], [], []>} : vector<128x16xbf16>, vector<16x16xbf16>, vector<128x16xf32> -> vector<128x16xf32>
    %7 = arith.truncf %6 : vector<128x16xf32> to vector<128x16xbf16>
    %8 = vector.extract_strided_slice %7 {offsets = [0, 0], sizes = [16, 16], strides = [1, 1]} : vector<128x16xbf16> to vector<16x16xbf16>
    %cst_11 = arith.constant dense<0.000000e+00> : vector<16x16xf32>
    %9 = tpu.matmul %1, %8, %cst_11 {dimension_numbers = #tpu.dot_dimension_numbers<[1], [0], [0], [1], [0, 0, 1, 1], [], []>} : vector<16x16xbf16>, vector<16x16xbf16>, vector<16x16xf32> -> vector<16x16xf32>
    %10 = arith.truncf %9 : vector<16x16xf32> to vector<16x16xbf16>
    %c0_12 = arith.constant 0 : index
    %c0_13 = arith.constant 0 : index
    %c0_14 = arith.constant 0 : index
    %c0_15 = arith.constant 0 : index
    %c0_16 = arith.constant 0 : index
    %11 = vector.load %arg6[%c0_12, %c0_13, %c0_14, %c0_15, %c0_16] : memref<1x1x8x16x16xbf16, #tpu.memory_space<vmem>>, vector<1x1x1x16x16xbf16>
    %12 = vector.shape_cast %11 : vector<1x1x1x16x16xbf16> to vector<16x16xbf16>
    %13 = vector.shape_cast %10 : vector<16x16xbf16> to vector<1x1x1x16x16xbf16>
    tpu.vector_store %arg6[%c0_12, %c0_13, %c0_14, %c0_15, %c0_16], %13 {strides = array<i32>} : memref<1x1x8x16x16xbf16, #tpu.memory_space<vmem>>, vector<1x1x1x16x16xbf16>,
    %14 = vector.extract_strided_slice %7 {offsets = [16, 0], sizes = [16, 16], strides = [1, 1]} : vector<128x16xbf16> to vector<16x16xbf16>
    %cst_17 = arith.constant dense<0.000000e+00> : vector<16x16xf32>
    %15 = tpu.matmul %1, %14, %cst_17 {dimension_numbers = #tpu.dot_dimension_numbers<[1], [0], [0], [1], [0, 0, 1, 1], [], []>} : vector<16x16xbf16>, vector<16x16xbf16>, vector<16x16xf32> -> vector<16x16xf32>
    %16 = arith.truncf %15 : vector<16x16xf32> to vector<16x16xbf16>
    %c0_18 = arith.constant 0 : index
    %c0_19 = arith.constant 0 : index
    %c1 = arith.constant 1 : index
    %c0_20 = arith.constant 0 : index
    %c0_21 = arith.constant 0 : index
    %17 = vector.load %arg6[%c0_18, %c0_19, %c1, %c0_20, %c0_21] : memref<1x1x8x16x16xbf16, #tpu.memory_space<vmem>>, vector<1x1x1x16x16xbf16>
    %18 = vector.shape_cast %17 : vector<1x1x1x16x16xbf16> to vector<16x16xbf16>
    %19 = vector.shape_cast %16 : vector<16x16xbf16> to vector<1x1x1x16x16xbf16>
    tpu.vector_store %arg6[%c0_18, %c0_19, %c1, %c0_20, %c0_21], %19 {strides = array<i32>} : memref<1x1x8x16x16xbf16, #tpu.memory_space<vmem>>, vector<1x1x1x16x16xbf16>,
    %20 = vector.extract_strided_slice %7 {offsets = [32, 0], sizes = [16, 16], strides = [1, 1]} : vector<128x16xbf16> to vector<16x16xbf16>
    %cst_22 = arith.constant dense<0.000000e+00> : vector<16x16xf32>
    %21 = tpu.matmul %1, %20, %cst_22 {dimension_numbers = #tpu.dot_dimension_numbers<[1], [0], [0], [1], [0, 0, 1, 1], [], []>} : vector<16x16xbf16>, vector<16x16xbf16>, vector<16x16xf32> -> vector<16x16xf32>
    %22 = arith.truncf %21 : vector<16x16xf32> to vector<16x16xbf16>
    %c0_23 = arith.constant 0 : index
    %c0_24 = arith.constant 0 : index
    %c2 = arith.constant 2 : index
    %c0_25 = arith.constant 0 : index
    %c0_26 = arith.constant 0 : index
    %23 = vector.load %arg6[%c0_23, %c0_24, %c2, %c0_25, %c0_26] : memref<1x1x8x16x16xbf16, #tpu.memory_space<vmem>>, vector<1x1x1x16x16xbf16>
    %24 = vector.shape_cast %23 : vector<1x1x1x16x16xbf16> to vector<16x16xbf16>
    %25 = vector.shape_cast %22 : vector<16x16xbf16> to vector<1x1x1x16x16xbf16>
    tpu.vector_store %arg6[%c0_23, %c0_24, %c2, %c0_25, %c0_26], %25 {strides = array<i32>} : memref<1x1x8x16x16xbf16, #tpu.memory_space<vmem>>, vector<1x1x1x16x16xbf16>,
    %26 = vector.extract_strided_slice %7 {offsets = [48, 0], sizes = [16, 16], strides = [1, 1]} : vector<128x16xbf16> to vector<16x16xbf16>
    %cst_27 = arith.constant dense<0.000000e+00> : vector<16x16xf32>
    %27 = tpu.matmul %1, %26, %cst_27 {dimension_numbers = #tpu.dot_dimension_numbers<[1], [0], [0], [1], [0, 0, 1, 1], [], []>} : vector<16x16xbf16>, vector<16x16xbf16>, vector<16x16xf32> -> vector<16x16xf32>
    %28 = arith.truncf %27 : vector<16x16xf32> to vector<16x16xbf16>
    %c0_28 = arith.constant 0 : index
    %c0_29 = arith.constant 0 : index
    %c3 = arith.constant 3 : index
    %c0_30 = arith.constant 0 : index
    %c0_31 = arith.constant 0 : index
    %29 = vector.load %arg6[%c0_28, %c0_29, %c3, %c0_30, %c0_31] : memref<1x1x8x16x16xbf16, #tpu.memory_space<vmem>>, vector<1x1x1x16x16xbf16>
    %30 = vector.shape_cast %29 : vector<1x1x1x16x16xbf16> to vector<16x16xbf16>
    %31 = vector.shape_cast %28 : vector<16x16xbf16> to vector<1x1x1x16x16xbf16>
    tpu.vector_store %arg6[%c0_28, %c0_29, %c3, %c0_30, %c0_31], %31 {strides = array<i32>} : memref<1x1x8x16x16xbf16, #tpu.memory_space<vmem>>, vector<1x1x1x16x16xbf16>,
    %32 = vector.extract_strided_slice %7 {offsets = [64, 0], sizes = [16, 16], strides = [1, 1]} : vector<128x16xbf16> to vector<16x16xbf16>
    %cst_32 = arith.constant dense<0.000000e+00> : vector<16x16xf32>
    %33 = tpu.matmul %1, %32, %cst_32 {dimension_numbers = #tpu.dot_dimension_numbers<[1], [0], [0], [1], [0, 0, 1, 1], [], []>} : vector<16x16xbf16>, vector<16x16xbf16>, vector<16x16xf32> -> vector<16x16xf32>
    %34 = arith.truncf %33 : vector<16x16xf32> to vector<16x16xbf16>
    %c0_33 = arith.constant 0 : index
    %c0_34 = arith.constant 0 : index
    %c4 = arith.constant 4 : index
    %c0_35 = arith.constant 0 : index
    %c0_36 = arith.constant 0 : index
    %35 = vector.load %arg6[%c0_33, %c0_34, %c4, %c0_35, %c0_36] : memref<1x1x8x16x16xbf16, #tpu.memory_space<vmem>>, vector<1x1x1x16x16xbf16>
    %36 = vector.shape_cast %35 : vector<1x1x1x16x16xbf16> to vector<16x16xbf16>
    %37 = vector.shape_cast %34 : vector<16x16xbf16> to vector<1x1x1x16x16xbf16>
    tpu.vector_store %arg6[%c0_33, %c0_34, %c4, %c0_35, %c0_36], %37 {strides = array<i32>} : memref<1x1x8x16x16xbf16, #tpu.memory_space<vmem>>, vector<1x1x1x16x16xbf16>,
    %38 = vector.extract_strided_slice %7 {offsets = [80, 0], sizes = [16, 16], strides = [1, 1]} : vector<128x16xbf16> to vector<16x16xbf16>
    %cst_37 = arith.constant dense<0.000000e+00> : vector<16x16xf32>
    %39 = tpu.matmul %1, %38, %cst_37 {dimension_numbers = #tpu.dot_dimension_numbers<[1], [0], [0], [1], [0, 0, 1, 1], [], []>} : vector<16x16xbf16>, vector<16x16xbf16>, vector<16x16xf32> -> vector<16x16xf32>
    %40 = arith.truncf %39 : vector<16x16xf32> to vector<16x16xbf16>
    %c0_38 = arith.constant 0 : index
    %c0_39 = arith.constant 0 : index
    %c5 = arith.constant 5 : index
    %c0_40 = arith.constant 0 : index
    %c0_41 = arith.constant 0 : index
    %41 = vector.load %arg6[%c0_38, %c0_39, %c5, %c0_40, %c0_41] : memref<1x1x8x16x16xbf16, #tpu.memory_space<vmem>>, vector<1x1x1x16x16xbf16>
    %42 = vector.shape_cast %41 : vector<1x1x1x16x16xbf16> to vector<16x16xbf16>
    %43 = vector.shape_cast %40 : vector<16x16xbf16> to vector<1x1x1x16x16xbf16>
    tpu.vector_store %arg6[%c0_38, %c0_39, %c5, %c0_40, %c0_41], %43 {strides = array<i32>} : memref<1x1x8x16x16xbf16, #tpu.memory_space<vmem>>, vector<1x1x1x16x16xbf16>,
    %44 = vector.extract_strided_slice %7 {offsets = [96, 0], sizes = [16, 16], strides = [1, 1]} : vector<128x16xbf16> to vector<16x16xbf16>
    %cst_42 = arith.constant dense<0.000000e+00> : vector<16x16xf32>
    %45 = tpu.matmul %1, %44, %cst_42 {dimension_numbers = #tpu.dot_dimension_numbers<[1], [0], [0], [1], [0, 0, 1, 1], [], []>} : vector<16x16xbf16>, vector<16x16xbf16>, vector<16x16xf32> -> vector<16x16xf32>
    %46 = arith.truncf %45 : vector<16x16xf32> to vector<16x16xbf16>
    %c0_43 = arith.constant 0 : index
    %c0_44 = arith.constant 0 : index
    %c6 = arith.constant 6 : index
    %c0_45 = arith.constant 0 : index
    %c0_46 = arith.constant 0 : index
    %47 = vector.load %arg6[%c0_43, %c0_44, %c6, %c0_45, %c0_46] : memref<1x1x8x16x16xbf16, #tpu.memory_space<vmem>>, vector<1x1x1x16x16xbf16>
    %48 = vector.shape_cast %47 : vector<1x1x1x16x16xbf16> to vector<16x16xbf16>
    %49 = vector.shape_cast %46 : vector<16x16xbf16> to vector<1x1x1x16x16xbf16>
    tpu.vector_store %arg6[%c0_43, %c0_44, %c6, %c0_45, %c0_46], %49 {strides = array<i32>} : memref<1x1x8x16x16xbf16, #tpu.memory_space<vmem>>, vector<1x1x1x16x16xbf16>,
    %50 = vector.extract_strided_slice %7 {offsets = [112, 0], sizes = [16, 16], strides = [1, 1]} : vector<128x16xbf16> to vector<16x16xbf16>
    %cst_47 = arith.constant dense<0.000000e+00> : vector<16x16xf32>
    %51 = tpu.matmul %1, %50, %cst_47 {dimension_numbers = #tpu.dot_dimension_numbers<[1], [0], [0], [1], [0, 0, 1, 1], [], []>} : vector<16x16xbf16>, vector<16x16xbf16>, vector<16x16xf32> -> vector<16x16xf32>
    %52 = arith.truncf %51 : vector<16x16xf32> to vector<16x16xbf16>
    %c0_48 = arith.constant 0 : index
    %c0_49 = arith.constant 0 : index
    %c7 = arith.constant 7 : index
    %c0_50 = arith.constant 0 : index
    %c0_51 = arith.constant 0 : index
    %53 = vector.load %arg6[%c0_48, %c0_49, %c7, %c0_50, %c0_51] : memref<1x1x8x16x16xbf16, #tpu.memory_space<vmem>>, vector<1x1x1x16x16xbf16>
    %54 = vector.shape_cast %53 : vector<1x1x1x16x16xbf16> to vector<16x16xbf16>
    %55 = vector.shape_cast %52 : vector<16x16xbf16> to vector<1x1x1x16x16xbf16>
    tpu.vector_store %arg6[%c0_48, %c0_49, %c7, %c0_50, %c0_51], %55 {strides = array<i32>} : memref<1x1x8x16x16xbf16, #tpu.memory_space<vmem>>, vector<1x1x1x16x16xbf16>,
    %c0_52 = arith.constant 0 : index
    %c0_53 = arith.constant 0 : index
    %c0_54 = arith.constant 0 : index
    %c0_55 = arith.constant 0 : index
    %c0_56 = arith.constant 0 : index
    %56 = vector.load %arg6[%c0_52, %c0_53, %c0_54, %c0_55, %c0_56] : memref<1x1x8x16x16xbf16, #tpu.memory_space<vmem>>, vector<1x1x8x16x16xbf16>
    %57 = vector.shape_cast %56 : vector<1x1x8x16x16xbf16> to vector<8x16x16xbf16>
    %58 = arith.extf %57 : vector<8x16x16xbf16> to vector<8x16x16xf32>
    %cst_57 = arith.constant dense<0.000000e+00> : vector<8x16xf32>
    %59 = vector.multi_reduction <add>, %58, %cst_57 [2] : vector<8x16x16xf32> to vector<8x16xf32>
    %cst_58 = arith.constant dense<0.000000e+00> : vector<8xf32>
    %60 = vector.multi_reduction <add>, %59, %cst_58 [1] : vector<8x16xf32> to vector<8xf32>
    %61 = vector.shape_cast %60 : vector<8xf32> to vector<8x1xf32>
    %c0_59 = arith.constant 0 : index
    %c0_60 = arith.constant 0 : index
    %c0_61 = arith.constant 0 : index
    %c0_62 = arith.constant 0 : index
    %c0_63 = arith.constant 0 : index
    %62 = vector.load %arg7[%c0_59, %c0_60, %c0_61, %c0_62, %c0_63] : memref<1x1x1x8x1xf32, #tpu.memory_space<vmem>>, vector<1x1x1x8x1xf32>
    %63 = vector.shape_cast %62 : vector<1x1x1x8x1xf32> to vector<8x1xf32>
    %64 = vector.shape_cast %61 : vector<8x1xf32> to vector<1x1x1x8x1xf32>
    tpu.vector_store %arg7[%c0_59, %c0_60, %c0_61, %c0_62, %c0_63], %64 {strides = array<i32>} : memref<1x1x1x8x1xf32, #tpu.memory_space<vmem>>, vector<1x1x1x8x1xf32>,
    %65 = arith.mulf %58, %58 : vector<8x16x16xf32>
    %cst_64 = arith.constant dense<0.000000e+00> : vector<8x16xf32>
    %66 = vector.multi_reduction <add>, %65, %cst_64 [2] : vector<8x16x16xf32> to vector<8x16xf32>
    %cst_65 = arith.constant dense<0.000000e+00> : vector<8xf32>
    %67 = vector.multi_reduction <add>, %66, %cst_65 [1] : vector<8x16xf32> to vector<8xf32>
    %68 = vector.shape_cast %67 : vector<8xf32> to vector<8x1xf32>
    %c0_66 = arith.constant 0 : index
    %c0_67 = arith.constant 0 : index
    %c0_68 = arith.constant 0 : index
    %c0_69 = arith.constant 0 : index
    %c0_70 = arith.constant 0 : index
    %69 = vector.load %arg8[%c0_66, %c0_67, %c0_68, %c0_69, %c0_70] : memref<1x1x1x8x1xf32, #tpu.memory_space<vmem>>, vector<1x1x1x8x1xf32>
    %70 = vector.shape_cast %69 : vector<1x1x1x8x1xf32> to vector<8x1xf32>
    %71 = vector.shape_cast %68 : vector<8x1xf32> to vector<1x1x1x8x1xf32>
    tpu.vector_store %arg8[%c0_66, %c0_67, %c0_68, %c0_69, %c0_70], %71 {strides = array<i32>} : memref<1x1x1x8x1xf32, #tpu.memory_space<vmem>>, vector<1x1x1x8x1xf32>,
    return
  }
  func.func @transform_0(%arg0: i32, %arg1: i32, %arg2: i32) -> (i32, i32, i32, i32) {
    %c0_i32 = arith.constant 0 : i32
    %c0_i32_0 = arith.constant 0 : i32
    %c0_i32_1 = arith.constant 0 : i32
    return %arg0, %arg1, %c0_i32, %c0_i32_0 : i32, i32, i32, i32
  }
  func.func @transform_1(%arg0: i32, %arg1: i32, %arg2: i32) -> (i32, i32, i32, i32) {
    %c0_i32 = arith.constant 0 : i32
    %c0_i32_0 = arith.constant 0 : i32
    %c0_i32_1 = arith.constant 0 : i32
    return %arg0, %arg1, %c0_i32, %c0_i32_0 : i32, i32, i32, i32
  }
  func.func @transform_2(%arg0: i32, %arg1: i32, %arg2: i32) -> (i32, i32, i32, i32) {
    %c0_i32 = arith.constant 0 : i32
    %c0_i32_0 = arith.constant 0 : i32
    return %arg0, %arg1, %arg2, %c0_i32 : i32, i32, i32, i32
  }
  func.func @transform_3(%arg0: i32, %arg1: i32, %arg2: i32) -> (i32, i32, i32, i32, i32) {
    %c0_i32 = arith.constant 0 : i32
    %c0_i32_0 = arith.constant 0 : i32
    %c0_i32_1 = arith.constant 0 : i32
    return %arg0, %arg1, %arg2, %c0_i32, %c0_i32_0 : i32, i32, i32, i32, i32
  }
  func.func @transform_4(%arg0: i32, %arg1: i32, %arg2: i32) -> (i32, i32, i32, i32, i32) {
    %c0_i32 = arith.constant 0 : i32
    %c0_i32_0 = arith.constant 0 : i32
    %c0_i32_1 = arith.constant 0 : i32
    return %arg0, %arg1, %arg2, %c0_i32, %c0_i32_0 : i32, i32, i32, i32, i32
  }
  func.func @transform_5(%arg0: i32, %arg1: i32, %arg2: i32) -> (i32, i32, i32, i32, i32) {
    %c0_i32 = arith.constant 0 : i32
    %c0_i32_0 = arith.constant 0 : i32
    %c0_i32_1 = arith.constant 0 : i32
    return %arg0, %arg1, %arg2, %c0_i32, %c0_i32_0 : i32, i32, i32, i32, i32
  }
}

module attributes {stable_mosaic.version = 11 : i64} {
  func.func @_out_proj_kernel(%arg0: i32, %arg1: i32, %arg2: memref<1x16x256xbf16, #tpu.memory_space<vmem>>, %arg3: memref<1x16x1xf32, #tpu.memory_space<vmem>>, %arg4: memref<1x16x1xf32, #tpu.memory_space<vmem>>, %arg5: memref<8x16xbf16, #tpu.memory_space<vmem>>, %arg6: memref<8x8xbf16, #tpu.memory_space<vmem>>, %arg7: memref<1x8x256xf32, #tpu.memory_space<vmem>>, %arg8: memref<1x8x256xf32, #tpu.memory_space<vmem>>) attributes {dimension_semantics = [#tpu.dimension_semantics<parallel>, #tpu.dimension_semantics<parallel>], iteration_bounds = array<i64: 2, 1>, scalar_prefetch = 0 : i64, scratch_operands = 0 : i64, tpu.core_type = #tpu.core_type<tc>, window_params = [{transform_indices = @transform_0, window_bounds = array<i64: 1, 16, 256>}, {transform_indices = @transform_1, window_bounds = array<i64: 1, 16, 1>}, {transform_indices = @transform_2, window_bounds = array<i64: 1, 16, 1>}, {pipeline_mode = #tpu.pipeline_mode<synchronous>, transform_indices = @transform_3, window_bounds = array<i64: 8, 16>}, {pipeline_mode = #tpu.pipeline_mode<synchronous>, transform_indices = @transform_4, window_bounds = array<i64: 8, 8>}, {transform_indices = @transform_5, window_bounds = array<i64: 1, 8, 256>}, {transform_indices = @transform_6, window_bounds = array<i64: 1, 8, 256>}]} {
    %c0 = arith.constant 0 : index
    %c0_0 = arith.constant 0 : index
    %c0_1 = arith.constant 0 : index
    %0 = vector.load %arg2[%c0, %c0_0, %c0_1] : memref<1x16x256xbf16, #tpu.memory_space<vmem>>, vector<1x16x256xbf16>
    %1 = vector.shape_cast %0 : vector<1x16x256xbf16> to vector<16x256xbf16>
    %2 = arith.extf %1 : vector<16x256xbf16> to vector<16x256xf32>
    %c0_2 = arith.constant 0 : index
    %c0_3 = arith.constant 0 : index
    %c0_4 = arith.constant 0 : index
    %3 = vector.load %arg3[%c0_2, %c0_3, %c0_4] : memref<1x16x1xf32, #tpu.memory_space<vmem>>, vector<1x16x1xf32>
    %4 = vector.shape_cast %3 : vector<1x16x1xf32> to vector<16x1xf32>
    %5 = vector.broadcast %4 : vector<16x1xf32> to vector<16x256xf32>
    %6 = arith.mulf %2, %5 : vector<16x256xf32>
    %c0_5 = arith.constant 0 : index
    %c0_6 = arith.constant 0 : index
    %c0_7 = arith.constant 0 : index
    %7 = vector.load %arg4[%c0_5, %c0_6, %c0_7] : memref<1x16x1xf32, #tpu.memory_space<vmem>>, vector<1x16x1xf32>
    %8 = vector.shape_cast %7 : vector<1x16x1xf32> to vector<16x1xf32>
    %9 = vector.broadcast %8 : vector<16x1xf32> to vector<16x256xf32>
    %10 = arith.addf %6, %9 : vector<16x256xf32>
    %c0_8 = arith.constant 0 : index
    %c0_9 = arith.constant 0 : index
    %11 = vector.load %arg5[%c0_8, %c0_9] : memref<8x16xbf16, #tpu.memory_space<vmem>>, vector<8x16xbf16>
    %12 = arith.truncf %10 : vector<16x256xf32> to vector<16x256xbf16>
    %cst = arith.constant dense<0.000000e+00> : vector<8x256xf32>
    %13 = tpu.matmul %11, %12, %cst {dimension_numbers = #tpu.dot_dimension_numbers<[1], [0], [0], [1], [0, 0, 1, 1], [], []>} : vector<8x16xbf16>, vector<16x256xbf16>, vector<8x256xf32> -> vector<8x256xf32>
    %cst_10 = arith.constant 5.000000e-01 : f32
    %14 = vector.broadcast %cst_10 : f32 to vector<8x256xf32>
    %15 = arith.mulf %14, %13 : vector<8x256xf32>
    %cst_11 = arith.constant 0.707106769 : f32
    %16 = vector.broadcast %cst_11 : f32 to vector<8x256xf32>
    %17 = arith.mulf %13, %16 : vector<8x256xf32>
    %18 = math.absf %17 : vector<8x256xf32>
    %cst_12 = arith.constant 0.327591091 : f32
    %19 = vector.broadcast %cst_12 : f32 to vector<8x256xf32>
    %20 = arith.mulf %19, %18 : vector<8x256xf32>
    %cst_13 = arith.constant 1.000000e+00 : f32
    %21 = vector.broadcast %cst_13 : f32 to vector<8x256xf32>
    %22 = arith.addf %21, %20 : vector<8x256xf32>
    %cst_14 = arith.constant 1.000000e+00 : f32
    %23 = vector.broadcast %cst_14 : f32 to vector<8x256xf32>
    %24 = arith.divf %23, %22 : vector<8x256xf32>
    %cst_15 = arith.constant 1.06140542 : f32
    %25 = vector.broadcast %cst_15 : f32 to vector<8x256xf32>
    %26 = arith.mulf %25, %24 : vector<8x256xf32>
    %cst_16 = arith.constant -1.45315206 : f32
    %27 = vector.broadcast %cst_16 : f32 to vector<8x256xf32>
    %28 = arith.addf %26, %27 : vector<8x256xf32>
    %29 = arith.mulf %28, %24 : vector<8x256xf32>
    %cst_17 = arith.constant 1.42141378 : f32
    %30 = vector.broadcast %cst_17 : f32 to vector<8x256xf32>
    %31 = arith.addf %29, %30 : vector<8x256xf32>
    %32 = arith.mulf %31, %24 : vector<8x256xf32>
    %cst_18 = arith.constant -0.284496725 : f32
    %33 = vector.broadcast %cst_18 : f32 to vector<8x256xf32>
    %34 = arith.addf %32, %33 : vector<8x256xf32>
    %35 = arith.mulf %34, %24 : vector<8x256xf32>
    %cst_19 = arith.constant 0.254829586 : f32
    %36 = vector.broadcast %cst_19 : f32 to vector<8x256xf32>
    %37 = arith.addf %35, %36 : vector<8x256xf32>
    %38 = arith.mulf %37, %24 : vector<8x256xf32>
    %cst_20 = arith.constant 0.000000e+00 : f32
    %39 = vector.broadcast %cst_20 : f32 to vector<8x256xf32>
    %40 = arith.subf %39, %18 : vector<8x256xf32>
    %41 = arith.mulf %40, %18 : vector<8x256xf32>
    %42 = math.exp %41 : vector<8x256xf32>
    %43 = arith.mulf %38, %42 : vector<8x256xf32>
    %cst_21 = arith.constant 1.000000e+00 : f32
    %44 = vector.broadcast %cst_21 : f32 to vector<8x256xf32>
    %45 = arith.subf %44, %43 : vector<8x256xf32>
    %cst_22 = arith.constant 0.000000e+00 : f32
    %46 = vector.broadcast %cst_22 : f32 to vector<8x256xf32>
    %47 = arith.cmpf oge, %17, %46 : vector<8x256xf32>
    %cst_23 = arith.constant 0.000000e+00 : f32
    %48 = vector.broadcast %cst_23 : f32 to vector<8x256xf32>
    %49 = arith.subf %48, %45 : vector<8x256xf32>
    %50 = arith.select %47, %45, %49 : vector<8x256xi1>, vector<8x256xf32>
    %cst_24 = arith.constant 1.000000e+00 : f32
    %51 = vector.broadcast %cst_24 : f32 to vector<8x256xf32>
    %52 = arith.addf %51, %50 : vector<8x256xf32>
    %53 = arith.mulf %15, %52 : vector<8x256xf32>
    %c0_25 = arith.constant 0 : index
    %c0_26 = arith.constant 0 : index
    %54 = vector.load %arg6[%c0_25, %c0_26] : memref<8x8xbf16, #tpu.memory_space<vmem>>, vector<8x8xbf16>
    %55 = arith.truncf %53 : vector<8x256xf32> to vector<8x256xbf16>
    %cst_27 = arith.constant dense<0.000000e+00> : vector<8x256xf32>
    %56 = tpu.matmul %54, %55, %cst_27 {dimension_numbers = #tpu.dot_dimension_numbers<[1], [0], [0], [1], [0, 0, 1, 1], [], []>} : vector<8x8xbf16>, vector<8x256xbf16>, vector<8x256xf32> -> vector<8x256xf32>
    %c0_28 = arith.constant 0 : index
    %c0_29 = arith.constant 0 : index
    %c0_30 = arith.constant 0 : index
    %57 = vector.load %arg7[%c0_28, %c0_29, %c0_30] : memref<1x8x256xf32, #tpu.memory_space<vmem>>, vector<1x8x256xf32>
    %58 = vector.shape_cast %57 : vector<1x8x256xf32> to vector<8x256xf32>
    %59 = arith.addf %56, %58 : vector<8x256xf32>
    %c0_31 = arith.constant 0 : index
    %c0_32 = arith.constant 0 : index
    %c0_33 = arith.constant 0 : index
    %60 = vector.load %arg8[%c0_31, %c0_32, %c0_33] : memref<1x8x256xf32, #tpu.memory_space<vmem>>, vector<1x8x256xf32>
    %61 = vector.shape_cast %60 : vector<1x8x256xf32> to vector<8x256xf32>
    %62 = vector.shape_cast %59 : vector<8x256xf32> to vector<1x8x256xf32>
    tpu.vector_store %arg8[%c0_31, %c0_32, %c0_33], %62 {strides = array<i32>} : memref<1x8x256xf32, #tpu.memory_space<vmem>>, vector<1x8x256xf32>,
    return
  }
  func.func @transform_0(%arg0: i32, %arg1: i32) -> (i32, i32, i32) {
    %c0_i32 = arith.constant 0 : i32
    %c0_i32_0 = arith.constant 0 : i32
    return %arg0, %c0_i32, %arg1 : i32, i32, i32
  }
  func.func @transform_1(%arg0: i32, %arg1: i32) -> (i32, i32, i32) {
    %c0_i32 = arith.constant 0 : i32
    %c0_i32_0 = arith.constant 0 : i32
    %c0_i32_1 = arith.constant 0 : i32
    return %arg0, %c0_i32, %c0_i32_0 : i32, i32, i32
  }
  func.func @transform_2(%arg0: i32, %arg1: i32) -> (i32, i32, i32) {
    %c0_i32 = arith.constant 0 : i32
    %c0_i32_0 = arith.constant 0 : i32
    %c0_i32_1 = arith.constant 0 : i32
    return %arg0, %c0_i32, %c0_i32_0 : i32, i32, i32
  }
  func.func @transform_3(%arg0: i32, %arg1: i32) -> (i32, i32) {
    %c0_i32 = arith.constant 0 : i32
    %c0_i32_0 = arith.constant 0 : i32
    %c0_i32_1 = arith.constant 0 : i32
    return %c0_i32, %c0_i32_0 : i32, i32
  }
  func.func @transform_4(%arg0: i32, %arg1: i32) -> (i32, i32) {
    %c0_i32 = arith.constant 0 : i32
    %c0_i32_0 = arith.constant 0 : i32
    %c0_i32_1 = arith.constant 0 : i32
    return %c0_i32, %c0_i32_0 : i32, i32
  }
  func.func @transform_5(%arg0: i32, %arg1: i32) -> (i32, i32, i32) {
    %c0_i32 = arith.constant 0 : i32
    %c0_i32_0 = arith.constant 0 : i32
    return %arg0, %c0_i32, %arg1 : i32, i32, i32
  }
  func.func @transform_6(%arg0: i32, %arg1: i32) -> (i32, i32, i32) {
    %c0_i32 = arith.constant 0 : i32
    %c0_i32_0 = arith.constant 0 : i32
    return %arg0, %c0_i32, %arg1 : i32, i32, i32
  }
}

</mosaic_0001>

<llo_original>
// kernel: mul.103
$region0: #{mul.103}
  #allocation0 [shape = 's32[1]{0}', space=sflag, size = 0x4, scoped, tag = 'scoped memory for mul.103']
  %s0 = inlined_call_operand.vmem [shape: f32[2,16,1], index: 0, kind: input, shape index: {}]
  %s1 = inlined_call_operand.vmem [shape: f32[2,16,1], index: 1, kind: input, shape index: {}]
  %s2 = inlined_call_operand.vmem [shape: f32[2,16,1], index: 2, kind: output, shape index: {}]
  %v3 = vld [vmem:[%s0] sm:$0x3]
  %v4 = vld [vmem:[%s1] sm:$0x3]
  %5 = xla_tuple %v3, %v4
  %6 = xla_tuple %5
  %v7 = vmul.f32 %v3, %v4
  %8 = xla_tuple %v7
  %9 = vst [vmem:[%s2] sm:$0x3] %v7

// kernel: fa_block_2d.4
$region0: #{fa_block_2d.4}
  #allocation0 [shape = 'u32[]', space=smem, size = 0x4, offset = 0x4, fixed_abs, tag = 'smem constant byte address 0x4 - core index']
  #allocation1 [shape = 'u32[144,128]{1,0:T(1,128)}', space=vmem, size = 0x12000, scoped, tag = 'internal scratch']
  %s0 = inlined_call_operand.vmem [shape: f32[2,8,256], index: 0, kind: input, shape index: {}]
  %s1 = inlined_call_operand.vmem [shape: f32[2,8,1], index: 1, kind: input, shape index: {}]
  %s2 = inlined_call_operand.vmem [shape: f32[2,8,1], index: 2, kind: input, shape index: {}]
  %s3 = inlined_call_operand.vmem [shape: bf16[16,8], index: 3, kind: input, shape index: {}]
  %s4 = inlined_call_operand.vmem [shape: bf16[2,16,256], index: 4, kind: output, shape index: {}]
  %s5 = sld [smem:[#allocation0]]
  $region49: #{fa_block_2d.4} parent=0
    _
  %s7 = ssub.s32 1, %s5
  %s8 = scalar_select 0, %s7, %s5
  loop: start=0, step=1, limit=4
  $region2: #{fa_block_2d.4} parent=0 // loop_pre_header
    _
  $region3: #{fa_block_2d.4} parent=0 // loop_header
    %s10 = sphi 0, %s14
    %p11 = scmp.ge.s32.totalorder %s10, 4
    %s17 = sphi 0, %s29
    %s18 = sphi 0, %s25
    %s19 = sphi 0, %s17
    %s20 = sphi 0, %s18
    %s21 = sphi 0, %s19
    %s22 = sphi 0, %s20
    %s34 = sphi 0, %s36
    %s37 = sphi 0, %s34
    %s38 = sphi 0, %s37
    %s54 = sphi 0, %s38
    %s60 = sphi 0, %s62
    %s63 = sphi 0, %s60
    %s64 = sphi 0, %s63
    %s80 = sphi 0, %s64
    %s86 = sphi 0, %s88
    %s89 = sphi 0, %s86
    %s90 = sphi 0, %s89
    %s106 = sphi 0, %s90
    %s110 = sphi 0, %s110
    %s112 = sphi 0, %s110
    %s113 = sphi 0, %s112
    %s127 = sphi 0, %s113
    %s135 = sphi 0, %s137
    %s138 = sphi 0, %s135
    %s139 = sphi 0, %s138
    %s155 = sphi 0, %s139
  $region4: #{fa_block_2d.4} parent=0 // loop_header_branch
    %13 = sbr.rel (%p11) target = $region8
  $region5: #{fa_block_2d.4} parent=0 // loop_body
    %s15 = ssub.s32 %s10, 1
    %s16 = ssub.s32 %s10, 2
    %s23 = sadd.s32 1, %s18
    %p24 = scmp.ge.s32.totalorder %s23, 1
    %s25 = scalar_select %p24, 0, %s23
    %s26 = sadd.s32 1, %s17
    %s27 = scalar_select %p24, %s26, %s17
    %p28 = scmp.ge.s32.totalorder %s27, 2
    %s29 = scalar_select %p28, 0, %s27
    %s30 = ssub.s32 %s17, %s29
    %s31 = ssub.s32 %s18, %s25
    %s32 = sor.u32 %s30, %s31
    %p33 = scmp.eq.s32.totalorder %s32, 0
    %s35 = sadd.s32 %s34, 1
    %s36 = scalar_select %p33, %s34, %s35
    %p39 = pneg %p33
    %p40 = scmp.eq.s32.totalorder %s10, 1
    %p41 = por %p39, %p40
    %p42 = scmp.ne.s32.totalorder %s34, %s37
    %p43 = scmp.eq.s32.totalorder %s10, 0
    %p44 = por %p42, %p43
    %p45 = scmp.ne.s32.totalorder %s34, %s37
    %p46 = scmp.eq.s32.totalorder %s15, 1
    %p47 = por %p45, %p46
    %p48 = scmp.ne.s32.totalorder %s37, %s38
    %p49 = scmp.eq.s32.totalorder %s15, 0
    %p50 = por %p48, %p49
    %p51 = scmp.ne.s32.totalorder %s37, %s38
    %p52 = scmp.eq.s32.totalorder %s16, 1
    %p53 = por %p51, %p52
    %p55 = scmp.ne.s32.totalorder %s38, %s54
    %p56 = scmp.eq.s32.totalorder %s16, 0
    %p57 = por %p55, %p56
    %s58 = ssub.s32 %s17, %s29
    %p59 = scmp.eq.s32.totalorder %s58, 0
    %s61 = sadd.s32 %s60, 1
    %s62 = scalar_select %p59, %s60, %s61
    %p65 = pneg %p59
    %p66 = scmp.eq.s32.totalorder %s10, 1
    %p67 = por %p65, %p66
    %p68 = scmp.ne.s32.totalorder %s60, %s63
    %p69 = scmp.eq.s32.totalorder %s10, 0
    %p70 = por %p68, %p69
    %p71 = scmp.ne.s32.totalorder %s60, %s63
    %p72 = scmp.eq.s32.totalorder %s15, 1
    %p73 = por %p71, %p72
    %p74 = scmp.ne.s32.totalorder %s63, %s64
    %p75 = scmp.eq.s32.totalorder %s15, 0
    %p76 = por %p74, %p75
    %p77 = scmp.ne.s32.totalorder %s63, %s64
    %p78 = scmp.eq.s32.totalorder %s16, 1
    %p79 = por %p77, %p78
    %p81 = scmp.ne.s32.totalorder %s64, %s80
    %p82 = scmp.eq.s32.totalorder %s16, 0
    %p83 = por %p81, %p82
    %s84 = ssub.s32 %s17, %s29
    %p85 = scmp.eq.s32.totalorder %s84, 0
    %s87 = sadd.s32 %s86, 1
    %s88 = scalar_select %p85, %s86, %s87
    %p91 = pneg %p85
    %p92 = scmp.eq.s32.totalorder %s10, 1
    %p93 = por %p91, %p92
    %p94 = scmp.ne.s32.totalorder %s86, %s89
    %p95 = scmp.eq.s32.totalorder %s10, 0
    %p96 = por %p94, %p95
    %p97 = scmp.ne.s32.totalorder %s86, %s89
    %p98 = scmp.eq.s32.totalorder %s15, 1
    %p99 = por %p97, %p98
    %p100 = scmp.ne.s32.totalorder %s89, %s90
    %p101 = scmp.eq.s32.totalorder %s15, 0
    %p102 = por %p100, %p101
    %p103 = scmp.ne.s32.totalorder %s89, %s90
    %p104 = scmp.eq.s32.totalorder %s16, 1
    %p105 = por %p103, %p104
    %p107 = scmp.ne.s32.totalorder %s90, %s106
    %p108 = scmp.eq.s32.totalorder %s16, 0
    %p109 = por %p107, %p108
    %s111 = sadd.s32 %s110, 1
    %p114 = scmp.eq.s32.totalorder %s10, 1
    %p115 = scmp.ne.s32.totalorder %s110, %s112
    %p116 = scmp.eq.s32.totalorder %s10, 0
    %p117 = por %p115, %p116
    %p118 = scmp.ne.s32.totalorder %s110, %s112
    %p119 = scmp.eq.s32.totalorder %s15, 1
    %p120 = por %p118, %p119
    %p121 = scmp.ne.s32.totalorder %s112, %s113
    %p122 = scmp.eq.s32.totalorder %s15, 0
    %p123 = por %p121, %p122
    %p124 = scmp.ne.s32.totalorder %s112, %s113
    %p125 = scmp.eq.s32.totalorder %s16, 1
    %p126 = por %p124, %p125
    %p128 = scmp.ne.s32.totalorder %s113, %s127
    %p129 = scmp.eq.s32.totalorder %s16, 0
    %p130 = por %p128, %p129
    %s131 = ssub.s32 %s17, %s29
    %s132 = ssub.s32 %s18, %s25
    %s133 = sor.u32 %s131, %s132
    %p134 = scmp.eq.s32.totalorder %s133, 0
    %s136 = sadd.s32 %s135, 1
    %s137 = scalar_select %p134, %s135, %s136
    %p140 = pneg %p134
    %p141 = scmp.eq.s32.totalorder %s10, 1
    %p142 = por %p140, %p141
    %p143 = scmp.ne.s32.totalorder %s135, %s138
    %p144 = scmp.eq.s32.totalorder %s10, 0
    %p145 = por %p143, %p144
    %p146 = scmp.ne.s32.totalorder %s135, %s138
    %p147 = scmp.eq.s32.totalorder %s15, 1
    %p148 = por %p146, %p147
    %p149 = scmp.ne.s32.totalorder %s138, %s139
    %p150 = scmp.eq.s32.totalorder %s15, 0
    %p151 = por %p149, %p150
    %p152 = scmp.ne.s32.totalorder %s138, %s139
    %p153 = scmp.eq.s32.totalorder %s16, 1
    %p154 = por %p152, %p153
    %p156 = scmp.ne.s32.totalorder %s139, %s155
    %p157 = scmp.eq.s32.totalorder %s16, 0
    %p158 = por %p156, %p157
    %p159 = scmp.le.s32.totalorder 1, %s10
    %p160 = scmp.lt.s32.totalorder %s10, 3
    %p161 = pnand %p159, %p160
    %p162 = pneg %p161
    // Predicated region
    $region9: #{fa_block_2d.4} parent=5 // pred_check
      _
    $region10: #{fa_block_2d.4} parent=5 // pred_check_branch
      %164 = sbr.rel (%p161) target = $region12
    $region11: #{fa_block_2d.4} parent=5 // pred_region
      %s165 = ssub.s32 %s10, 1
      // Predicated region
      $region13: #{fa_block_2d.4} parent=11 // pred_check
        %p166 = pneg %p123
      $region14: #{fa_block_2d.4} parent=11 // pred_check_branch
        %168 = sbr.rel (%p166) target = $region16
      $region15: #{fa_block_2d.4} parent=11 // pred_region
        _
      $region16: #{fa_block_2d.4} parent=11 // pred_fallthru
        _
    $region12: #{fa_block_2d.4} parent=5 // pred_fallthru
      _
    %p169 = scmp.lt.s32.totalorder %s10, 2
    // Predicated region
    $region17: #{fa_block_2d.4} parent=5 // pred_check
      %p170 = pneg %p169
    $region18: #{fa_block_2d.4} parent=5 // pred_check_branch
      %172 = sbr.rel (%p170) target = $region20
    $region19: #{fa_block_2d.4} parent=5 // pred_region
      // Predicated region
      $region21: #{fa_block_2d.4} parent=19 // pred_check
        %p173 = pneg %p44
      $region22: #{fa_block_2d.4} parent=19 // pred_check_branch
        %175 = sbr.rel (%p173) target = $region24
      $region23: #{fa_block_2d.4} parent=19 // pred_region
        %s176 = smul.u32 2, %s18
        %p177 = scmp.lt.s32.totalorder %s17, 1
        %s178 = scalar_select %p177, %s17, 1
        %p179 = scmp.lt.s32.totalorder %s176, 1
        %s180 = scalar_select %p179, %s176, 1
        %s181 = smul.addr %s178, 2
        %s182 = sadd.s32 %s180, %s181
        %s183 = smul.addr %s182, 8
        %s184 = scalar_lea.vmem %s0, %s183
        %s185 = smul.u32 2, %s18
      $region24: #{fa_block_2d.4} parent=19 // pred_fallthru
        _
      // Predicated region
      $region25: #{fa_block_2d.4} parent=19 // pred_check
        %p186 = pneg %p70
      $region26: #{fa_block_2d.4} parent=19 // pred_check_branch
        %188 = sbr.rel (%p186) target = $region28
      $region27: #{fa_block_2d.4} parent=19 // pred_region
        %p189 = scmp.lt.s32.totalorder %s17, 1
        %s190 = scalar_select %p189, %s17, 1
        %s191 = smul.addr %s190, 8
        %s192 = scalar_lea.vmem %s1, %s191
      $region28: #{fa_block_2d.4} parent=19 // pred_fallthru
        _
      // Predicated region
      $region29: #{fa_block_2d.4} parent=19 // pred_check
        %p193 = pneg %p96
      $region30: #{fa_block_2d.4} parent=19 // pred_check_branch
        %195 = sbr.rel (%p193) target = $region32
      $region31: #{fa_block_2d.4} parent=19 // pred_region
        %p196 = scmp.lt.s32.totalorder %s17, 1
        %s197 = scalar_select %p196, %s17, 1
        %s198 = smul.addr %s197, 8
        %s199 = scalar_lea.vmem %s2, %s198
      $region32: #{fa_block_2d.4} parent=19 // pred_fallthru
        _
    $region20: #{fa_block_2d.4} parent=5 // pred_fallthru
      _
    %p200 = scmp.le.s32.totalorder 1, %s10
    %p201 = scmp.lt.s32.totalorder %s10, 3
    %p202 = pnand %p200, %p201
    %p203 = pneg %p202
    // Predicated region
    $region33: #{fa_block_2d.4} parent=5 // pred_check
      _
    $region34: #{fa_block_2d.4} parent=5 // pred_check_branch
      %205 = sbr.rel (%p202) target = $region36
    $region35: #{fa_block_2d.4} parent=5 // pred_region
      %s206 = ssub.s32 %s10, 1
      %s207 = smul.u32 2, %s20
      %p208 = scmp.lt.s32.totalorder %s19, 1
      %s209 = scalar_select %p208, %s19, 1
      %p210 = scmp.lt.s32.totalorder %s207, 1
      %s211 = scalar_select %p210, %s207, 1
      %s212 = smul.addr %s209, 2
      %s213 = sadd.s32 %s211, %s212
      %s214 = smul.addr %s213, 8
      %s215 = scalar_lea.vmem %s0, %s214
      %p216 = pneg %p50
      %p217 = pneg %p47
      %p218 = scmp.lt.s32.totalorder %s19, 1
      %s219 = scalar_select %p218, %s19, 1
      %s220 = smul.addr %s219, 8
      %s221 = scalar_lea.vmem %s1, %s220
      %p222 = pneg %p76
      %p223 = pneg %p73
      %p224 = scmp.lt.s32.totalorder %s19, 1
      %s225 = scalar_select %p224, %s19, 1
      %s226 = smul.addr %s225, 8
      %s227 = scalar_lea.vmem %s2, %s226
      %p228 = pneg %p102
      %p229 = pneg %p99
      %p230 = pneg %p123
      %p231 = pneg %p120
      %p232 = pneg %p151
      %p233 = pneg %p148
      %s234 = smul.u32 2, %s20
      %p235 = scmp.lt.s32.totalorder %s19, 1
      %s236 = scalar_select %p235, %s19, 1
      %p237 = scmp.lt.s32.totalorder %s234, 1
      %s238 = scalar_select %p237, %s234, 1
      %s239 = smul.addr %s236, 4
      %s240 = sadd.s32 %s238, %s239
      %s241 = smul.addr %s240, 4
      %s242 = scalar_lea.vmem %s4, %s241
      %s243 = smul.u32 2, %s20
      %p244 = scmp.lt.s32.totalorder %s19, 1
      %s245 = scalar_select %p244, %s19, 1
      %p246 = scmp.lt.s32.totalorder %s243, 1
      %s247 = scalar_select %p246, %s243, 1
      %s248 = smul.addr %s245, 2
      %s249 = sadd.s32 %s247, %s248
      %s250 = smul.addr %s249, 8
      %s251 = scalar_lea.vmem %s0, %s250
      %s252 = smul.u32 2, %s20
      %p253 = scmp.lt.s32.totalorder %s19, 1
      %s254 = scalar_select %p253, %s19, 1
      %s255 = smul.addr %s254, 8
      %s256 = scalar_lea.vmem %s1, %s255
      %p257 = scmp.lt.s32.totalorder %s19, 1
      %s258 = scalar_select %p257, %s19, 1
      %s259 = smul.addr %s258, 8
      %s260 = scalar_lea.vmem %s2, %s259
      %s261 = smul.u32 2, %s20
      %p262 = scmp.lt.s32.totalorder %s19, 1
      %s263 = scalar_select %p262, %s19, 1
      %p264 = scmp.lt.s32.totalorder %s261, 1
      %s265 = scalar_select %p264, %s261, 1
      %s266 = smul.addr %s263, 4
      %s267 = sadd.s32 %s265, %s266
      %s268 = smul.addr %s267, 4
      %s269 = scalar_lea.vmem %s4, %s268
      %s270 = smul.u32 2, %s20
      %v272 = vld [vmem:[%s251] sm:$0xff]
      %v273 = vld [vmem:[%s251 + $0x8] sm:$0xff]
      %v274 = vld [vmem:[%s256] sm:$0xff]
      %276 = vset.pattern.permute.xlu0 0
      %277 = vperm.xlu0 %276, %v274
      %v278 = vpop.permute.xlu0 %277
      %v280 = vmul.f32 %v272, %v278
      %v281 = vmul.f32 %v273, %v278
      %v282 = vld [vmem:[%s260] sm:$0xff]
      %284 = vset.pattern.permute.xlu0 0
      %285 = vperm.xlu0 %284, %v282
      %v286 = vpop.permute.xlu0 %285
      %v288 = vadd.f32 %v280, %v286
      %v289 = vadd.f32 %v281, %v286
      %v290 = vld [vmem:[%s3] sm:$0xf]
      %v291 = vld [vmem:[%s3 + $0x4] sm:$0xf]
      %v292 = vpack.c.bf16 %v288, %v288
      %v293 = vpack.c.bf16 %v289, %v289
      %v296 = vunpack.c.l.b16 %v290
      %v297 = vunpack.c.l.b16 %v291
      %v298 = vpack.c.b16 %v297, %v296
      %vm299 = vcmask 64512
      %v301 = vsel %vm299, %v298, 0
      %vm303 = vcmask 1043456
      %v305 = vsel %vm303, %v292, 0
      %v308 = vsel %vm303, %v293, 0
      %310 = vmatprep.subr.bf16.mxu0 %v308
      %311 = vmatpush1.bf16.msra.mxu0 %v305
      %312 = vmatprep.subr.bf16.mxu0 0
      %313 = vmatpush1.bf16.msra.mxu0 0
      %314 = vmatprep.subr.bf16.mxu0 0
      %315 = vmatpush1.bf16.msra.mxu0 0
      %316 = vmatprep.subr.bf16.mxu0 0
      %317 = vmatpush1.bf16.msra.mxu0 0
      %318 = vmatprep.subr.bf16.mxu0 0
      %319 = vmatpush1.bf16.msra.mxu0 0
      %320 = vmatprep.subr.bf16.mxu0 0
      %321 = vmatpush1.bf16.msra.mxu0 0
      %322 = vmatprep.subr.bf16.mxu0 0
      %323 = vmatpush1.bf16.msra.mxu0 0
      %324 = vmatprep.subr.bf16.mxu0 0
      %325 = vmatpush1.bf16.msra.mxu0 0
      %326 = vmatprep.subr.bf16.mxu0 0
      %327 = vmatpush1.bf16.msra.mxu0 0
      %328 = vmatprep.subr.bf16.mxu0 0
      %329 = vmatpush1.bf16.msra.mxu0 0
      %330 = vmatprep.subr.bf16.mxu0 0
      %331 = vmatpush1.bf16.msra.mxu0 0
      %332 = vmatprep.subr.bf16.mxu0 0
      %333 = vmatpush1.bf16.msra.mxu0 0
      %334 = vmatprep.subr.bf16.mxu0 0
      %335 = vmatpush1.bf16.msra.mxu0 0
      %336 = vmatprep.subr.bf16.mxu0 0
      %337 = vmatpush1.bf16.msra.mxu0 0
      %338 = vmatprep.subr.bf16.mxu0 0
      %339 = vmatpush1.bf16.msra.mxu0 0
      %340 = vmatprep.subr.bf16.mxu0 0
      %341 = vmatpush1.bf16.msra.mxu0 0
      %342 = vmatprep.mubr.bf16.mxu0 0
      %343 = vmatmul.mubr.bf16.gmra.mrb[0].mxu0 %v301
      %v344 = vpop.f32.mrb[0].mxu0
      %v345 = vadd.f32 0.0, %v344
      %v346 = vpop.f32.mrb[0].mxu0
      %v347 = vadd.f32 0.0, %v346
      %v348 = vpop.f32.mrb[0].mxu0
      %v349 = vadd.f32 0.0, %v348
      %v350 = vpop.f32.mrb[0].mxu0
      %v351 = vadd.f32 0.0, %v350
      %352 = vdwg.mxu0
      %v353 = vpack.c.bf16 %v349, %v345
      %v354 = vpack.c.bf16 %v351, %v347
      %v357 = vunpack.c.l.b16 %v353
      %v358 = vunpack.c.l.b16 %v354
      %v359 = vunpack.c.h.b16 %v353
      %v360 = vunpack.c.h.b16 %v354
      %v361 = vpack.c.b16 %v358, %v357
      %v362 = vpack.c.b16 %v360, %v359
      %365 = vst [vmem:[%s269] sm:$0xff] %v361
      %366 = vst [vmem:[%s269 + $0x8] sm:$0xff] %v362
      %s367 = smul.u32 2, %s20
      %p368 = scmp.lt.s32.totalorder %s19, 1
      %s369 = scalar_select %p368, %s19, 1
      %p370 = scmp.lt.s32.totalorder %s367, 1
      %s371 = scalar_select %p370, %s367, 1
      %s372 = smul.addr %s369, 4
      %s373 = sadd.s32 %s371, %s372
      %s374 = smul.addr %s373, 4
      %s375 = scalar_lea.vmem %s4, %s374
      // Predicated region
      $region37: #{fa_block_2d.4} parent=35 // pred_check
        %p376 = pneg %p148
      $region38: #{fa_block_2d.4} parent=35 // pred_check_branch
        %378 = sbr.rel (%p376) target = $region40
      $region39: #{fa_block_2d.4} parent=35 // pred_region
        %s379 = smul.u32 2, %s20
      $region40: #{fa_block_2d.4} parent=35 // pred_fallthru
        _
    $region36: #{fa_block_2d.4} parent=5 // pred_fallthru
      _
    %p380 = scmp.le.s32.totalorder 2, %s10
    // Predicated region
    $region41: #{fa_block_2d.4} parent=5 // pred_check
      %p381 = pneg %p380
    $region42: #{fa_block_2d.4} parent=5 // pred_check_branch
      %383 = sbr.rel (%p381) target = $region44
    $region43: #{fa_block_2d.4} parent=5 // pred_region
      %s384 = ssub.s32 %s10, 2
      // Predicated region
      $region45: #{fa_block_2d.4} parent=43 // pred_check
        %p385 = pneg %p154
      $region46: #{fa_block_2d.4} parent=43 // pred_check_branch
        %387 = sbr.rel (%p385) target = $region48
      $region47: #{fa_block_2d.4} parent=43 // pred_region
        %s388 = smul.u32 2, %s22
        %p389 = scmp.lt.s32.totalorder %s21, 1
        %s390 = scalar_select %p389, %s21, 1
        %p391 = scmp.lt.s32.totalorder %s388, 1
        %s392 = scalar_select %p391, %s388, 1
        %s393 = smul.addr %s390, 4
        %s394 = sadd.s32 %s392, %s393
        %s395 = smul.addr %s394, 4
        %s396 = scalar_lea.vmem %s4, %s395
      $region48: #{fa_block_2d.4} parent=43 // pred_fallthru
        _
    $region44: #{fa_block_2d.4} parent=5 // pred_fallthru
      _
  $region6: #{fa_block_2d.4} parent=0 // loop_footer
    %s14 = sadd.s32 1, %s10
  $region7: #{fa_block_2d.4} parent=0 // loop_footer_branch
    %9 = sbr.rel target = $region3
  $region8: #{fa_block_2d.4} parent=0 // loop_exit
    _

// kernel: fa_block_2d.5
$region0: #{fa_block_2d.5}
  #allocation0 [shape = 'u32[]', space=smem, size = 0x4, offset = 0x4, fixed_abs, tag = 'smem constant byte address 0x4 - core index']
  #allocation1 [shape = 'u32[144,128]{1,0:T(1,128)}', space=vmem, size = 0x12000, scoped, tag = 'internal scratch']
  %s0 = inlined_call_operand.vmem [shape: f32[2,2,16,8], index: 0, kind: input, shape index: {}]
  %s1 = inlined_call_operand.vmem [shape: bf16[2,8,8], index: 1, kind: input, shape index: {}]
  %s2 = inlined_call_operand.vmem [shape: f32[2,1,8], index: 2, kind: input, shape index: {}]
  %s3 = inlined_call_operand.vmem [shape: f32[2,1,8], index: 3, kind: input, shape index: {}]
  %s4 = inlined_call_operand.vmem [shape: bf16[2,8,16], index: 4, kind: input, shape index: {}]
  %s5 = inlined_call_operand.vmem [shape: bf16[2,16,16], index: 5, kind: input, shape index: {}]
  %s6 = inlined_call_operand.vmem [shape: f32[2,1,16], index: 6, kind: input, shape index: {}]
  %s7 = inlined_call_operand.vmem [shape: bf16[2,16,64], index: 7, kind: input, shape index: {}]
  %s8 = inlined_call_operand.vmem [shape: f32[2,16,8], index: 8, kind: input, shape index: {}]
  %s9 = inlined_call_operand.vmem [shape: f32[2,16,8], index: 9, kind: input, shape index: {}]
  %s10 = inlined_call_operand.vmem [shape: bf16[2,2,2,16,16], index: 10, kind: output, shape index: {}]
  %s11 = sld [smem:[#allocation0]]
  $region73: #{fa_block_2d.5} parent=0
    _
  %s13 = ssub.s32 1, %s11
  %s14 = scalar_select 0, %s13, %s11
  loop: start=0, step=1, limit=6
  $region2: #{fa_block_2d.5} parent=0 // loop_pre_header
    _
  $region3: #{fa_block_2d.5} parent=0 // loop_header
    %s16 = sphi 0, %s20
    %p17 = scmp.ge.s32.totalorder %s16, 6
    %s23 = sphi 0, %s35
    %s24 = sphi 0, %s31
    %s25 = sphi 0, %s23
    %s26 = sphi 0, %s24
    %s27 = sphi 0, %s25
    %s28 = sphi 0, %s26
    %s40 = sphi 0, %s42
    %s43 = sphi 0, %s40
    %s44 = sphi 0, %s43
    %s60 = sphi 0, %s44
    %s66 = sphi 0, %s68
    %s69 = sphi 0, %s66
    %s70 = sphi 0, %s69
    %s86 = sphi 0, %s70
    %s92 = sphi 0, %s94
    %s95 = sphi 0, %s92
    %s96 = sphi 0, %s95
    %s112 = sphi 0, %s96
    %s118 = sphi 0, %s120
    %s121 = sphi 0, %s118
    %s122 = sphi 0, %s121
    %s138 = sphi 0, %s122
    %s144 = sphi 0, %s146
    %s147 = sphi 0, %s144
    %s148 = sphi 0, %s147
    %s164 = sphi 0, %s148
    %s170 = sphi 0, %s172
    %s173 = sphi 0, %s170
    %s174 = sphi 0, %s173
    %s190 = sphi 0, %s174
    %s196 = sphi 0, %s198
    %s199 = sphi 0, %s196
    %s200 = sphi 0, %s199
    %s216 = sphi 0, %s200
    %s222 = sphi 0, %s224
    %s225 = sphi 0, %s222
    %s226 = sphi 0, %s225
    %s242 = sphi 0, %s226
    %s248 = sphi 0, %s250
    %s251 = sphi 0, %s248
    %s252 = sphi 0, %s251
    %s268 = sphi 0, %s252
    %s274 = sphi 0, %s276
    %s277 = sphi 0, %s274
    %s278 = sphi 0, %s277
    %s294 = sphi 0, %s278
    %s302 = sphi 0, %s304
    %s305 = sphi 0, %s302
    %s306 = sphi 0, %s305
    %s322 = sphi 0, %s306
  $region4: #{fa_block_2d.5} parent=0 // loop_header_branch
    %19 = sbr.rel (%p17) target = $region8
  $region5: #{fa_block_2d.5} parent=0 // loop_body
    %s21 = ssub.s32 %s16, 1
    %s22 = ssub.s32 %s16, 2
    %s29 = sadd.s32 1, %s24
    %p30 = scmp.ge.s32.totalorder %s29, 2
    %s31 = scalar_select %p30, 0, %s29
    %s32 = sadd.s32 1, %s23
    %s33 = scalar_select %p30, %s32, %s23
    %p34 = scmp.ge.s32.totalorder %s33, 2
    %s35 = scalar_select %p34, 0, %s33
    %s36 = ssub.s32 %s23, %s35
    %s37 = ssub.s32 %s24, %s31
    %s38 = sor.u32 %s36, %s37
    %p39 = scmp.eq.s32.totalorder %s38, 0
    %s41 = sadd.s32 %s40, 1
    %s42 = scalar_select %p39, %s40, %s41
    %p45 = pneg %p39
    %p46 = scmp.eq.s32.totalorder %s16, 3
    %p47 = por %p45, %p46
    %p48 = scmp.ne.s32.totalorder %s40, %s43
    %p49 = scmp.eq.s32.totalorder %s16, 0
    %p50 = por %p48, %p49
    %p51 = scmp.ne.s32.totalorder %s40, %s43
    %p52 = scmp.eq.s32.totalorder %s21, 3
    %p53 = por %p51, %p52
    %p54 = scmp.ne.s32.totalorder %s43, %s44
    %p55 = scmp.eq.s32.totalorder %s21, 0
    %p56 = por %p54, %p55
    %p57 = scmp.ne.s32.totalorder %s43, %s44
    %p58 = scmp.eq.s32.totalorder %s22, 3
    %p59 = por %p57, %p58
    %p61 = scmp.ne.s32.totalorder %s44, %s60
    %p62 = scmp.eq.s32.totalorder %s22, 0
    %p63 = por %p61, %p62
    %s64 = ssub.s32 %s23, %s35
    %p65 = scmp.eq.s32.totalorder %s64, 0
    %s67 = sadd.s32 %s66, 1
    %s68 = scalar_select %p65, %s66, %s67
    %p71 = pneg %p65
    %p72 = scmp.eq.s32.totalorder %s16, 3
    %p73 = por %p71, %p72
    %p74 = scmp.ne.s32.totalorder %s66, %s69
    %p75 = scmp.eq.s32.totalorder %s16, 0
    %p76 = por %p74, %p75
    %p77 = scmp.ne.s32.totalorder %s66, %s69
    %p78 = scmp.eq.s32.totalorder %s21, 3
    %p79 = por %p77, %p78
    %p80 = scmp.ne.s32.totalorder %s69, %s70
    %p81 = scmp.eq.s32.totalorder %s21, 0
    %p82 = por %p80, %p81
    %p83 = scmp.ne.s32.totalorder %s69, %s70
    %p84 = scmp.eq.s32.totalorder %s22, 3
    %p85 = por %p83, %p84
    %p87 = scmp.ne.s32.totalorder %s70, %s86
    %p88 = scmp.eq.s32.totalorder %s22, 0
    %p89 = por %p87, %p88
    %s90 = ssub.s32 %s23, %s35
    %p91 = scmp.eq.s32.totalorder %s90, 0
    %s93 = sadd.s32 %s92, 1
    %s94 = scalar_select %p91, %s92, %s93
    %p97 = pneg %p91
    %p98 = scmp.eq.s32.totalorder %s16, 3
    %p99 = por %p97, %p98
    %p100 = scmp.ne.s32.totalorder %s92, %s95
    %p101 = scmp.eq.s32.totalorder %s16, 0
    %p102 = por %p100, %p101
    %p103 = scmp.ne.s32.totalorder %s92, %s95
    %p104 = scmp.eq.s32.totalorder %s21, 3
    %p105 = por %p103, %p104
    %p106 = scmp.ne.s32.totalorder %s95, %s96
    %p107 = scmp.eq.s32.totalorder %s21, 0
    %p108 = por %p106, %p107
    %p109 = scmp.ne.s32.totalorder %s95, %s96
    %p110 = scmp.eq.s32.totalorder %s22, 3
    %p111 = por %p109, %p110
    %p113 = scmp.ne.s32.totalorder %s96, %s112
    %p114 = scmp.eq.s32.totalorder %s22, 0
    %p115 = por %p113, %p114
    %s116 = ssub.s32 %s23, %s35
    %p117 = scmp.eq.s32.totalorder %s116, 0
    %s119 = sadd.s32 %s118, 1
    %s120 = scalar_select %p117, %s118, %s119
    %p123 = pneg %p117
    %p124 = scmp.eq.s32.totalorder %s16, 3
    %p125 = por %p123, %p124
    %p126 = scmp.ne.s32.totalorder %s118, %s121
    %p127 = scmp.eq.s32.totalorder %s16, 0
    %p128 = por %p126, %p127
    %p129 = scmp.ne.s32.totalorder %s118, %s121
    %p130 = scmp.eq.s32.totalorder %s21, 3
    %p131 = por %p129, %p130
    %p132 = scmp.ne.s32.totalorder %s121, %s122
    %p133 = scmp.eq.s32.totalorder %s21, 0
    %p134 = por %p132, %p133
    %p135 = scmp.ne.s32.totalorder %s121, %s122
    %p136 = scmp.eq.s32.totalorder %s22, 3
    %p137 = por %p135, %p136
    %p139 = scmp.ne.s32.totalorder %s122, %s138
    %p140 = scmp.eq.s32.totalorder %s22, 0
    %p141 = por %p139, %p140
    %s142 = ssub.s32 %s23, %s35
    %p143 = scmp.eq.s32.totalorder %s142, 0
    %s145 = sadd.s32 %s144, 1
    %s146 = scalar_select %p143, %s144, %s145
    %p149 = pneg %p143
    %p150 = scmp.eq.s32.totalorder %s16, 3
    %p151 = por %p149, %p150
    %p152 = scmp.ne.s32.totalorder %s144, %s147
    %p153 = scmp.eq.s32.totalorder %s16, 0
    %p154 = por %p152, %p153
    %p155 = scmp.ne.s32.totalorder %s144, %s147
    %p156 = scmp.eq.s32.totalorder %s21, 3
    %p157 = por %p155, %p156
    %p158 = scmp.ne.s32.totalorder %s147, %s148
    %p159 = scmp.eq.s32.totalorder %s21, 0
    %p160 = por %p158, %p159
    %p161 = scmp.ne.s32.totalorder %s147, %s148
    %p162 = scmp.eq.s32.totalorder %s22, 3
    %p163 = por %p161, %p162
    %p165 = scmp.ne.s32.totalorder %s148, %s164
    %p166 = scmp.eq.s32.totalorder %s22, 0
    %p167 = por %p165, %p166
    %s168 = ssub.s32 %s23, %s35
    %p169 = scmp.eq.s32.totalorder %s168, 0
    %s171 = sadd.s32 %s170, 1
    %s172 = scalar_select %p169, %s170, %s171
    %p175 = pneg %p169
    %p176 = scmp.eq.s32.totalorder %s16, 3
    %p177 = por %p175, %p176
    %p178 = scmp.ne.s32.totalorder %s170, %s173
    %p179 = scmp.eq.s32.totalorder %s16, 0
    %p180 = por %p178, %p179
    %p181 = scmp.ne.s32.totalorder %s170, %s173
    %p182 = scmp.eq.s32.totalorder %s21, 3
    %p183 = por %p181, %p182
    %p184 = scmp.ne.s32.totalorder %s173, %s174
    %p185 = scmp.eq.s32.totalorder %s21, 0
    %p186 = por %p184, %p185
    %p187 = scmp.ne.s32.totalorder %s173, %s174
    %p188 = scmp.eq.s32.totalorder %s22, 3
    %p189 = por %p187, %p188
    %p191 = scmp.ne.s32.totalorder %s174, %s190
    %p192 = scmp.eq.s32.totalorder %s22, 0
    %p193 = por %p191, %p192
    %s194 = ssub.s32 %s23, %s35
    %p195 = scmp.eq.s32.totalorder %s194, 0
    %s197 = sadd.s32 %s196, 1
    %s198 = scalar_select %p195, %s196, %s197
    %p201 = pneg %p195
    %p202 = scmp.eq.s32.totalorder %s16, 3
    %p203 = por %p201, %p202
    %p204 = scmp.ne.s32.totalorder %s196, %s199
    %p205 = scmp.eq.s32.totalorder %s16, 0
    %p206 = por %p204, %p205
    %p207 = scmp.ne.s32.totalorder %s196, %s199
    %p208 = scmp.eq.s32.totalorder %s21, 3
    %p209 = por %p207, %p208
    %p210 = scmp.ne.s32.totalorder %s199, %s200
    %p211 = scmp.eq.s32.totalorder %s21, 0
    %p212 = por %p210, %p211
    %p213 = scmp.ne.s32.totalorder %s199, %s200
    %p214 = scmp.eq.s32.totalorder %s22, 3
    %p215 = por %p213, %p214
    %p217 = scmp.ne.s32.totalorder %s200, %s216
    %p218 = scmp.eq.s32.totalorder %s22, 0
    %p219 = por %p217, %p218
    %s220 = ssub.s32 %s23, %s35
    %p221 = scmp.eq.s32.totalorder %s220, 0
    %s223 = sadd.s32 %s222, 1
    %s224 = scalar_select %p221, %s222, %s223
    %p227 = pneg %p221
    %p228 = scmp.eq.s32.totalorder %s16, 3
    %p229 = por %p227, %p228
    %p230 = scmp.ne.s32.totalorder %s222, %s225
    %p231 = scmp.eq.s32.totalorder %s16, 0
    %p232 = por %p230, %p231
    %p233 = scmp.ne.s32.totalorder %s222, %s225
    %p234 = scmp.eq.s32.totalorder %s21, 3
    %p235 = por %p233, %p234
    %p236 = scmp.ne.s32.totalorder %s225, %s226
    %p237 = scmp.eq.s32.totalorder %s21, 0
    %p238 = por %p236, %p237
    %p239 = scmp.ne.s32.totalorder %s225, %s226
    %p240 = scmp.eq.s32.totalorder %s22, 3
    %p241 = por %p239, %p240
    %p243 = scmp.ne.s32.totalorder %s226, %s242
    %p244 = scmp.eq.s32.totalorder %s22, 0
    %p245 = por %p243, %p244
    %s246 = ssub.s32 %s23, %s35
    %p247 = scmp.eq.s32.totalorder %s246, 0
    %s249 = sadd.s32 %s248, 1
    %s250 = scalar_select %p247, %s248, %s249
    %p253 = pneg %p247
    %p254 = scmp.eq.s32.totalorder %s16, 3
    %p255 = por %p253, %p254
    %p256 = scmp.ne.s32.totalorder %s248, %s251
    %p257 = scmp.eq.s32.totalorder %s16, 0
    %p258 = por %p256, %p257
    %p259 = scmp.ne.s32.totalorder %s248, %s251
    %p260 = scmp.eq.s32.totalorder %s21, 3
    %p261 = por %p259, %p260
    %p262 = scmp.ne.s32.totalorder %s251, %s252
    %p263 = scmp.eq.s32.totalorder %s21, 0
    %p264 = por %p262, %p263
    %p265 = scmp.ne.s32.totalorder %s251, %s252
    %p266 = scmp.eq.s32.totalorder %s22, 3
    %p267 = por %p265, %p266
    %p269 = scmp.ne.s32.totalorder %s252, %s268
    %p270 = scmp.eq.s32.totalorder %s22, 0
    %p271 = por %p269, %p270
    %s272 = ssub.s32 %s23, %s35
    %p273 = scmp.eq.s32.totalorder %s272, 0
    %s275 = sadd.s32 %s274, 1
    %s276 = scalar_select %p273, %s274, %s275
    %p279 = pneg %p273
    %p280 = scmp.eq.s32.totalorder %s16, 3
    %p281 = por %p279, %p280
    %p282 = scmp.ne.s32.totalorder %s274, %s277
    %p283 = scmp.eq.s32.totalorder %s16, 0
    %p284 = por %p282, %p283
    %p285 = scmp.ne.s32.totalorder %s274, %s277
    %p286 = scmp.eq.s32.totalorder %s21, 3
    %p287 = por %p285, %p286
    %p288 = scmp.ne.s32.totalorder %s277, %s278
    %p289 = scmp.eq.s32.totalorder %s21, 0
    %p290 = por %p288, %p289
    %p291 = scmp.ne.s32.totalorder %s277, %s278
    %p292 = scmp.eq.s32.totalorder %s22, 3
    %p293 = por %p291, %p292
    %p295 = scmp.ne.s32.totalorder %s278, %s294
    %p296 = scmp.eq.s32.totalorder %s22, 0
    %p297 = por %p295, %p296
    %s298 = ssub.s32 %s23, %s35
    %s299 = ssub.s32 %s24, %s31
    %s300 = sor.u32 %s298, %s299
    %p301 = scmp.eq.s32.totalorder %s300, 0
    %s303 = sadd.s32 %s302, 1
    %s304 = scalar_select %p301, %s302, %s303
    %p307 = pneg %p301
    %p308 = scmp.eq.s32.totalorder %s16, 3
    %p309 = por %p307, %p308
    %p310 = scmp.ne.s32.totalorder %s302, %s305
    %p311 = scmp.eq.s32.totalorder %s16, 0
    %p312 = por %p310, %p311
    %p313 = scmp.ne.s32.totalorder %s302, %s305
    %p314 = scmp.eq.s32.totalorder %s21, 3
    %p315 = por %p313, %p314
    %p316 = scmp.ne.s32.totalorder %s305, %s306
    %p317 = scmp.eq.s32.totalorder %s21, 0
    %p318 = por %p316, %p317
    %p319 = scmp.ne.s32.totalorder %s305, %s306
    %p320 = scmp.eq.s32.totalorder %s22, 3
    %p321 = por %p319, %p320
    %p323 = scmp.ne.s32.totalorder %s306, %s322
    %p324 = scmp.eq.s32.totalorder %s22, 0
    %p325 = por %p323, %p324
    %p326 = scmp.le.s32.totalorder 1, %s16
    %p327 = scmp.lt.s32.totalorder %s16, 5
    %p328 = pnand %p326, %p327
    %p329 = pneg %p328
    // Predicated region
    $region9: #{fa_block_2d.5} parent=5 // pred_check
      _
    $region10: #{fa_block_2d.5} parent=5 // pred_check_branch
      %331 = sbr.rel (%p328) target = $region12
    $region11: #{fa_block_2d.5} parent=5 // pred_region
      %s332 = ssub.s32 %s16, 1
    $region12: #{fa_block_2d.5} parent=5 // pred_fallthru
      _
    %p333 = scmp.lt.s32.totalorder %s16, 4
    // Predicated region
    $region13: #{fa_block_2d.5} parent=5 // pred_check
      %p334 = pneg %p333
    $region14: #{fa_block_2d.5} parent=5 // pred_check_branch
      %336 = sbr.rel (%p334) target = $region16
    $region15: #{fa_block_2d.5} parent=5 // pred_region
      // Predicated region
      $region17: #{fa_block_2d.5} parent=15 // pred_check
        %p337 = pneg %p50
      $region18: #{fa_block_2d.5} parent=15 // pred_check_branch
        %339 = sbr.rel (%p337) target = $region20
      $region19: #{fa_block_2d.5} parent=15 // pred_region
        %p340 = scmp.lt.s32.totalorder %s23, 1
        %s341 = scalar_select %p340, %s23, 1
        %p342 = scmp.lt.s32.totalorder %s24, 1
        %s343 = scalar_select %p342, %s24, 1
        %s344 = smul.addr %s343, 2
        %s345 = smul.addr %s341, 4
        %s346 = sadd.s32 %s344, %s345
        %s347 = smul.addr %s346, 8
        %s348 = scalar_lea.vmem %s0, %s347
      $region20: #{fa_block_2d.5} parent=15 // pred_fallthru
        _
      // Predicated region
      $region21: #{fa_block_2d.5} parent=15 // pred_check
        %p349 = pneg %p76
      $region22: #{fa_block_2d.5} parent=15 // pred_check_branch
        %351 = sbr.rel (%p349) target = $region24
      $region23: #{fa_block_2d.5} parent=15 // pred_region
        %p352 = scmp.lt.s32.totalorder %s23, 1
        %s353 = scalar_select %p352, %s23, 1
        %s354 = smul.addr %s353, 4
        %s355 = scalar_lea.vmem %s1, %s354
      $region24: #{fa_block_2d.5} parent=15 // pred_fallthru
        _
      // Predicated region
      $region25: #{fa_block_2d.5} parent=15 // pred_check
        %p356 = pneg %p102
      $region26: #{fa_block_2d.5} parent=15 // pred_check_branch
        %358 = sbr.rel (%p356) target = $region28
      $region27: #{fa_block_2d.5} parent=15 // pred_region
        %p359 = scmp.lt.s32.totalorder %s23, 1
        %s360 = scalar_select %p359, %s23, 1
        %s361 = scalar_lea.vmem %s2, %s360
      $region28: #{fa_block_2d.5} parent=15 // pred_fallthru
        _
      // Predicated region
      $region29: #{fa_block_2d.5} parent=15 // pred_check
        %p362 = pneg %p128
      $region30: #{fa_block_2d.5} parent=15 // pred_check_branch
        %364 = sbr.rel (%p362) target = $region32
      $region31: #{fa_block_2d.5} parent=15 // pred_region
        %p365 = scmp.lt.s32.totalorder %s23, 1
        %s366 = scalar_select %p365, %s23, 1
        %s367 = scalar_lea.vmem %s3, %s366
      $region32: #{fa_block_2d.5} parent=15 // pred_fallthru
        _
      // Predicated region
      $region33: #{fa_block_2d.5} parent=15 // pred_check
        %p368 = pneg %p154
      $region34: #{fa_block_2d.5} parent=15 // pred_check_branch
        %370 = sbr.rel (%p368) target = $region36
      $region35: #{fa_block_2d.5} parent=15 // pred_region
        %p371 = scmp.lt.s32.totalorder %s23, 1
        %s372 = scalar_select %p371, %s23, 1
        %s373 = smul.addr %s372, 4
        %s374 = scalar_lea.vmem %s4, %s373
      $region36: #{fa_block_2d.5} parent=15 // pred_fallthru
        _
      // Predicated region
      $region37: #{fa_block_2d.5} parent=15 // pred_check
        %p375 = pneg %p180
      $region38: #{fa_block_2d.5} parent=15 // pred_check_branch
        %377 = sbr.rel (%p375) target = $region40
      $region39: #{fa_block_2d.5} parent=15 // pred_region
        %p378 = scmp.lt.s32.totalorder %s23, 1
        %s379 = scalar_select %p378, %s23, 1
        %s380 = smul.addr %s379, 2
        %s381 = smul.addr %s380, 4
        %s382 = scalar_lea.vmem %s5, %s381
      $region40: #{fa_block_2d.5} parent=15 // pred_fallthru
        _
      // Predicated region
      $region41: #{fa_block_2d.5} parent=15 // pred_check
        %p383 = pneg %p206
      $region42: #{fa_block_2d.5} parent=15 // pred_check_branch
        %385 = sbr.rel (%p383) target = $region44
      $region43: #{fa_block_2d.5} parent=15 // pred_region
        %p386 = scmp.lt.s32.totalorder %s23, 1
        %s387 = scalar_select %p386, %s23, 1
        %s388 = scalar_lea.vmem %s6, %s387
      $region44: #{fa_block_2d.5} parent=15 // pred_fallthru
        _
      // Predicated region
      $region45: #{fa_block_2d.5} parent=15 // pred_check
        %p389 = pneg %p232
      $region46: #{fa_block_2d.5} parent=15 // pred_check_branch
        %391 = sbr.rel (%p389) target = $region48
      $region47: #{fa_block_2d.5} parent=15 // pred_region
        %p392 = scmp.lt.s32.totalorder %s23, 1
        %s393 = scalar_select %p392, %s23, 1
        %s394 = smul.addr %s393, 2
        %s395 = smul.addr %s394, 4
        %s396 = scalar_lea.vmem %s7, %s395
      $region48: #{fa_block_2d.5} parent=15 // pred_fallthru
        _
      // Predicated region
      $region49: #{fa_block_2d.5} parent=15 // pred_check
        %p397 = pneg %p258
      $region50: #{fa_block_2d.5} parent=15 // pred_check_branch
        %399 = sbr.rel (%p397) target = $region52
      $region51: #{fa_block_2d.5} parent=15 // pred_region
        %p400 = scmp.lt.s32.totalorder %s23, 1
        %s401 = scalar_select %p400, %s23, 1
        %s402 = smul.addr %s401, 2
        %s403 = smul.addr %s402, 8
        %s404 = scalar_lea.vmem %s8, %s403
      $region52: #{fa_block_2d.5} parent=15 // pred_fallthru
        _
      // Predicated region
      $region53: #{fa_block_2d.5} parent=15 // pred_check
        %p405 = pneg %p284
      $region54: #{fa_block_2d.5} parent=15 // pred_check_branch
        %407 = sbr.rel (%p405) target = $region56
      $region55: #{fa_block_2d.5} parent=15 // pred_region
        %p408 = scmp.lt.s32.totalorder %s23, 1
        %s409 = scalar_select %p408, %s23, 1
        %s410 = smul.addr %s409, 2
        %s411 = smul.addr %s410, 8
        %s412 = scalar_lea.vmem %s9, %s411
      $region56: #{fa_block_2d.5} parent=15 // pred_fallthru
        _
    $region16: #{fa_block_2d.5} parent=5 // pred_fallthru
      _
    %p413 = scmp.le.s32.totalorder 1, %s16
    %p414 = scmp.lt.s32.totalorder %s16, 5
    %p415 = pnand %p413, %p414
    %p416 = pneg %p415
    // Predicated region
    $region57: #{fa_block_2d.5} parent=5 // pred_check
      _
    $region58: #{fa_block_2d.5} parent=5 // pred_check_branch
      %418 = sbr.rel (%p415) target = $region60
    $region59: #{fa_block_2d.5} parent=5 // pred_region
      %s419 = ssub.s32 %s16, 1
      %p420 = scmp.lt.s32.totalorder %s25, 1
      %s421 = scalar_select %p420, %s25, 1
      %p422 = scmp.lt.s32.totalorder %s26, 1
      %s423 = scalar_select %p422, %s26, 1
      %s424 = smul.addr %s423, 2
      %s425 = smul.addr %s421, 4
      %s426 = sadd.s32 %s424, %s425
      %s427 = smul.addr %s426, 8
      %s428 = scalar_lea.vmem %s0, %s427
      %p429 = pneg %p56
      %p430 = pneg %p53
      %p431 = scmp.lt.s32.totalorder %s25, 1
      %s432 = scalar_select %p431, %s25, 1
      %s433 = smul.addr %s432, 4
      %s434 = scalar_lea.vmem %s1, %s433
      %p435 = pneg %p82
      %p436 = pneg %p79
      %p437 = scmp.lt.s32.totalorder %s25, 1
      %s438 = scalar_select %p437, %s25, 1
      %s439 = scalar_lea.vmem %s2, %s438
      %p440 = pneg %p108
      %p441 = pneg %p105
      %p442 = scmp.lt.s32.totalorder %s25, 1
      %s443 = scalar_select %p442, %s25, 1
      %s444 = scalar_lea.vmem %s3, %s443
      %p445 = pneg %p134
      %p446 = pneg %p131
      %p447 = scmp.lt.s32.totalorder %s25, 1
      %s448 = scalar_select %p447, %s25, 1
      %s449 = smul.addr %s448, 4
      %s450 = scalar_lea.vmem %s4, %s449
      %p451 = pneg %p160
      %p452 = pneg %p157
      %p453 = scmp.lt.s32.totalorder %s25, 1
      %s454 = scalar_select %p453, %s25, 1
      %s455 = smul.addr %s454, 2
      %s456 = smul.addr %s455, 4
      %s457 = scalar_lea.vmem %s5, %s456
      %p458 = pneg %p186
      %p459 = pneg %p183
      %p460 = scmp.lt.s32.totalorder %s25, 1
      %s461 = scalar_select %p460, %s25, 1
      %s462 = scalar_lea.vmem %s6, %s461
      %p463 = pneg %p212
      %p464 = pneg %p209
      %p465 = scmp.lt.s32.totalorder %s25, 1
      %s466 = scalar_select %p465, %s25, 1
      %s467 = smul.addr %s466, 2
      %s468 = smul.addr %s467, 4
      %s469 = scalar_lea.vmem %s7, %s468
      %p470 = pneg %p238
      %p471 = pneg %p235
      %p472 = scmp.lt.s32.totalorder %s25, 1
      %s473 = scalar_select %p472, %s25, 1
      %s474 = smul.addr %s473, 2
      %s475 = smul.addr %s474, 8
      %s476 = scalar_lea.vmem %s8, %s475
      %p477 = pneg %p264
      %p478 = pneg %p261
      %p479 = scmp.lt.s32.totalorder %s25, 1
      %s480 = scalar_select %p479, %s25, 1
      %s481 = smul.addr %s480, 2
      %s482 = smul.addr %s481, 8
      %s483 = scalar_lea.vmem %s9, %s482
      %p484 = pneg %p290
      %p485 = pneg %p287
      %p486 = pneg %p318
      %p487 = pneg %p315
      %p488 = scmp.lt.s32.totalorder %s25, 1
      %s489 = scalar_select %p488, %s25, 1
      %p490 = scmp.lt.s32.totalorder %s26, 1
      %s491 = scalar_select %p490, %s26, 1
      %s492 = smul.addr %s491, 4
      %s493 = smul.addr %s489, 8
      %s494 = sadd.s32 %s492, %s493
      %s495 = smul.addr %s494, 4
      %s496 = scalar_lea.vmem %s10, %s495
      %p497 = scmp.lt.s32.totalorder %s25, 1
      %s498 = scalar_select %p497, %s25, 1
      %p499 = scmp.lt.s32.totalorder %s26, 1
      %s500 = scalar_select %p499, %s26, 1
      %s501 = smul.addr %s500, 2
      %s502 = smul.addr %s498, 4
      %s503 = sadd.s32 %s501, %s502
      %s504 = smul.addr %s503, 8
      %s505 = scalar_lea.vmem %s0, %s504
      %p506 = scmp.lt.s32.totalorder %s25, 1
      %s507 = scalar_select %p506, %s25, 1
      %s508 = smul.addr %s507, 4
      %s509 = scalar_lea.vmem %s1, %s508
      %p510 = scmp.lt.s32.totalorder %s25, 1
      %s511 = scalar_select %p510, %s25, 1
      %s512 = scalar_lea.vmem %s2, %s511
      %p513 = scmp.lt.s32.totalorder %s25, 1
      %s514 = scalar_select %p513, %s25, 1
      %s515 = scalar_lea.vmem %s3, %s514
      %p516 = scmp.lt.s32.totalorder %s25, 1
      %s517 = scalar_select %p516, %s25, 1
      %s518 = smul.addr %s517, 4
      %s519 = scalar_lea.vmem %s4, %s518
      %p520 = scmp.lt.s32.totalorder %s25, 1
      %s521 = scalar_select %p520, %s25, 1
      %s522 = smul.addr %s521, 2
      %s523 = smul.addr %s522, 4
      %s524 = scalar_lea.vmem %s5, %s523
      %p525 = scmp.lt.s32.totalorder %s25, 1
      %s526 = scalar_select %p525, %s25, 1
      %s527 = scalar_lea.vmem %s6, %s526
      %p528 = scmp.lt.s32.totalorder %s25, 1
      %s529 = scalar_select %p528, %s25, 1
      %s530 = smul.addr %s529, 2
      %s531 = smul.addr %s530, 4
      %s532 = scalar_lea.vmem %s7, %s531
      %p533 = scmp.lt.s32.totalorder %s25, 1
      %s534 = scalar_select %p533, %s25, 1
      %s535 = smul.addr %s534, 2
      %s536 = smul.addr %s535, 8
      %s537 = scalar_lea.vmem %s8, %s536
      %p538 = scmp.lt.s32.totalorder %s25, 1
      %s539 = scalar_select %p538, %s25, 1
      %s540 = smul.addr %s539, 2
      %s541 = smul.addr %s540, 8
      %s542 = scalar_lea.vmem %s9, %s541
      %p543 = scmp.lt.s32.totalorder %s25, 1
      %s544 = scalar_select %p543, %s25, 1
      %p545 = scmp.lt.s32.totalorder %s26, 1
      %s546 = scalar_select %p545, %s26, 1
      %s547 = smul.addr %s546, 4
      %s548 = smul.addr %s544, 8
      %s549 = sadd.s32 %s547, %s548
      %s550 = smul.addr %s549, 4
      %s551 = scalar_lea.vmem %s10, %s550
      %v553 = vld [vmem:[%s505] sm:$0xff]
      %v554 = vld [vmem:[%s505 + $0x8] sm:$0xff]
      %v555 = vpack.c.bf16 %v554, %v553
      %v556 = vld [vmem:[%s509] sm:$0xf]
      %vm557 = vcmask 64512
      %v559 = vsel %vm557, %v555, 0
      %vm561 = vcmask 1043456
      %v563 = vsel %vm561, %v556, 0
      %565 = vmatprep.subr.bf16.mxu0 0
      %566 = vmatpush1.bf16.msra.mxu0 %v563
      %567 = vmatprep.subr.bf16.mxu0 0
      %568 = vmatpush1.bf16.msra.mxu0 0
      %569 = vmatprep.subr.bf16.mxu0 0
      %570 = vmatpush1.bf16.msra.mxu0 0
      %571 = vmatprep.subr.bf16.mxu0 0
      %572 = vmatpush1.bf16.msra.mxu0 0
      %573 = vmatprep.subr.bf16.mxu0 0
      %574 = vmatpush1.bf16.msra.mxu0 0
      %575 = vmatprep.subr.bf16.mxu0 0
      %576 = vmatpush1.bf16.msra.mxu0 0
      %577 = vmatprep.subr.bf16.mxu0 0
      %578 = vmatpush1.bf16.msra.mxu0 0
      %579 = vmatprep.subr.bf16.mxu0 0
      %580 = vmatpush1.bf16.msra.mxu0 0
      %581 = vmatprep.subr.bf16.mxu0 0
      %582 = vmatpush1.bf16.msra.mxu0 0
      %583 = vmatprep.subr.bf16.mxu0 0
      %584 = vmatpush1.bf16.msra.mxu0 0
      %585 = vmatprep.subr.bf16.mxu0 0
      %586 = vmatpush1.bf16.msra.mxu0 0
      %587 = vmatprep.subr.bf16.mxu0 0
      %588 = vmatpush1.bf16.msra.mxu0 0
      %589 = vmatprep.subr.bf16.mxu0 0
      %590 = vmatpush1.bf16.msra.mxu0 0
      %591 = vmatprep.subr.bf16.mxu0 0
      %592 = vmatpush1.bf16.msra.mxu0 0
      %593 = vmatprep.subr.bf16.mxu0 0
      %594 = vmatpush1.bf16.msra.mxu0 0
      %595 = vmatprep.subr.bf16.mxu0 0
      %596 = vmatpush1.bf16.msra.mxu0 0
      %597 = vmatprep.mubr.bf16.mxu0 0
      %598 = vmatmul.mubr.bf16.gmra.mrb[0].mxu0 %v559
      %v599 = vpop.f32.mrb[0].mxu0
      %v600 = vadd.f32 0.0, %v599
      %v601 = vpop.f32.mrb[0].mxu0
      %v602 = vpop.f32.mrb[0].mxu0
      %v603 = vadd.f32 0.0, %v602
      %v604 = vpop.f32.mrb[0].mxu0
      %605 = vdwg.mxu0
      %v606 = vsel %vm557, %v600, 0.0
      %607 = vadd.xlane.f32.xlu0 %v606
      %v608 = vpop.xlane.xlu0 %607
      %v609 = vsel %vm557, %v603, 0.0
      %610 = vadd.xlane.f32.xlu0 %v609
      %v611 = vpop.xlane.xlu0 %610
      %v612 = vrcp.pop 8.0
      %v613 = vmul.f32 %v608, %v612
      %v614 = vmul.f32 %v611, %v612
      %v615 = vsub.f32 %v600, %v613
      %v616 = vsub.f32 %v603, %v614
      %v617 = vmul.f32 %v615, %v615
      %v618 = vmul.f32 %v616, %v616
      %v619 = vsel %vm557, %v617, 0.0
      %620 = vadd.xlane.f32.xlu0 %v619
      %v621 = vpop.xlane.xlu0 %620
      %v622 = vsel %vm557, %v618, 0.0
      %623 = vadd.xlane.f32.xlu0 %v622
      %v624 = vpop.xlane.xlu0 %623
      %v625 = vmul.f32 %v621, %v612
      %v626 = vmul.f32 %v624, %v612
      %v627 = vadd.f32 %v625, 1e-05
      %v628 = vadd.f32 %v626, 1e-05
      %v629 = vrsqrt.pop %v627
      %v630 = vrsqrt.pop %v628
      %v631 = vmul.f32 %v615, %v629
      %v632 = vmul.f32 %v616, %v630
      %v633 = vld [vmem:[%s512] sm:$0x1]
      %v635 = vlaneseq
      %v636 = vshrl.u32 %v635, 7
      %v637 = vsub.s32 0, %v636
      %v638 = vrot.slane %v633, %v637
      %v640 = vmul.f32 %v631, %v638
      %v641 = vmul.f32 %v632, %v638
      %v642 = vld [vmem:[%s515] sm:$0x1]
      %v644 = vlaneseq
      %v645 = vshrl.u32 %v644, 7
      %v646 = vsub.s32 0, %v645
      %v647 = vrot.slane %v642, %v646
      %v649 = vadd.f32 %v640, %v647
      %v650 = vadd.f32 %v641, %v647
      %v651 = vpack.c.bf16 %v650, %v649
      %v652 = vld [vmem:[%s519] sm:$0xf]
      %v654 = vsel %vm557, %v651, 0
      %v657 = vsel %vm561, %v652, 0
      %659 = vmatprep.subr.bf16.mxu0 0
      %660 = vmatpush1.bf16.msra.mxu0 %v657
      %661 = vmatprep.subr.bf16.mxu0 0
      %662 = vmatpush1.bf16.msra.mxu0 0
      %663 = vmatprep.subr.bf16.mxu0 0
      %664 = vmatpush1.bf16.msra.mxu0 0
      %665 = vmatprep.subr.bf16.mxu0 0
      %666 = vmatpush1.bf16.msra.mxu0 0
      %667 = vmatprep.subr.bf16.mxu0 0
      %668 = vmatpush1.bf16.msra.mxu0 0
      %669 = vmatprep.subr.bf16.mxu0 0
      %670 = vmatpush1.bf16.msra.mxu0 0
      %671 = vmatprep.subr.bf16.mxu0 0
      %672 = vmatpush1.bf16.msra.mxu0 0
      %673 = vmatprep.subr.bf16.mxu0 0
      %674 = vmatpush1.bf16.msra.mxu0 0
      %675 = vmatprep.subr.bf16.mxu0 0
      %676 = vmatpush1.bf16.msra.mxu0 0
      %677 = vmatprep.subr.bf16.mxu0 0
      %678 = vmatpush1.bf16.msra.mxu0 0
      %679 = vmatprep.subr.bf16.mxu0 0
      %680 = vmatpush1.bf16.msra.mxu0 0
      %681 = vmatprep.subr.bf16.mxu0 0
      %682 = vmatpush1.bf16.msra.mxu0 0
      %683 = vmatprep.subr.bf16.mxu0 0
      %684 = vmatpush1.bf16.msra.mxu0 0
      %685 = vmatprep.subr.bf16.mxu0 0
      %686 = vmatpush1.bf16.msra.mxu0 0
      %687 = vmatprep.subr.bf16.mxu0 0
      %688 = vmatpush1.bf16.msra.mxu0 0
      %689 = vmatprep.subr.bf16.mxu0 0
      %690 = vmatpush1.bf16.msra.mxu0 0
      %691 = vmatprep.mubr.bf16.mxu0 0
      %692 = vmatmul.mubr.bf16.gmra.mrb[0].mxu0 %v654
      %v693 = vpop.f32.mrb[0].mxu0
      %v694 = vadd.f32 0.0, %v693
      %v695 = vpop.f32.mrb[0].mxu0
      %v696 = vpop.f32.mrb[0].mxu0
      %v697 = vadd.f32 0.0, %v696
      %v698 = vpop.f32.mrb[0].mxu0
      %699 = vdwg.mxu0
      %v700 = vmul.f32 %v694, 0.5
      %v701 = vmul.f32 %v697, 0.5
      %v702 = vmul.f32 %v694, 0.70710677
      %v703 = vmul.f32 %v697, 0.70710677
      %v704 = vand.u32 2147483647, %v702
      %v705 = vand.u32 2147483647, %v703
      %v706 = vmul.f32 %v704, 0.3275911
      %v707 = vmul.f32 %v705, 0.3275911
      %v708 = vadd.f32 %v706, 1.0
      %v709 = vadd.f32 %v707, 1.0
      %v710 = vrcp.pop %v708
      %v711 = vmul.f32 1.0, %v710
      %v712 = vrcp.pop %v709
      %v713 = vmul.f32 1.0, %v712
      %v714 = vmul.f32 %v711, 1.0614054
      %v715 = vmul.f32 %v713, 1.0614054
      %v716 = vadd.f32 %v714, -1.4531521
      %v717 = vadd.f32 %v715, -1.4531521
      %v718 = vmul.f32 %v716, %v711
      %v719 = vmul.f32 %v717, %v713
      %v720 = vadd.f32 %v718, 1.4214138
      %v721 = vadd.f32 %v719, 1.4214138
      %v722 = vmul.f32 %v720, %v711
      %v723 = vmul.f32 %v721, %v713
      %v724 = vadd.f32 %v722, -0.28449672
      %v725 = vadd.f32 %v723, -0.28449672
      %v726 = vmul.f32 %v724, %v711
      %v727 = vmul.f32 %v725, %v713
      %v728 = vadd.f32 %v726, 0.2548296
      %v729 = vadd.f32 %v727, 0.2548296
      %v730 = vmul.f32 %v728, %v711
      %v731 = vmul.f32 %v729, %v713
      %v732 = vsub.f32 0.0, %v704
      %v733 = vsub.f32 0.0, %v705
      %v734 = vmul.f32 %v732, %v704
      %v735 = vmul.f32 %v733, %v705
      %v736 = vmul.f32 %v734, 1.442695
      %v737 = vpow.pop %v736
      %v738 = vmul.f32 %v735, 1.442695
      %v739 = vpow.pop %v738
      %v740 = vmul.f32 %v730, %v737
      %v741 = vmul.f32 %v731, %v739
      %v742 = vsub.f32 1.0, %v740
      %v743 = vsub.f32 1.0, %v741
      %vm744 = vcmp.ge.f32.partialorder %v702, 0.0
      %vm745 = vcmp.ge.f32.partialorder %v703, 0.0
      %v746 = vsub.f32 0.0, %v742
      %v747 = vsub.f32 0.0, %v743
      %v748 = vsel %vm744, %v742, %v746
      %v749 = vsel %vm745, %v743, %v747
      %v750 = vadd.f32 %v748, 1.0
      %v751 = vadd.f32 %v749, 1.0
      %v752 = vmul.f32 %v700, %v750
      %v753 = vmul.f32 %v701, %v751
      %v754 = vpack.c.bf16 %v753, %v752
      %v755 = vld [vmem:[%s524] sm:$0xf]
      %v756 = vld [vmem:[%s524 + $0x4] sm:$0xf]
      %v757 = vld [vmem:[%s527] sm:$0x1]
      %v759 = vlaneseq
      %v760 = vshrl.u32 %v759, 7
      %v761 = vsub.s32 0, %v760
      %v762 = vrot.slane %v757, %v761
      %v766 = vunpack.c.l.b16 %v755
      %v767 = vunpack.c.l.b16 %v756
      %v768 = vpack.c.b16 %v767, %v766
      %vm770 = vcmask 130048
      %v772 = vsel %vm770, %v754, 0
      %774 = vmatprep.subr.bf16.mxu0 0
      %775 = vmatpush1.bf16.msra.mxu0 %v768
      %776 = vmatprep.subr.bf16.mxu0 0
      %777 = vmatpush1.bf16.msra.mxu0 0
      %778 = vmatprep.subr.bf16.mxu0 0
      %779 = vmatpush1.bf16.msra.mxu0 0
      %780 = vmatprep.subr.bf16.mxu0 0
      %781 = vmatpush1.bf16.msra.mxu0 0
      %782 = vmatprep.subr.bf16.mxu0 0
      %783 = vmatpush1.bf16.msra.mxu0 0
      %784 = vmatprep.subr.bf16.mxu0 0
      %785 = vmatpush1.bf16.msra.mxu0 0
      %786 = vmatprep.subr.bf16.mxu0 0
      %787 = vmatpush1.bf16.msra.mxu0 0
      %788 = vmatprep.subr.bf16.mxu0 0
      %789 = vmatpush1.bf16.msra.mxu0 0
      %790 = vmatprep.subr.bf16.mxu0 0
      %791 = vmatpush1.bf16.msra.mxu0 0
      %792 = vmatprep.subr.bf16.mxu0 0
      %793 = vmatpush1.bf16.msra.mxu0 0
      %794 = vmatprep.subr.bf16.mxu0 0
      %795 = vmatpush1.bf16.msra.mxu0 0
      %796 = vmatprep.subr.bf16.mxu0 0
      %797 = vmatpush1.bf16.msra.mxu0 0
      %798 = vmatprep.subr.bf16.mxu0 0
      %799 = vmatpush1.bf16.msra.mxu0 0
      %800 = vmatprep.subr.bf16.mxu0 0
      %801 = vmatpush1.bf16.msra.mxu0 0
      %802 = vmatprep.subr.bf16.mxu0 0
      %803 = vmatpush1.bf16.msra.mxu0 0
      %804 = vmatprep.subr.bf16.mxu0 0
      %805 = vmatpush1.bf16.msra.mxu0 0
      %806 = vmatprep.mubr.bf16.mxu0 0
      %807 = vmatmul.mubr.bf16.gmra.mrb[0].mxu0 %v772
      %v808 = vpop.f32.mrb[0].mxu0
      %v809 = vadd.f32 %v762, %v808
      %v810 = vpop.f32.mrb[0].mxu0
      %v811 = vpop.f32.mrb[0].mxu0
      %v812 = vadd.f32 %v762, %v811
      %v813 = vpop.f32.mrb[0].mxu0
      %814 = vdwg.mxu0
      %v815 = vpack.c.bf16 %v812, %v809
      %v816 = vld [vmem:[%s532] sm:$0xf]
      %v817 = vld [vmem:[%s532 + $0x4] sm:$0xf]
      %v820 = vunpack.c.l.b16 %v816
      %v821 = vunpack.c.l.b16 %v817
      %v822 = vpack.c.b16 %v821, %v820
      %v825 = vsel %vm770, %v815, 0
      %827 = vmatprep.subr.bf16.mxu0 0
      %828 = vmatpush1.bf16.msra.mxu0 %v822
      %829 = vmatprep.subr.bf16.mxu0 0
      %830 = vmatpush1.bf16.msra.mxu0 0
      %831 = vmatprep.subr.bf16.mxu0 0
      %832 = vmatpush1.bf16.msra.mxu0 0
      %833 = vmatprep.subr.bf16.mxu0 0
      %834 = vmatpush1.bf16.msra.mxu0 0
      %835 = vmatprep.subr.bf16.mxu0 0
      %836 = vmatpush1.bf16.msra.mxu0 0
      %837 = vmatprep.subr.bf16.mxu0 0
      %838 = vmatpush1.bf16.msra.mxu0 0
      %839 = vmatprep.subr.bf16.mxu0 0
      %840 = vmatpush1.bf16.msra.mxu0 0
      %841 = vmatprep.subr.bf16.mxu0 0
      %842 = vmatpush1.bf16.msra.mxu0 0
      %843 = vmatprep.subr.bf16.mxu0 0
      %844 = vmatpush1.bf16.msra.mxu0 0
      %845 = vmatprep.subr.bf16.mxu0 0
      %846 = vmatpush1.bf16.msra.mxu0 0
      %847 = vmatprep.subr.bf16.mxu0 0
      %848 = vmatpush1.bf16.msra.mxu0 0
      %849 = vmatprep.subr.bf16.mxu0 0
      %850 = vmatpush1.bf16.msra.mxu0 0
      %851 = vmatprep.subr.bf16.mxu0 0
      %852 = vmatpush1.bf16.msra.mxu0 0
      %853 = vmatprep.subr.bf16.mxu0 0
      %854 = vmatpush1.bf16.msra.mxu0 0
      %855 = vmatprep.subr.bf16.mxu0 0
      %856 = vmatpush1.bf16.msra.mxu0 0
      %857 = vmatprep.subr.bf16.mxu0 0
      %858 = vmatpush1.bf16.msra.mxu0 0
      %859 = vmatprep.mubr.bf16.mxu0 0
      %860 = vmatmul.mubr.bf16.gmra.mrb[0].mxu0 %v825
      %v861 = vpop.f32.mrb[0].mxu0
      %v862 = vadd.f32 0.0, %v861
      %v863 = vpop.f32.mrb[0].mxu0
      %v864 = vpop.f32.mrb[0].mxu0
      %v865 = vadd.f32 0.0, %v864
      %v866 = vpop.f32.mrb[0].mxu0
      %867 = vdwg.mxu0
      %v868 = vld [vmem:[%s537] sm:$0xff]
      %v869 = vld [vmem:[%s537 + $0x8] sm:$0xff]
      %v870 = vld [vmem:[%s542] sm:$0xff]
      %v871 = vld [vmem:[%s542 + $0x8] sm:$0xff]
      %v872 = vmul.f32 %v862, %v868
      %v873 = vmul.f32 %v865, %v869
      %876 = vrot.lane.b32.xlu0 %v870, 8
      %v877 = vpop.permute.xlu0 %876
      %878 = vrot.lane.b32.xlu0 %v871, 8
      %v879 = vpop.permute.xlu0 %878
      %v882 = vmul.f32 %v862, %v877
      %v883 = vmul.f32 %v865, %v879
      %886 = vrot.lane.b32.xlu0 %v882, 120
      %v887 = vpop.permute.xlu0 %886
      %888 = vrot.lane.b32.xlu0 %v883, 120
      %v889 = vpop.permute.xlu0 %888
      %v892 = vsub.f32 %v872, %v887
      %v893 = vsub.f32 %v873, %v889
      %896 = vrot.lane.b32.xlu0 %v868, 8
      %v897 = vpop.permute.xlu0 %896
      %898 = vrot.lane.b32.xlu0 %v869, 8
      %v899 = vpop.permute.xlu0 %898
      %v902 = vmul.f32 %v862, %v897
      %v903 = vmul.f32 %v865, %v899
      %v904 = vmul.f32 %v862, %v870
      %v905 = vmul.f32 %v865, %v871
      %908 = vrot.lane.b32.xlu0 %v904, 8
      %v909 = vpop.permute.xlu0 %908
      %910 = vrot.lane.b32.xlu0 %v905, 8
      %v911 = vpop.permute.xlu0 %910
      %v914 = vadd.f32 %v902, %v909
      %v915 = vadd.f32 %v903, %v911
      %v916 = vsel %vm557, %v892, %v914
      %v917 = vsel %vm557, %v893, %v915
      %v918 = vpack.c.bf16 %v917, %v916
      %919 = vrot.lane.b32.xlu0 %v868, 32
      %v920 = vpop.permute.xlu0 %919
      %921 = vrot.lane.b32.xlu0 %v869, 32
      %v922 = vpop.permute.xlu0 %921
      %v925 = vmul.f32 %v862, %v920
      %v926 = vmul.f32 %v865, %v922
      %927 = vrot.lane.b32.xlu0 %v870, 40
      %v928 = vpop.permute.xlu0 %927
      %929 = vrot.lane.b32.xlu0 %v871, 40
      %v930 = vpop.permute.xlu0 %929
      %v933 = vmul.f32 %v862, %v928
      %v934 = vmul.f32 %v865, %v930
      %937 = vrot.lane.b32.xlu0 %v933, 120
      %v938 = vpop.permute.xlu0 %937
      %939 = vrot.lane.b32.xlu0 %v934, 120
      %v940 = vpop.permute.xlu0 %939
      %v943 = vsub.f32 %v925, %v938
      %v944 = vsub.f32 %v926, %v940
      %945 = vrot.lane.b32.xlu0 %v868, 40
      %v946 = vpop.permute.xlu0 %945
      %947 = vrot.lane.b32.xlu0 %v869, 40
      %v948 = vpop.permute.xlu0 %947
      %v951 = vmul.f32 %v862, %v946
      %v952 = vmul.f32 %v865, %v948
      %953 = vrot.lane.b32.xlu0 %v870, 32
      %v954 = vpop.permute.xlu0 %953
      %955 = vrot.lane.b32.xlu0 %v871, 32
      %v956 = vpop.permute.xlu0 %955
      %v959 = vmul.f32 %v862, %v954
      %v960 = vmul.f32 %v865, %v956
      %963 = vrot.lane.b32.xlu0 %v959, 8
      %v964 = vpop.permute.xlu0 %963
      %965 = vrot.lane.b32.xlu0 %v960, 8
      %v966 = vpop.permute.xlu0 %965
      %v969 = vadd.f32 %v951, %v964
      %v970 = vadd.f32 %v952, %v966
      %973 = vrot.lane.b32.xlu0 %v943, 96
      %v974 = vpop.permute.xlu0 %973
      %975 = vrot.lane.b32.xlu0 %v944, 96
      %v976 = vpop.permute.xlu0 %975
      %981 = vrot.lane.b32.xlu0 %v969, 96
      %v982 = vpop.permute.xlu0 %981
      %983 = vrot.lane.b32.xlu0 %v970, 96
      %v984 = vpop.permute.xlu0 %983
      %v987 = vsel %vm557, %v974, %v982
      %v988 = vsel %vm557, %v976, %v984
      %v989 = vpack.c.bf16 %v988, %v987
      %v991 = vsel %vm770, %v918, 0
      %v994 = vsel %vm770, %v989, 0
      %996 = vmatprep.subr.bf16.mxu0 0
      %997 = vmatpush1.bf16.xpose.msra.mxu0 %v994
      %998 = vmatprep.subr.bf16.mxu0 0
      %999 = vmatpush1.bf16.xpose.msra.mxu0 0
      %1000 = vmatprep.subr.bf16.mxu0 0
      %1001 = vmatpush1.bf16.xpose.msra.mxu0 0
      %1002 = vmatprep.subr.bf16.mxu0 0
      %1003 = vmatpush1.bf16.xpose.msra.mxu0 0
      %1004 = vmatprep.subr.bf16.mxu0 0
      %1005 = vmatpush1.bf16.xpose.msra.mxu0 0
      %1006 = vmatprep.subr.bf16.mxu0 0
      %1007 = vmatpush1.bf16.xpose.msra.mxu0 0
      %1008 = vmatprep.subr.bf16.mxu0 0
      %1009 = vmatpush1.bf16.xpose.msra.mxu0 0
      %1010 = vmatprep.subr.bf16.mxu0 0
      %1011 = vmatpush1.bf16.xpose.msra.mxu0 0
      %1012 = vmatprep.subr.bf16.mxu0 0
      %1013 = vmatpush1.bf16.xpose.msra.mxu0 0
      %1014 = vmatprep.subr.bf16.mxu0 0
      %1015 = vmatpush1.bf16.xpose.msra.mxu0 0
      %1016 = vmatprep.subr.bf16.mxu0 0
      %1017 = vmatpush1.bf16.xpose.msra.mxu0 0
      %1018 = vmatprep.subr.bf16.mxu0 0
      %1019 = vmatpush1.bf16.xpose.msra.mxu0 0
      %1020 = vmatprep.subr.bf16.mxu0 0
      %1021 = vmatpush1.bf16.xpose.msra.mxu0 0
      %1022 = vmatprep.subr.bf16.mxu0 0
      %1023 = vmatpush1.bf16.xpose.msra.mxu0 0
      %1024 = vmatprep.subr.bf16.mxu0 0
      %1025 = vmatpush1.bf16.xpose.msra.mxu0 0
      %1026 = vmatprep.subr.bf16.mxu0 0
      %1027 = vmatpush1.bf16.xpose.msra.mxu0 0
      %1028 = vmatprep.mubr.bf16.mxu0 0
      %1029 = vmatmul.mubr.bf16.gmra.mrb[0].mxu0 %v991
      %v1030 = vpop.f32.mrb[0].mxu0
      %v1031 = vadd.f32 0.0, %v1030
      %v1032 = vpop.f32.mrb[0].mxu0
      %v1033 = vpop.f32.mrb[0].mxu0
      %v1034 = vadd.f32 0.0, %v1033
      %v1035 = vpop.f32.mrb[0].mxu0
      %1036 = vdwg.mxu0
      %v1037 = vpack.c.bf16 %v1034, %v1031
      %v1039 = vunpack.c.l.b16 %v1037
      %v1040 = vunpack.c.h.b16 %v1037
      %v1041 = vpack.c.b16 %v1039, %v1039
      %v1042 = vpack.c.b16 %v1040, %v1040
      %vm1045 = vcmask 125952
      %1046 = vst.msk [vmem:[%s551] sm:$0xf] %vm1045, %v1041
      %1047 = vst.msk [vmem:[%s551 + $0x4] sm:$0xf] %vm1045, %v1042
      %1048 = vrot.lane.b32.xlu0 %v868, 16
      %v1049 = vpop.permute.xlu0 %1048
      %1050 = vrot.lane.b32.xlu0 %v869, 16
      %v1051 = vpop.permute.xlu0 %1050
      %v1054 = vmul.f32 %v862, %v1049
      %v1055 = vmul.f32 %v865, %v1051
      %1056 = vrot.lane.b32.xlu0 %v870, 24
      %v1057 = vpop.permute.xlu0 %1056
      %1058 = vrot.lane.b32.xlu0 %v871, 24
      %v1059 = vpop.permute.xlu0 %1058
      %v1062 = vmul.f32 %v862, %v1057
      %v1063 = vmul.f32 %v865, %v1059
      %1066 = vrot.lane.b32.xlu0 %v1062, 120
      %v1067 = vpop.permute.xlu0 %1066
      %1068 = vrot.lane.b32.xlu0 %v1063, 120
      %v1069 = vpop.permute.xlu0 %1068
      %v1072 = vsub.f32 %v1054, %v1067
      %v1073 = vsub.f32 %v1055, %v1069
      %1074 = vrot.lane.b32.xlu0 %v868, 24
      %v1075 = vpop.permute.xlu0 %1074
      %1076 = vrot.lane.b32.xlu0 %v869, 24
      %v1077 = vpop.permute.xlu0 %1076
      %v1080 = vmul.f32 %v862, %v1075
      %v1081 = vmul.f32 %v865, %v1077
      %1082 = vrot.lane.b32.xlu0 %v870, 16
      %v1083 = vpop.permute.xlu0 %1082
      %1084 = vrot.lane.b32.xlu0 %v871, 16
      %v1085 = vpop.permute.xlu0 %1084
      %v1088 = vmul.f32 %v862, %v1083
      %v1089 = vmul.f32 %v865, %v1085
      %1092 = vrot.lane.b32.xlu0 %v1088, 8
      %v1093 = vpop.permute.xlu0 %1092
      %1094 = vrot.lane.b32.xlu0 %v1089, 8
      %v1095 = vpop.permute.xlu0 %1094
      %v1098 = vadd.f32 %v1080, %v1093
      %v1099 = vadd.f32 %v1081, %v1095
      %1102 = vrot.lane.b32.xlu0 %v1072, 112
      %v1103 = vpop.permute.xlu0 %1102
      %1104 = vrot.lane.b32.xlu0 %v1073, 112
      %v1105 = vpop.permute.xlu0 %1104
      %1110 = vrot.lane.b32.xlu0 %v1098, 112
      %v1111 = vpop.permute.xlu0 %1110
      %1112 = vrot.lane.b32.xlu0 %v1099, 112
      %v1113 = vpop.permute.xlu0 %1112
      %v1116 = vsel %vm557, %v1103, %v1111
      %v1117 = vsel %vm557, %v1105, %v1113
      %v1118 = vpack.c.bf16 %v1117, %v1116
      %1119 = vrot.lane.b32.xlu0 %v868, 48
      %v1120 = vpop.permute.xlu0 %1119
      %1121 = vrot.lane.b32.xlu0 %v869, 48
      %v1122 = vpop.permute.xlu0 %1121
      %v1125 = vmul.f32 %v862, %v1120
      %v1126 = vmul.f32 %v865, %v1122
      %1127 = vrot.lane.b32.xlu0 %v870, 56
      %v1128 = vpop.permute.xlu0 %1127
      %1129 = vrot.lane.b32.xlu0 %v871, 56
      %v1130 = vpop.permute.xlu0 %1129
      %v1133 = vmul.f32 %v862, %v1128
      %v1134 = vmul.f32 %v865, %v1130
      %1137 = vrot.lane.b32.xlu0 %v1133, 120
      %v1138 = vpop.permute.xlu0 %1137
      %1139 = vrot.lane.b32.xlu0 %v1134, 120
      %v1140 = vpop.permute.xlu0 %1139
      %v1143 = vsub.f32 %v1125, %v1138
      %v1144 = vsub.f32 %v1126, %v1140
      %1145 = vrot.lane.b32.xlu0 %v868, 56
      %v1146 = vpop.permute.xlu0 %1145
      %1147 = vrot.lane.b32.xlu0 %v869, 56
      %v1148 = vpop.permute.xlu0 %1147
      %v1151 = vmul.f32 %v862, %v1146
      %v1152 = vmul.f32 %v865, %v1148
      %1153 = vrot.lane.b32.xlu0 %v870, 48
      %v1154 = vpop.permute.xlu0 %1153
      %1155 = vrot.lane.b32.xlu0 %v871, 48
      %v1156 = vpop.permute.xlu0 %1155
      %v1159 = vmul.f32 %v862, %v1154
      %v1160 = vmul.f32 %v865, %v1156
      %1163 = vrot.lane.b32.xlu0 %v1159, 8
      %v1164 = vpop.permute.xlu0 %1163
      %1165 = vrot.lane.b32.xlu0 %v1160, 8
      %v1166 = vpop.permute.xlu0 %1165
      %v1169 = vadd.f32 %v1151, %v1164
      %v1170 = vadd.f32 %v1152, %v1166
      %1173 = vrot.lane.b32.xlu0 %v1143, 80
      %v1174 = vpop.permute.xlu0 %1173
      %1175 = vrot.lane.b32.xlu0 %v1144, 80
      %v1176 = vpop.permute.xlu0 %1175
      %1181 = vrot.lane.b32.xlu0 %v1169, 80
      %v1182 = vpop.permute.xlu0 %1181
      %1183 = vrot.lane.b32.xlu0 %v1170, 80
      %v1184 = vpop.permute.xlu0 %1183
      %v1187 = vsel %vm557, %v1174, %v1182
      %v1188 = vsel %vm557, %v1176, %v1184
      %v1189 = vpack.c.bf16 %v1188, %v1187
      %v1191 = vsel %vm770, %v1118, 0
      %v1194 = vsel %vm770, %v1189, 0
      %1196 = vmatprep.subr.bf16.mxu0 0
      %1197 = vmatpush1.bf16.xpose.msra.mxu0 %v1194
      %1198 = vmatprep.subr.bf16.mxu0 0
      %1199 = vmatpush1.bf16.xpose.msra.mxu0 0
      %1200 = vmatprep.subr.bf16.mxu0 0
      %1201 = vmatpush1.bf16.xpose.msra.mxu0 0
      %1202 = vmatprep.subr.bf16.mxu0 0
      %1203 = vmatpush1.bf16.xpose.msra.mxu0 0
      %1204 = vmatprep.subr.bf16.mxu0 0
      %1205 = vmatpush1.bf16.xpose.msra.mxu0 0
      %1206 = vmatprep.subr.bf16.mxu0 0
      %1207 = vmatpush1.bf16.xpose.msra.mxu0 0
      %1208 = vmatprep.subr.bf16.mxu0 0
      %1209 = vmatpush1.bf16.xpose.msra.mxu0 0
      %1210 = vmatprep.subr.bf16.mxu0 0
      %1211 = vmatpush1.bf16.xpose.msra.mxu0 0
      %1212 = vmatprep.subr.bf16.mxu0 0
      %1213 = vmatpush1.bf16.xpose.msra.mxu0 0
      %1214 = vmatprep.subr.bf16.mxu0 0
      %1215 = vmatpush1.bf16.xpose.msra.mxu0 0
      %1216 = vmatprep.subr.bf16.mxu0 0
      %1217 = vmatpush1.bf16.xpose.msra.mxu0 0
      %1218 = vmatprep.subr.bf16.mxu0 0
      %1219 = vmatpush1.bf16.xpose.msra.mxu0 0
      %1220 = vmatprep.subr.bf16.mxu0 0
      %1221 = vmatpush1.bf16.xpose.msra.mxu0 0
      %1222 = vmatprep.subr.bf16.mxu0 0
      %1223 = vmatpush1.bf16.xpose.msra.mxu0 0
      %1224 = vmatprep.subr.bf16.mxu0 0
      %1225 = vmatpush1.bf16.xpose.msra.mxu0 0
      %1226 = vmatprep.subr.bf16.mxu0 0
      %1227 = vmatpush1.bf16.xpose.msra.mxu0 0
      %1228 = vmatprep.mubr.bf16.mxu0 0
      %1229 = vmatmul.mubr.bf16.gmra.mrb[0].mxu0 %v1191
      %v1230 = vpop.f32.mrb[0].mxu0
      %v1231 = vadd.f32 0.0, %v1230
      %v1232 = vpop.f32.mrb[0].mxu0
      %v1233 = vpop.f32.mrb[0].mxu0
      %v1234 = vadd.f32 0.0, %v1233
      %v1235 = vpop.f32.mrb[0].mxu0
      %1236 = vdwg.mxu0
      %v1237 = vpack.c.bf16 %v1234, %v1231
      %v1239 = vunpack.c.l.b16 %v1237
      %v1240 = vunpack.c.h.b16 %v1237
      %v1241 = vpack.c.b16 %v1239, %v1239
      %v1242 = vpack.c.b16 %v1240, %v1240
      %s1245 = scalar_lea.vmem %s551, 8
      %1246 = vst.msk [vmem:[%s1245] sm:$0xf] %vm1045, %v1241
      %1247 = vst.msk [vmem:[%s1245 + $0x4] sm:$0xf] %vm1045, %v1242
      %p1248 = scmp.lt.s32.totalorder %s25, 1
      %s1249 = scalar_select %p1248, %s25, 1
      %p1250 = scmp.lt.s32.totalorder %s26, 1
      %s1251 = scalar_select %p1250, %s26, 1
      %s1252 = smul.addr %s1251, 4
      %s1253 = smul.addr %s1249, 8
      %s1254 = sadd.s32 %s1252, %s1253
      %s1255 = smul.addr %s1254, 4
      %s1256 = scalar_lea.vmem %s10, %s1255
      // Predicated region
      $region61: #{fa_block_2d.5} parent=59 // pred_check
        %p1257 = pneg %p315
      $region62: #{fa_block_2d.5} parent=59 // pred_check_branch
        %1259 = sbr.rel (%p1257) target = $region64
      $region63: #{fa_block_2d.5} parent=59 // pred_region
        _
      $region64: #{fa_block_2d.5} parent=59 // pred_fallthru
        _
    $region60: #{fa_block_2d.5} parent=5 // pred_fallthru
      _
    %p1260 = scmp.le.s32.totalorder 2, %s16
    // Predicated region
    $region65: #{fa_block_2d.5} parent=5 // pred_check
      %p1261 = pneg %p1260
    $region66: #{fa_block_2d.5} parent=5 // pred_check_branch
      %1263 = sbr.rel (%p1261) target = $region68
    $region67: #{fa_block_2d.5} parent=5 // pred_region
      %s1264 = ssub.s32 %s16, 2
      // Predicated region
      $region69: #{fa_block_2d.5} parent=67 // pred_check
        %p1265 = pneg %p321
      $region70: #{fa_block_2d.5} parent=67 // pred_check_branch
        %1267 = sbr.rel (%p1265) target = $region72
      $region71: #{fa_block_2d.5} parent=67 // pred_region
        %p1268 = scmp.lt.s32.totalorder %s27, 1
        %s1269 = scalar_select %p1268, %s27, 1
        %p1270 = scmp.lt.s32.totalorder %s28, 1
        %s1271 = scalar_select %p1270, %s28, 1
        %s1272 = smul.addr %s1271, 4
        %s1273 = smul.addr %s1269, 8
        %s1274 = sadd.s32 %s1272, %s1273
        %s1275 = smul.addr %s1274, 4
        %s1276 = scalar_lea.vmem %s10, %s1275
      $region72: #{fa_block_2d.5} parent=67 // pred_fallthru
        _
    $region68: #{fa_block_2d.5} parent=5 // pred_fallthru
      _
  $region6: #{fa_block_2d.5} parent=0 // loop_footer
    %s20 = sadd.s32 1, %s16
  $region7: #{fa_block_2d.5} parent=0 // loop_footer_branch
    %15 = sbr.rel target = $region3
  $region8: #{fa_block_2d.5} parent=0 // loop_exit
    _

// kernel: fa_block_2d.6
$region0: #{fa_block_2d.6}
  #allocation0 [shape = 'u32[]', space=smem, size = 0x4, offset = 0x4, fixed_abs, tag = 'smem constant byte address 0x4 - core index']
  #allocation1 [shape = 'u32[144,128]{1,0:T(1,128)}', space=vmem, size = 0x12000, scoped, tag = 'internal scratch']
  %s0 = inlined_call_operand.vmem [shape: bf16[2,2,16,16], index: 0, kind: input, shape index: {}]
  %s1 = inlined_call_operand.vmem [shape: bf16[2,2,16,16], index: 1, kind: input, shape index: {}]
  %s2 = inlined_call_operand.vmem [shape: bf16[2,2,128,16], index: 2, kind: input, shape index: {}]
  %s3 = inlined_call_operand.vmem [shape: bf16[2,2,8,16,16], index: 3, kind: output, shape index: {0}]
  %s4 = inlined_call_operand.vmem [shape: f32[2,2,1,8,1], index: 4, kind: output, shape index: {1}]
  %s5 = inlined_call_operand.vmem [shape: f32[2,2,1,8,1], index: 5, kind: output, shape index: {2}]
  %6 = xla_tuple %s3, %s4, %s5
  %s7 = sld [smem:[#allocation0]]
  $region61: #{fa_block_2d.6} parent=0
    _
  %s9 = ssub.s32 1, %s7
  %s10 = scalar_select 0, %s9, %s7
  loop: start=0, step=1, limit=6
  $region2: #{fa_block_2d.6} parent=0 // loop_pre_header
    _
  $region3: #{fa_block_2d.6} parent=0 // loop_header
    %s12 = sphi 0, %s16
    %p13 = scmp.ge.s32.totalorder %s12, 6
    %s19 = sphi 0, %s38
    %s20 = sphi 0, %s34
    %s21 = sphi 0, %s30
    %s22 = sphi 0, %s19
    %s23 = sphi 0, %s20
    %s24 = sphi 0, %s21
    %s25 = sphi 0, %s22
    %s26 = sphi 0, %s23
    %s27 = sphi 0, %s24
    %s43 = sphi 0, %s45
    %s46 = sphi 0, %s43
    %s47 = sphi 0, %s46
    %s63 = sphi 0, %s47
    %s71 = sphi 0, %s73
    %s74 = sphi 0, %s71
    %s75 = sphi 0, %s74
    %s91 = sphi 0, %s75
    %s101 = sphi 0, %s103
    %s104 = sphi 0, %s101
    %s105 = sphi 0, %s104
    %s121 = sphi 0, %s105
    %s131 = sphi 0, %s133
    %s134 = sphi 0, %s131
    %s135 = sphi 0, %s134
    %s151 = sphi 0, %s135
    %s161 = sphi 0, %s163
    %s164 = sphi 0, %s161
    %s165 = sphi 0, %s164
    %s181 = sphi 0, %s165
    %s191 = sphi 0, %s193
    %s194 = sphi 0, %s191
    %s195 = sphi 0, %s194
    %s211 = sphi 0, %s195
  $region4: #{fa_block_2d.6} parent=0 // loop_header_branch
    %15 = sbr.rel (%p13) target = $region8
  $region5: #{fa_block_2d.6} parent=0 // loop_body
    %s17 = ssub.s32 %s12, 1
    %s18 = ssub.s32 %s12, 2
    %s28 = sadd.s32 1, %s21
    %p29 = scmp.ge.s32.totalorder %s28, 1
    %s30 = scalar_select %p29, 0, %s28
    %s31 = sadd.s32 1, %s20
    %s32 = scalar_select %p29, %s31, %s20
    %p33 = scmp.ge.s32.totalorder %s32, 2
    %s34 = scalar_select %p33, 0, %s32
    %s35 = sadd.s32 1, %s19
    %s36 = scalar_select %p33, %s35, %s19
    %p37 = scmp.ge.s32.totalorder %s36, 2
    %s38 = scalar_select %p37, 0, %s36
    %s39 = ssub.s32 %s19, %s38
    %s40 = ssub.s32 %s20, %s34
    %s41 = sor.u32 %s39, %s40
    %p42 = scmp.eq.s32.totalorder %s41, 0
    %s44 = sadd.s32 %s43, 1
    %s45 = scalar_select %p42, %s43, %s44
    %p48 = pneg %p42
    %p49 = scmp.eq.s32.totalorder %s12, 3
    %p50 = por %p48, %p49
    %p51 = scmp.ne.s32.totalorder %s43, %s46
    %p52 = scmp.eq.s32.totalorder %s12, 0
    %p53 = por %p51, %p52
    %p54 = scmp.ne.s32.totalorder %s43, %s46
    %p55 = scmp.eq.s32.totalorder %s17, 3
    %p56 = por %p54, %p55
    %p57 = scmp.ne.s32.totalorder %s46, %s47
    %p58 = scmp.eq.s32.totalorder %s17, 0
    %p59 = por %p57, %p58
    %p60 = scmp.ne.s32.totalorder %s46, %s47
    %p61 = scmp.eq.s32.totalorder %s18, 3
    %p62 = por %p60, %p61
    %p64 = scmp.ne.s32.totalorder %s47, %s63
    %p65 = scmp.eq.s32.totalorder %s18, 0
    %p66 = por %p64, %p65
    %s67 = ssub.s32 %s19, %s38
    %s68 = ssub.s32 %s20, %s34
    %s69 = sor.u32 %s67, %s68
    %p70 = scmp.eq.s32.totalorder %s69, 0
    %s72 = sadd.s32 %s71, 1
    %s73 = scalar_select %p70, %s71, %s72
    %p76 = pneg %p70
    %p77 = scmp.eq.s32.totalorder %s12, 3
    %p78 = por %p76, %p77
    %p79 = scmp.ne.s32.totalorder %s71, %s74
    %p80 = scmp.eq.s32.totalorder %s12, 0
    %p81 = por %p79, %p80
    %p82 = scmp.ne.s32.totalorder %s71, %s74
    %p83 = scmp.eq.s32.totalorder %s17, 3
    %p84 = por %p82, %p83
    %p85 = scmp.ne.s32.totalorder %s74, %s75
    %p86 = scmp.eq.s32.totalorder %s17, 0
    %p87 = por %p85, %p86
    %p88 = scmp.ne.s32.totalorder %s74, %s75
    %p89 = scmp.eq.s32.totalorder %s18, 3
    %p90 = por %p88, %p89
    %p92 = scmp.ne.s32.totalorder %s75, %s91
    %p93 = scmp.eq.s32.totalorder %s18, 0
    %p94 = por %p92, %p93
    %s95 = ssub.s32 %s19, %s38
    %s96 = ssub.s32 %s20, %s34
    %s97 = sor.u32 %s95, %s96
    %s98 = ssub.s32 %s21, %s30
    %s99 = sor.u32 %s97, %s98
    %p100 = scmp.eq.s32.totalorder %s99, 0
    %s102 = sadd.s32 %s101, 1
    %s103 = scalar_select %p100, %s101, %s102
    %p106 = pneg %p100
    %p107 = scmp.eq.s32.totalorder %s12, 3
    %p108 = por %p106, %p107
    %p109 = scmp.ne.s32.totalorder %s101, %s104
    %p110 = scmp.eq.s32.totalorder %s12, 0
    %p111 = por %p109, %p110
    %p112 = scmp.ne.s32.totalorder %s101, %s104
    %p113 = scmp.eq.s32.totalorder %s17, 3
    %p114 = por %p112, %p113
    %p115 = scmp.ne.s32.totalorder %s104, %s105
    %p116 = scmp.eq.s32.totalorder %s17, 0
    %p117 = por %p115, %p116
    %p118 = scmp.ne.s32.totalorder %s104, %s105
    %p119 = scmp.eq.s32.totalorder %s18, 3
    %p120 = por %p118, %p119
    %p122 = scmp.ne.s32.totalorder %s105, %s121
    %p123 = scmp.eq.s32.totalorder %s18, 0
    %p124 = por %p122, %p123
    %s125 = ssub.s32 %s19, %s38
    %s126 = ssub.s32 %s20, %s34
    %s127 = sor.u32 %s125, %s126
    %s128 = ssub.s32 %s21, %s30
    %s129 = sor.u32 %s127, %s128
    %p130 = scmp.eq.s32.totalorder %s129, 0
    %s132 = sadd.s32 %s131, 1
    %s133 = scalar_select %p130, %s131, %s132
    %p136 = pneg %p130
    %p137 = scmp.eq.s32.totalorder %s12, 3
    %p138 = por %p136, %p137
    %p139 = scmp.ne.s32.totalorder %s131, %s134
    %p140 = scmp.eq.s32.totalorder %s12, 0
    %p141 = por %p139, %p140
    %p142 = scmp.ne.s32.totalorder %s131, %s134
    %p143 = scmp.eq.s32.totalorder %s17, 3
    %p144 = por %p142, %p143
    %p145 = scmp.ne.s32.totalorder %s134, %s135
    %p146 = scmp.eq.s32.totalorder %s17, 0
    %p147 = por %p145, %p146
    %p148 = scmp.ne.s32.totalorder %s134, %s135
    %p149 = scmp.eq.s32.totalorder %s18, 3
    %p150 = por %p148, %p149
    %p152 = scmp.ne.s32.totalorder %s135, %s151
    %p153 = scmp.eq.s32.totalorder %s18, 0
    %p154 = por %p152, %p153
    %s155 = ssub.s32 %s19, %s38
    %s156 = ssub.s32 %s20, %s34
    %s157 = sor.u32 %s155, %s156
    %s158 = ssub.s32 %s21, %s30
    %s159 = sor.u32 %s157, %s158
    %p160 = scmp.eq.s32.totalorder %s159, 0
    %s162 = sadd.s32 %s161, 1
    %s163 = scalar_select %p160, %s161, %s162
    %p166 = pneg %p160
    %p167 = scmp.eq.s32.totalorder %s12, 3
    %p168 = por %p166, %p167
    %p169 = scmp.ne.s32.totalorder %s161, %s164
    %p170 = scmp.eq.s32.totalorder %s12, 0
    %p171 = por %p169, %p170
    %p172 = scmp.ne.s32.totalorder %s161, %s164
    %p173 = scmp.eq.s32.totalorder %s17, 3
    %p174 = por %p172, %p173
    %p175 = scmp.ne.s32.totalorder %s164, %s165
    %p176 = scmp.eq.s32.totalorder %s17, 0
    %p177 = por %p175, %p176
    %p178 = scmp.ne.s32.totalorder %s164, %s165
    %p179 = scmp.eq.s32.totalorder %s18, 3
    %p180 = por %p178, %p179
    %p182 = scmp.ne.s32.totalorder %s165, %s181
    %p183 = scmp.eq.s32.totalorder %s18, 0
    %p184 = por %p182, %p183
    %s185 = ssub.s32 %s19, %s38
    %s186 = ssub.s32 %s20, %s34
    %s187 = sor.u32 %s185, %s186
    %s188 = ssub.s32 %s21, %s30
    %s189 = sor.u32 %s187, %s188
    %p190 = scmp.eq.s32.totalorder %s189, 0
    %s192 = sadd.s32 %s191, 1
    %s193 = scalar_select %p190, %s191, %s192
    %p196 = pneg %p190
    %p197 = scmp.eq.s32.totalorder %s12, 3
    %p198 = por %p196, %p197
    %p199 = scmp.ne.s32.totalorder %s191, %s194
    %p200 = scmp.eq.s32.totalorder %s12, 0
    %p201 = por %p199, %p200
    %p202 = scmp.ne.s32.totalorder %s191, %s194
    %p203 = scmp.eq.s32.totalorder %s17, 3
    %p204 = por %p202, %p203
    %p205 = scmp.ne.s32.totalorder %s194, %s195
    %p206 = scmp.eq.s32.totalorder %s17, 0
    %p207 = por %p205, %p206
    %p208 = scmp.ne.s32.totalorder %s194, %s195
    %p209 = scmp.eq.s32.totalorder %s18, 3
    %p210 = por %p208, %p209
    %p212 = scmp.ne.s32.totalorder %s195, %s211
    %p213 = scmp.eq.s32.totalorder %s18, 0
    %p214 = por %p212, %p213
    %p215 = scmp.le.s32.totalorder 1, %s12
    %p216 = scmp.lt.s32.totalorder %s12, 5
    %p217 = pnand %p215, %p216
    %p218 = pneg %p217
    // Predicated region
    $region9: #{fa_block_2d.6} parent=5 // pred_check
      _
    $region10: #{fa_block_2d.6} parent=5 // pred_check_branch
      %220 = sbr.rel (%p217) target = $region12
    $region11: #{fa_block_2d.6} parent=5 // pred_region
      %s221 = ssub.s32 %s12, 1
    $region12: #{fa_block_2d.6} parent=5 // pred_fallthru
      _
    %p222 = scmp.lt.s32.totalorder %s12, 4
    // Predicated region
    $region13: #{fa_block_2d.6} parent=5 // pred_check
      %p223 = pneg %p222
    $region14: #{fa_block_2d.6} parent=5 // pred_check_branch
      %225 = sbr.rel (%p223) target = $region16
    $region15: #{fa_block_2d.6} parent=5 // pred_region
      // Predicated region
      $region17: #{fa_block_2d.6} parent=15 // pred_check
        %p226 = pneg %p53
      $region18: #{fa_block_2d.6} parent=15 // pred_check_branch
        %228 = sbr.rel (%p226) target = $region20
      $region19: #{fa_block_2d.6} parent=15 // pred_region
        %p229 = scmp.lt.s32.totalorder %s19, 1
        %s230 = scalar_select %p229, %s19, 1
        %p231 = scmp.lt.s32.totalorder %s20, 1
        %s232 = scalar_select %p231, %s20, 1
        %s233 = smul.addr %s232, 2
        %s234 = smul.addr %s230, 4
        %s235 = sadd.s32 %s233, %s234
        %s236 = smul.addr %s235, 4
        %s237 = scalar_lea.vmem %s0, %s236
      $region20: #{fa_block_2d.6} parent=15 // pred_fallthru
        _
      // Predicated region
      $region21: #{fa_block_2d.6} parent=15 // pred_check
        %p238 = pneg %p81
      $region22: #{fa_block_2d.6} parent=15 // pred_check_branch
        %240 = sbr.rel (%p238) target = $region24
      $region23: #{fa_block_2d.6} parent=15 // pred_region
        %p241 = scmp.lt.s32.totalorder %s19, 1
        %s242 = scalar_select %p241, %s19, 1
        %p243 = scmp.lt.s32.totalorder %s20, 1
        %s244 = scalar_select %p243, %s20, 1
        %s245 = smul.addr %s244, 2
        %s246 = smul.addr %s242, 4
        %s247 = sadd.s32 %s245, %s246
        %s248 = smul.addr %s247, 4
        %s249 = scalar_lea.vmem %s1, %s248
      $region24: #{fa_block_2d.6} parent=15 // pred_fallthru
        _
      // Predicated region
      $region25: #{fa_block_2d.6} parent=15 // pred_check
        %p250 = pneg %p111
      $region26: #{fa_block_2d.6} parent=15 // pred_check_branch
        %252 = sbr.rel (%p250) target = $region28
      $region27: #{fa_block_2d.6} parent=15 // pred_region
        %s253 = smul.u32 16, %s21
        %p254 = scmp.lt.s32.totalorder %s19, 1
        %s255 = scalar_select %p254, %s19, 1
        %p256 = scmp.lt.s32.totalorder %s20, 1
        %s257 = scalar_select %p256, %s20, 1
        %p258 = scmp.lt.s32.totalorder %s253, 15
        %s259 = scalar_select %p258, %s253, 15
        %s260 = smul.addr %s257, 16
        %s261 = sadd.s32 %s259, %s260
        %s262 = smul.addr %s255, 32
        %s263 = sadd.s32 %s261, %s262
        %s264 = smul.addr %s263, 4
        %s265 = scalar_lea.vmem %s2, %s264
        %s266 = smul.u32 16, %s21
      $region28: #{fa_block_2d.6} parent=15 // pred_fallthru
        _
    $region16: #{fa_block_2d.6} parent=5 // pred_fallthru
      _
    %p267 = scmp.le.s32.totalorder 1, %s12
    %p268 = scmp.lt.s32.totalorder %s12, 5
    %p269 = pnand %p267, %p268
    %p270 = pneg %p269
    // Predicated region
    $region29: #{fa_block_2d.6} parent=5 // pred_check
      _
    $region30: #{fa_block_2d.6} parent=5 // pred_check_branch
      %272 = sbr.rel (%p269) target = $region32
    $region31: #{fa_block_2d.6} parent=5 // pred_region
      %s273 = ssub.s32 %s12, 1
      %p274 = scmp.lt.s32.totalorder %s22, 1
      %s275 = scalar_select %p274, %s22, 1
      %p276 = scmp.lt.s32.totalorder %s23, 1
      %s277 = scalar_select %p276, %s23, 1
      %s278 = smul.addr %s277, 2
      %s279 = smul.addr %s275, 4
      %s280 = sadd.s32 %s278, %s279
      %s281 = smul.addr %s280, 4
      %s282 = scalar_lea.vmem %s0, %s281
      %p283 = pneg %p59
      %p284 = pneg %p56
      %p285 = scmp.lt.s32.totalorder %s22, 1
      %s286 = scalar_select %p285, %s22, 1
      %p287 = scmp.lt.s32.totalorder %s23, 1
      %s288 = scalar_select %p287, %s23, 1
      %s289 = smul.addr %s288, 2
      %s290 = smul.addr %s286, 4
      %s291 = sadd.s32 %s289, %s290
      %s292 = smul.addr %s291, 4
      %s293 = scalar_lea.vmem %s1, %s292
      %p294 = pneg %p87
      %p295 = pneg %p84
      %s296 = smul.u32 16, %s24
      %p297 = scmp.lt.s32.totalorder %s22, 1
      %s298 = scalar_select %p297, %s22, 1
      %p299 = scmp.lt.s32.totalorder %s23, 1
      %s300 = scalar_select %p299, %s23, 1
      %p301 = scmp.lt.s32.totalorder %s296, 15
      %s302 = scalar_select %p301, %s296, 15
      %s303 = smul.addr %s300, 16
      %s304 = sadd.s32 %s302, %s303
      %s305 = smul.addr %s298, 32
      %s306 = sadd.s32 %s304, %s305
      %s307 = smul.addr %s306, 4
      %s308 = scalar_lea.vmem %s2, %s307
      %p309 = pneg %p117
      %p310 = pneg %p114
      %p311 = pneg %p147
      %p312 = pneg %p144
      %s313 = smul.u32 8, %s24
      %p314 = scmp.lt.s32.totalorder %s22, 1
      %s315 = scalar_select %p314, %s22, 1
      %p316 = scmp.lt.s32.totalorder %s23, 1
      %s317 = scalar_select %p316, %s23, 1
      %p318 = scmp.lt.s32.totalorder %s313, 7
      %s319 = scalar_select %p318, %s313, 7
      %s320 = smul.addr %s319, 2
      %s321 = smul.addr %s317, 16
      %s322 = sadd.s32 %s320, %s321
      %s323 = smul.addr %s315, 32
      %s324 = sadd.s32 %s322, %s323
      %s325 = smul.addr %s324, 4
      %s326 = scalar_lea.vmem %s3, %s325
      %p327 = pneg %p177
      %p328 = pneg %p174
      %p329 = scmp.lt.s32.totalorder %s22, 1
      %s330 = scalar_select %p329, %s22, 1
      %p331 = scmp.lt.s32.totalorder %s23, 1
      %s332 = scalar_select %p331, %s23, 1
      %p333 = scmp.lt.s32.totalorder %s24, 0
      %s334 = scalar_select %p333, %s24, 0
      %s335 = sadd.s32 %s334, %s332
      %s336 = smul.addr %s330, 2
      %s337 = sadd.s32 %s335, %s336
      %s338 = smul.addr %s337, 8
      %s339 = scalar_lea.vmem %s4, %s338
      %p340 = pneg %p207
      %p341 = pneg %p204
      %p342 = scmp.lt.s32.totalorder %s22, 1
      %s343 = scalar_select %p342, %s22, 1
      %p344 = scmp.lt.s32.totalorder %s23, 1
      %s345 = scalar_select %p344, %s23, 1
      %p346 = scmp.lt.s32.totalorder %s24, 0
      %s347 = scalar_select %p346, %s24, 0
      %s348 = sadd.s32 %s347, %s345
      %s349 = smul.addr %s343, 2
      %s350 = sadd.s32 %s348, %s349
      %s351 = smul.addr %s350, 8
      %s352 = scalar_lea.vmem %s5, %s351
      %p353 = scmp.lt.s32.totalorder %s22, 1
      %s354 = scalar_select %p353, %s22, 1
      %p355 = scmp.lt.s32.totalorder %s23, 1
      %s356 = scalar_select %p355, %s23, 1
      %s357 = smul.addr %s356, 2
      %s358 = smul.addr %s354, 4
      %s359 = sadd.s32 %s357, %s358
      %s360 = smul.addr %s359, 4
      %s361 = scalar_lea.vmem %s0, %s360
      %p362 = scmp.lt.s32.totalorder %s22, 1
      %s363 = scalar_select %p362, %s22, 1
      %p364 = scmp.lt.s32.totalorder %s23, 1
      %s365 = scalar_select %p364, %s23, 1
      %s366 = smul.addr %s365, 2
      %s367 = smul.addr %s363, 4
      %s368 = sadd.s32 %s366, %s367
      %s369 = smul.addr %s368, 4
      %s370 = scalar_lea.vmem %s1, %s369
      %s371 = smul.u32 16, %s24
      %p372 = scmp.lt.s32.totalorder %s22, 1
      %s373 = scalar_select %p372, %s22, 1
      %p374 = scmp.lt.s32.totalorder %s23, 1
      %s375 = scalar_select %p374, %s23, 1
      %p376 = scmp.lt.s32.totalorder %s371, 15
      %s377 = scalar_select %p376, %s371, 15
      %s378 = smul.addr %s375, 16
      %s379 = sadd.s32 %s377, %s378
      %s380 = smul.addr %s373, 32
      %s381 = sadd.s32 %s379, %s380
      %s382 = smul.addr %s381, 4
      %s383 = scalar_lea.vmem %s2, %s382
      %s384 = smul.u32 16, %s24
      %s385 = smul.u32 8, %s24
      %p386 = scmp.lt.s32.totalorder %s22, 1
      %s387 = scalar_select %p386, %s22, 1
      %p388 = scmp.lt.s32.totalorder %s23, 1
      %s389 = scalar_select %p388, %s23, 1
      %p390 = scmp.lt.s32.totalorder %s385, 7
      %s391 = scalar_select %p390, %s385, 7
      %s392 = smul.addr %s391, 2
      %s393 = smul.addr %s389, 16
      %s394 = sadd.s32 %s392, %s393
      %s395 = smul.addr %s387, 32
      %s396 = sadd.s32 %s394, %s395
      %s397 = smul.addr %s396, 4
      %s398 = scalar_lea.vmem %s3, %s397
      %s399 = smul.u32 8, %s24
      %p400 = scmp.lt.s32.totalorder %s22, 1
      %s401 = scalar_select %p400, %s22, 1
      %p402 = scmp.lt.s32.totalorder %s23, 1
      %s403 = scalar_select %p402, %s23, 1
      %p404 = scmp.lt.s32.totalorder %s24, 0
      %s405 = scalar_select %p404, %s24, 0
      %s406 = sadd.s32 %s405, %s403
      %s407 = smul.addr %s401, 2
      %s408 = sadd.s32 %s406, %s407
      %s409 = smul.addr %s408, 8
      %s410 = scalar_lea.vmem %s4, %s409
      %p411 = scmp.lt.s32.totalorder %s22, 1
      %s412 = scalar_select %p411, %s22, 1
      %p413 = scmp.lt.s32.totalorder %s23, 1
      %s414 = scalar_select %p413, %s23, 1
      %p415 = scmp.lt.s32.totalorder %s24, 0
      %s416 = scalar_select %p415, %s24, 0
      %s417 = sadd.s32 %s416, %s414
      %s418 = smul.addr %s412, 2
      %s419 = sadd.s32 %s417, %s418
      %s420 = smul.addr %s419, 8
      %s421 = scalar_lea.vmem %s5, %s420
      %v423 = vld [vmem:[%s361] sm:$0xf]
      %v424 = vld [vmem:[%s361 + $0x4] sm:$0xf]
      %v425 = vld [vmem:[%s370] sm:$0xf]
      %v426 = vld [vmem:[%s370 + $0x4] sm:$0xf]
      %v427 = vld [vmem:[%s383] sm:$0xf]
      %v428 = vld [vmem:[%s383 + $0x4] sm:$0xf]
      %v429 = vld [vmem:[%s383 + $0x8] sm:$0xf]
      %v430 = vld [vmem:[%s383 + $0xc] sm:$0xf]
      %v431 = vld [vmem:[%s383 + $0x10] sm:$0xf]
      %v432 = vld [vmem:[%s383 + $0x14] sm:$0xf]
      %v433 = vld [vmem:[%s383 + $0x18] sm:$0xf]
      %v434 = vld [vmem:[%s383 + $0x1c] sm:$0xf]
      %v435 = vld [vmem:[%s383 + $0x20] sm:$0xf]
      %v436 = vld [vmem:[%s383 + $0x24] sm:$0xf]
      %v437 = vld [vmem:[%s383 + $0x28] sm:$0xf]
      %v438 = vld [vmem:[%s383 + $0x2c] sm:$0xf]
      %v439 = vld [vmem:[%s383 + $0x30] sm:$0xf]
      %v440 = vld [vmem:[%s383 + $0x34] sm:$0xf]
      %v441 = vld [vmem:[%s383 + $0x38] sm:$0xf]
      %v442 = vld [vmem:[%s383 + $0x3c] sm:$0xf]
      %v459 = vunpack.c.l.b16 %v427
      %v460 = vunpack.c.l.b16 %v428
      %v461 = vunpack.c.l.b16 %v429
      %v462 = vunpack.c.l.b16 %v430
      %v463 = vunpack.c.l.b16 %v431
      %v464 = vunpack.c.l.b16 %v432
      %v465 = vunpack.c.l.b16 %v433
      %v466 = vunpack.c.l.b16 %v434
      %v467 = vunpack.c.l.b16 %v435
      %v468 = vunpack.c.l.b16 %v436
      %v469 = vunpack.c.l.b16 %v437
      %v470 = vunpack.c.l.b16 %v438
      %v471 = vunpack.c.l.b16 %v439
      %v472 = vunpack.c.l.b16 %v440
      %v473 = vunpack.c.l.b16 %v441
      %v474 = vunpack.c.l.b16 %v442
      %v475 = vpack.c.b16 %v460, %v459
      %v476 = vpack.c.b16 %v462, %v461
      %v477 = vpack.c.b16 %v464, %v463
      %v478 = vpack.c.b16 %v466, %v465
      %v479 = vpack.c.b16 %v468, %v467
      %v480 = vpack.c.b16 %v470, %v469
      %v481 = vpack.c.b16 %v472, %v471
      %v482 = vpack.c.b16 %v474, %v473
      %v485 = vunpack.c.l.b16 %v425
      %v486 = vunpack.c.l.b16 %v426
      %v487 = vpack.c.b16 %v486, %v485
      %vm488 = vcmask 130048
      %v490 = vsel %vm488, %v475, 0
      %v493 = vsel %vm488, %v476, 0
      %v496 = vsel %vm488, %v477, 0
      %v499 = vsel %vm488, %v478, 0
      %v502 = vsel %vm488, %v479, 0
      %v505 = vsel %vm488, %v480, 0
      %v508 = vsel %vm488, %v481, 0
      %v511 = vsel %vm488, %v482, 0
      %v514 = vsel %vm488, %v487, 0
      %516 = vmatprep.subr.bf16.mxu0 0
      %517 = vmatpush1.bf16.xpose.msra.mxu0 %v514
      %518 = vmatprep.subr.bf16.mxu0 0
      %519 = vmatpush1.bf16.xpose.msra.mxu0 0
      %520 = vmatprep.subr.bf16.mxu0 0
      %521 = vmatpush1.bf16.xpose.msra.mxu0 0
      %522 = vmatprep.subr.bf16.mxu0 0
      %523 = vmatpush1.bf16.xpose.msra.mxu0 0
      %524 = vmatprep.subr.bf16.mxu0 0
      %525 = vmatpush1.bf16.xpose.msra.mxu0 0
      %526 = vmatprep.subr.bf16.mxu0 0
      %527 = vmatpush1.bf16.xpose.msra.mxu0 0
      %528 = vmatprep.subr.bf16.mxu0 0
      %529 = vmatpush1.bf16.xpose.msra.mxu0 0
      %530 = vmatprep.subr.bf16.mxu0 0
      %531 = vmatpush1.bf16.xpose.msra.mxu0 0
      %532 = vmatprep.subr.bf16.mxu0 0
      %533 = vmatpush1.bf16.xpose.msra.mxu0 0
      %534 = vmatprep.subr.bf16.mxu0 0
      %535 = vmatpush1.bf16.xpose.msra.mxu0 0
      %536 = vmatprep.subr.bf16.mxu0 0
      %537 = vmatpush1.bf16.xpose.msra.mxu0 0
      %538 = vmatprep.subr.bf16.mxu0 0
      %539 = vmatpush1.bf16.xpose.msra.mxu0 0
      %540 = vmatprep.subr.bf16.mxu0 0
      %541 = vmatpush1.bf16.xpose.msra.mxu0 0
      %542 = vmatprep.subr.bf16.mxu0 0
      %543 = vmatpush1.bf16.xpose.msra.mxu0 0
      %544 = vmatprep.subr.bf16.mxu0 0
      %545 = vmatpush1.bf16.xpose.msra.mxu0 0
      %546 = vmatprep.subr.bf16.mxu0 0
      %547 = vmatpush1.bf16.xpose.msra.mxu0 0
      %548 = vmatprep.mubr.bf16.mxu0 0
      %549 = vmatmul.mubr.bf16.gmra.mrb[0].mxu0 %v490
      %v550 = vpop.f32.mrb[0].mxu0
      %v551 = vadd.f32 0.0, %v550
      %v552 = vpop.f32.mrb[0].mxu0
      %v553 = vpop.f32.mrb[0].mxu0
      %v554 = vadd.f32 0.0, %v553
      %v555 = vpop.f32.mrb[0].mxu0
      %556 = vmatprep.mubr.bf16.mxu0 0
      %557 = vmatmul.mubr.bf16.gmra.mrb[0].mxu0 %v493
      %v558 = vpop.f32.mrb[0].mxu0
      %v559 = vadd.f32 0.0, %v558
      %v560 = vpop.f32.mrb[0].mxu0
      %v561 = vpop.f32.mrb[0].mxu0
      %v562 = vadd.f32 0.0, %v561
      %v563 = vpop.f32.mrb[0].mxu0
      %564 = vmatprep.mubr.bf16.mxu0 0
      %565 = vmatmul.mubr.bf16.gmra.mrb[0].mxu0 %v496
      %v566 = vpop.f32.mrb[0].mxu0
      %v567 = vadd.f32 0.0, %v566
      %v568 = vpop.f32.mrb[0].mxu0
      %v569 = vpop.f32.mrb[0].mxu0
      %v570 = vadd.f32 0.0, %v569
      %v571 = vpop.f32.mrb[0].mxu0
      %572 = vmatprep.mubr.bf16.mxu0 0
      %573 = vmatmul.mubr.bf16.gmra.mrb[0].mxu0 %v499
      %v574 = vpop.f32.mrb[0].mxu0
      %v575 = vadd.f32 0.0, %v574
      %v576 = vpop.f32.mrb[0].mxu0
      %v577 = vpop.f32.mrb[0].mxu0
      %v578 = vadd.f32 0.0, %v577
      %v579 = vpop.f32.mrb[0].mxu0
      %580 = vmatprep.mubr.bf16.mxu0 0
      %581 = vmatmul.mubr.bf16.gmra.mrb[0].mxu0 %v502
      %v582 = vpop.f32.mrb[0].mxu0
      %v583 = vadd.f32 0.0, %v582
      %v584 = vpop.f32.mrb[0].mxu0
      %v585 = vpop.f32.mrb[0].mxu0
      %v586 = vadd.f32 0.0, %v585
      %v587 = vpop.f32.mrb[0].mxu0
      %588 = vmatprep.mubr.bf16.mxu0 0
      %589 = vmatmul.mubr.bf16.gmra.mrb[0].mxu0 %v505
      %v590 = vpop.f32.mrb[0].mxu0
      %v591 = vadd.f32 0.0, %v590
      %v592 = vpop.f32.mrb[0].mxu0
      %v593 = vpop.f32.mrb[0].mxu0
      %v594 = vadd.f32 0.0, %v593
      %v595 = vpop.f32.mrb[0].mxu0
      %596 = vmatprep.mubr.bf16.mxu0 0
      %597 = vmatmul.mubr.bf16.gmra.mrb[0].mxu0 %v508
      %v598 = vpop.f32.mrb[0].mxu0
      %v599 = vadd.f32 0.0, %v598
      %v600 = vpop.f32.mrb[0].mxu0
      %v601 = vpop.f32.mrb[0].mxu0
      %v602 = vadd.f32 0.0, %v601
      %v603 = vpop.f32.mrb[0].mxu0
      %604 = vmatprep.mubr.bf16.mxu0 0
      %605 = vmatmul.mubr.bf16.gmra.mrb[0].mxu0 %v511
      %v606 = vpop.f32.mrb[0].mxu0
      %v607 = vadd.f32 0.0, %v606
      %v608 = vpop.f32.mrb[0].mxu0
      %v609 = vpop.f32.mrb[0].mxu0
      %v610 = vadd.f32 0.0, %v609
      %v611 = vpop.f32.mrb[0].mxu0
      %612 = vdwg.mxu0
      %v613 = vpack.c.bf16 %v554, %v551
      %v614 = vpack.c.bf16 %v562, %v559
      %v615 = vpack.c.bf16 %v570, %v567
      %v616 = vpack.c.bf16 %v578, %v575
      %v617 = vpack.c.bf16 %v586, %v583
      %v618 = vpack.c.bf16 %v594, %v591
      %v619 = vpack.c.bf16 %v602, %v599
      %v620 = vpack.c.bf16 %v610, %v607
      %v623 = vunpack.c.l.b16 %v423
      %v624 = vunpack.c.l.b16 %v424
      %v625 = vpack.c.b16 %v624, %v623
      %v627 = vsel %vm488, %v625, 0
      %629 = vmatprep.subr.bf16.mxu0 0
      %630 = vmatpush1.bf16.msra.mxu0 %v613
      %631 = vmatprep.subr.bf16.mxu0 0
      %632 = vmatpush1.bf16.msra.mxu0 0
      %633 = vmatprep.subr.bf16.mxu0 0
      %634 = vmatpush1.bf16.msra.mxu0 0
      %635 = vmatprep.subr.bf16.mxu0 0
      %636 = vmatpush1.bf16.msra.mxu0 0
      %637 = vmatprep.subr.bf16.mxu0 0
      %638 = vmatpush1.bf16.msra.mxu0 0
      %639 = vmatprep.subr.bf16.mxu0 0
      %640 = vmatpush1.bf16.msra.mxu0 0
      %641 = vmatprep.subr.bf16.mxu0 0
      %642 = vmatpush1.bf16.msra.mxu0 0
      %643 = vmatprep.subr.bf16.mxu0 0
      %644 = vmatpush1.bf16.msra.mxu0 0
      %645 = vmatprep.subr.bf16.mxu0 0
      %646 = vmatpush1.bf16.msra.mxu0 0
      %647 = vmatprep.subr.bf16.mxu0 0
      %648 = vmatpush1.bf16.msra.mxu0 0
      %649 = vmatprep.subr.bf16.mxu0 0
      %650 = vmatpush1.bf16.msra.mxu0 0
      %651 = vmatprep.subr.bf16.mxu0 0
      %652 = vmatpush1.bf16.msra.mxu0 0
      %653 = vmatprep.subr.bf16.mxu0 0
      %654 = vmatpush1.bf16.msra.mxu0 0
      %655 = vmatprep.subr.bf16.mxu0 0
      %656 = vmatpush1.bf16.msra.mxu0 0
      %657 = vmatprep.subr.bf16.mxu0 0
      %658 = vmatpush1.bf16.msra.mxu0 0
      %659 = vmatprep.subr.bf16.mxu0 0
      %660 = vmatpush1.bf16.msra.mxu0 0
      %661 = vmatprep.mubr.bf16.mxu0 0
      %662 = vmatmul.mubr.bf16.gmra.mrb[0].mxu0 %v627
      %v663 = vpop.f32.mrb[0].mxu0
      %v664 = vadd.f32 0.0, %v663
      %v665 = vpop.f32.mrb[0].mxu0
      %v666 = vpop.f32.mrb[0].mxu0
      %v667 = vadd.f32 0.0, %v666
      %v668 = vpop.f32.mrb[0].mxu0
      %669 = vdwg.mxu0
      %v670 = vpack.c.bf16 %v667, %v664
      %v672 = vunpack.c.l.b16 %v670
      %v673 = vunpack.c.h.b16 %v670
      %v674 = vpack.c.b16 %v672, %v672
      %v675 = vpack.c.b16 %v673, %v673
      %vm678 = vcmask 125952
      %679 = vst.msk [vmem:[%s398] sm:$0xf] %vm678, %v674
      %680 = vst.msk [vmem:[%s398 + $0x4] sm:$0xf] %vm678, %v675
      %681 = vmatprep.subr.bf16.mxu0 0
      %682 = vmatpush1.bf16.msra.mxu0 %v614
      %683 = vmatprep.subr.bf16.mxu0 0
      %684 = vmatpush1.bf16.msra.mxu0 0
      %685 = vmatprep.subr.bf16.mxu0 0
      %686 = vmatpush1.bf16.msra.mxu0 0
      %687 = vmatprep.subr.bf16.mxu0 0
      %688 = vmatpush1.bf16.msra.mxu0 0
      %689 = vmatprep.subr.bf16.mxu0 0
      %690 = vmatpush1.bf16.msra.mxu0 0
      %691 = vmatprep.subr.bf16.mxu0 0
      %692 = vmatpush1.bf16.msra.mxu0 0
      %693 = vmatprep.subr.bf16.mxu0 0
      %694 = vmatpush1.bf16.msra.mxu0 0
      %695 = vmatprep.subr.bf16.mxu0 0
      %696 = vmatpush1.bf16.msra.mxu0 0
      %697 = vmatprep.subr.bf16.mxu0 0
      %698 = vmatpush1.bf16.msra.mxu0 0
      %699 = vmatprep.subr.bf16.mxu0 0
      %700 = vmatpush1.bf16.msra.mxu0 0
      %701 = vmatprep.subr.bf16.mxu0 0
      %702 = vmatpush1.bf16.msra.mxu0 0
      %703 = vmatprep.subr.bf16.mxu0 0
      %704 = vmatpush1.bf16.msra.mxu0 0
      %705 = vmatprep.subr.bf16.mxu0 0
      %706 = vmatpush1.bf16.msra.mxu0 0
      %707 = vmatprep.subr.bf16.mxu0 0
      %708 = vmatpush1.bf16.msra.mxu0 0
      %709 = vmatprep.subr.bf16.mxu0 0
      %710 = vmatpush1.bf16.msra.mxu0 0
      %711 = vmatprep.subr.bf16.mxu0 0
      %712 = vmatpush1.bf16.msra.mxu0 0
      %713 = vmatprep.mubr.bf16.mxu0 0
      %714 = vmatmul.mubr.bf16.gmra.mrb[0].mxu0 %v627
      %v715 = vpop.f32.mrb[0].mxu0
      %v716 = vadd.f32 0.0, %v715
      %v717 = vpop.f32.mrb[0].mxu0
      %v718 = vpop.f32.mrb[0].mxu0
      %v719 = vadd.f32 0.0, %v718
      %v720 = vpop.f32.mrb[0].mxu0
      %721 = vdwg.mxu0
      %v722 = vpack.c.bf16 %v719, %v716
      %v724 = vunpack.c.l.b16 %v722
      %v725 = vunpack.c.h.b16 %v722
      %v726 = vpack.c.b16 %v724, %v724
      %v727 = vpack.c.b16 %v725, %v725
      %s730 = scalar_lea.vmem %s398, 8
      %731 = vst.msk [vmem:[%s730] sm:$0xf] %vm678, %v726
      %732 = vst.msk [vmem:[%s730 + $0x4] sm:$0xf] %vm678, %v727
      %733 = vmatprep.subr.bf16.mxu0 0
      %734 = vmatpush1.bf16.msra.mxu0 %v615
      %735 = vmatprep.subr.bf16.mxu0 0
      %736 = vmatpush1.bf16.msra.mxu0 0
      %737 = vmatprep.subr.bf16.mxu0 0
      %738 = vmatpush1.bf16.msra.mxu0 0
      %739 = vmatprep.subr.bf16.mxu0 0
      %740 = vmatpush1.bf16.msra.mxu0 0
      %741 = vmatprep.subr.bf16.mxu0 0
      %742 = vmatpush1.bf16.msra.mxu0 0
      %743 = vmatprep.subr.bf16.mxu0 0
      %744 = vmatpush1.bf16.msra.mxu0 0
      %745 = vmatprep.subr.bf16.mxu0 0
      %746 = vmatpush1.bf16.msra.mxu0 0
      %747 = vmatprep.subr.bf16.mxu0 0
      %748 = vmatpush1.bf16.msra.mxu0 0
      %749 = vmatprep.subr.bf16.mxu0 0
      %750 = vmatpush1.bf16.msra.mxu0 0
      %751 = vmatprep.subr.bf16.mxu0 0
      %752 = vmatpush1.bf16.msra.mxu0 0
      %753 = vmatprep.subr.bf16.mxu0 0
      %754 = vmatpush1.bf16.msra.mxu0 0
      %755 = vmatprep.subr.bf16.mxu0 0
      %756 = vmatpush1.bf16.msra.mxu0 0
      %757 = vmatprep.subr.bf16.mxu0 0
      %758 = vmatpush1.bf16.msra.mxu0 0
      %759 = vmatprep.subr.bf16.mxu0 0
      %760 = vmatpush1.bf16.msra.mxu0 0
      %761 = vmatprep.subr.bf16.mxu0 0
      %762 = vmatpush1.bf16.msra.mxu0 0
      %763 = vmatprep.subr.bf16.mxu0 0
      %764 = vmatpush1.bf16.msra.mxu0 0
      %765 = vmatprep.mubr.bf16.mxu0 0
      %766 = vmatmul.mubr.bf16.gmra.mrb[0].mxu0 %v627
      %v767 = vpop.f32.mrb[0].mxu0
      %v768 = vadd.f32 0.0, %v767
      %v769 = vpop.f32.mrb[0].mxu0
      %v770 = vpop.f32.mrb[0].mxu0
      %v771 = vadd.f32 0.0, %v770
      %v772 = vpop.f32.mrb[0].mxu0
      %773 = vdwg.mxu0
      %v774 = vpack.c.bf16 %v771, %v768
      %v776 = vunpack.c.l.b16 %v774
      %v777 = vunpack.c.h.b16 %v774
      %v778 = vpack.c.b16 %v776, %v776
      %v779 = vpack.c.b16 %v777, %v777
      %s782 = scalar_lea.vmem %s398, 16
      %783 = vst.msk [vmem:[%s782] sm:$0xf] %vm678, %v778
      %784 = vst.msk [vmem:[%s782 + $0x4] sm:$0xf] %vm678, %v779
      %785 = vmatprep.subr.bf16.mxu0 0
      %786 = vmatpush1.bf16.msra.mxu0 %v616
      %787 = vmatprep.subr.bf16.mxu0 0
      %788 = vmatpush1.bf16.msra.mxu0 0
      %789 = vmatprep.subr.bf16.mxu0 0
      %790 = vmatpush1.bf16.msra.mxu0 0
      %791 = vmatprep.subr.bf16.mxu0 0
      %792 = vmatpush1.bf16.msra.mxu0 0
      %793 = vmatprep.subr.bf16.mxu0 0
      %794 = vmatpush1.bf16.msra.mxu0 0
      %795 = vmatprep.subr.bf16.mxu0 0
      %796 = vmatpush1.bf16.msra.mxu0 0
      %797 = vmatprep.subr.bf16.mxu0 0
      %798 = vmatpush1.bf16.msra.mxu0 0
      %799 = vmatprep.subr.bf16.mxu0 0
      %800 = vmatpush1.bf16.msra.mxu0 0
      %801 = vmatprep.subr.bf16.mxu0 0
      %802 = vmatpush1.bf16.msra.mxu0 0
      %803 = vmatprep.subr.bf16.mxu0 0
      %804 = vmatpush1.bf16.msra.mxu0 0
      %805 = vmatprep.subr.bf16.mxu0 0
      %806 = vmatpush1.bf16.msra.mxu0 0
      %807 = vmatprep.subr.bf16.mxu0 0
      %808 = vmatpush1.bf16.msra.mxu0 0
      %809 = vmatprep.subr.bf16.mxu0 0
      %810 = vmatpush1.bf16.msra.mxu0 0
      %811 = vmatprep.subr.bf16.mxu0 0
      %812 = vmatpush1.bf16.msra.mxu0 0
      %813 = vmatprep.subr.bf16.mxu0 0
      %814 = vmatpush1.bf16.msra.mxu0 0
      %815 = vmatprep.subr.bf16.mxu0 0
      %816 = vmatpush1.bf16.msra.mxu0 0
      %817 = vmatprep.mubr.bf16.mxu0 0
      %818 = vmatmul.mubr.bf16.gmra.mrb[0].mxu0 %v627
      %v819 = vpop.f32.mrb[0].mxu0
      %v820 = vadd.f32 0.0, %v819
      %v821 = vpop.f32.mrb[0].mxu0
      %v822 = vpop.f32.mrb[0].mxu0
      %v823 = vadd.f32 0.0, %v822
      %v824 = vpop.f32.mrb[0].mxu0
      %825 = vdwg.mxu0
      %v826 = vpack.c.bf16 %v823, %v820
      %v828 = vunpack.c.l.b16 %v826
      %v829 = vunpack.c.h.b16 %v826
      %v830 = vpack.c.b16 %v828, %v828
      %v831 = vpack.c.b16 %v829, %v829
      %s834 = scalar_lea.vmem %s398, 24
      %835 = vst.msk [vmem:[%s834] sm:$0xf] %vm678, %v830
      %836 = vst.msk [vmem:[%s834 + $0x4] sm:$0xf] %vm678, %v831
      %837 = vmatprep.subr.bf16.mxu0 0
      %838 = vmatpush1.bf16.msra.mxu0 %v617
      %839 = vmatprep.subr.bf16.mxu0 0
      %840 = vmatpush1.bf16.msra.mxu0 0
      %841 = vmatprep.subr.bf16.mxu0 0
      %842 = vmatpush1.bf16.msra.mxu0 0
      %843 = vmatprep.subr.bf16.mxu0 0
      %844 = vmatpush1.bf16.msra.mxu0 0
      %845 = vmatprep.subr.bf16.mxu0 0
      %846 = vmatpush1.bf16.msra.mxu0 0
      %847 = vmatprep.subr.bf16.mxu0 0
      %848 = vmatpush1.bf16.msra.mxu0 0
      %849 = vmatprep.subr.bf16.mxu0 0
      %850 = vmatpush1.bf16.msra.mxu0 0
      %851 = vmatprep.subr.bf16.mxu0 0
      %852 = vmatpush1.bf16.msra.mxu0 0
      %853 = vmatprep.subr.bf16.mxu0 0
      %854 = vmatpush1.bf16.msra.mxu0 0
      %855 = vmatprep.subr.bf16.mxu0 0
      %856 = vmatpush1.bf16.msra.mxu0 0
      %857 = vmatprep.subr.bf16.mxu0 0
      %858 = vmatpush1.bf16.msra.mxu0 0
      %859 = vmatprep.subr.bf16.mxu0 0
      %860 = vmatpush1.bf16.msra.mxu0 0
      %861 = vmatprep.subr.bf16.mxu0 0
      %862 = vmatpush1.bf16.msra.mxu0 0
      %863 = vmatprep.subr.bf16.mxu0 0
      %864 = vmatpush1.bf16.msra.mxu0 0
      %865 = vmatprep.subr.bf16.mxu0 0
      %866 = vmatpush1.bf16.msra.mxu0 0
      %867 = vmatprep.subr.bf16.mxu0 0
      %868 = vmatpush1.bf16.msra.mxu0 0
      %869 = vmatprep.mubr.bf16.mxu0 0
      %870 = vmatmul.mubr.bf16.gmra.mrb[0].mxu0 %v627
      %v871 = vpop.f32.mrb[0].mxu0
      %v872 = vadd.f32 0.0, %v871
      %v873 = vpop.f32.mrb[0].mxu0
      %v874 = vpop.f32.mrb[0].mxu0
      %v875 = vadd.f32 0.0, %v874
      %v876 = vpop.f32.mrb[0].mxu0
      %877 = vdwg.mxu0
      %v878 = vpack.c.bf16 %v875, %v872
      %v880 = vunpack.c.l.b16 %v878
      %v881 = vunpack.c.h.b16 %v878
      %v882 = vpack.c.b16 %v880, %v880
      %v883 = vpack.c.b16 %v881, %v881
      %s886 = scalar_lea.vmem %s398, 32
      %887 = vst.msk [vmem:[%s886] sm:$0xf] %vm678, %v882
      %888 = vst.msk [vmem:[%s886 + $0x4] sm:$0xf] %vm678, %v883
      %889 = vmatprep.subr.bf16.mxu0 0
      %890 = vmatpush1.bf16.msra.mxu0 %v618
      %891 = vmatprep.subr.bf16.mxu0 0
      %892 = vmatpush1.bf16.msra.mxu0 0
      %893 = vmatprep.subr.bf16.mxu0 0
      %894 = vmatpush1.bf16.msra.mxu0 0
      %895 = vmatprep.subr.bf16.mxu0 0
      %896 = vmatpush1.bf16.msra.mxu0 0
      %897 = vmatprep.subr.bf16.mxu0 0
      %898 = vmatpush1.bf16.msra.mxu0 0
      %899 = vmatprep.subr.bf16.mxu0 0
      %900 = vmatpush1.bf16.msra.mxu0 0
      %901 = vmatprep.subr.bf16.mxu0 0
      %902 = vmatpush1.bf16.msra.mxu0 0
      %903 = vmatprep.subr.bf16.mxu0 0
      %904 = vmatpush1.bf16.msra.mxu0 0
      %905 = vmatprep.subr.bf16.mxu0 0
      %906 = vmatpush1.bf16.msra.mxu0 0
      %907 = vmatprep.subr.bf16.mxu0 0
      %908 = vmatpush1.bf16.msra.mxu0 0
      %909 = vmatprep.subr.bf16.mxu0 0
      %910 = vmatpush1.bf16.msra.mxu0 0
      %911 = vmatprep.subr.bf16.mxu0 0
      %912 = vmatpush1.bf16.msra.mxu0 0
      %913 = vmatprep.subr.bf16.mxu0 0
      %914 = vmatpush1.bf16.msra.mxu0 0
      %915 = vmatprep.subr.bf16.mxu0 0
      %916 = vmatpush1.bf16.msra.mxu0 0
      %917 = vmatprep.subr.bf16.mxu0 0
      %918 = vmatpush1.bf16.msra.mxu0 0
      %919 = vmatprep.subr.bf16.mxu0 0
      %920 = vmatpush1.bf16.msra.mxu0 0
      %921 = vmatprep.mubr.bf16.mxu0 0
      %922 = vmatmul.mubr.bf16.gmra.mrb[0].mxu0 %v627
      %v923 = vpop.f32.mrb[0].mxu0
      %v924 = vadd.f32 0.0, %v923
      %v925 = vpop.f32.mrb[0].mxu0
      %v926 = vpop.f32.mrb[0].mxu0
      %v927 = vadd.f32 0.0, %v926
      %v928 = vpop.f32.mrb[0].mxu0
      %929 = vdwg.mxu0
      %v930 = vpack.c.bf16 %v927, %v924
      %v932 = vunpack.c.l.b16 %v930
      %v933 = vunpack.c.h.b16 %v930
      %v934 = vpack.c.b16 %v932, %v932
      %v935 = vpack.c.b16 %v933, %v933
      %s938 = scalar_lea.vmem %s398, 40
      %939 = vst.msk [vmem:[%s938] sm:$0xf] %vm678, %v934
      %940 = vst.msk [vmem:[%s938 + $0x4] sm:$0xf] %vm678, %v935
      %941 = vmatprep.subr.bf16.mxu0 0
      %942 = vmatpush1.bf16.msra.mxu0 %v619
      %943 = vmatprep.subr.bf16.mxu0 0
      %944 = vmatpush1.bf16.msra.mxu0 0
      %945 = vmatprep.subr.bf16.mxu0 0
      %946 = vmatpush1.bf16.msra.mxu0 0
      %947 = vmatprep.subr.bf16.mxu0 0
      %948 = vmatpush1.bf16.msra.mxu0 0
      %949 = vmatprep.subr.bf16.mxu0 0
      %950 = vmatpush1.bf16.msra.mxu0 0
      %951 = vmatprep.subr.bf16.mxu0 0
      %952 = vmatpush1.bf16.msra.mxu0 0
      %953 = vmatprep.subr.bf16.mxu0 0
      %954 = vmatpush1.bf16.msra.mxu0 0
      %955 = vmatprep.subr.bf16.mxu0 0
      %956 = vmatpush1.bf16.msra.mxu0 0
      %957 = vmatprep.subr.bf16.mxu0 0
      %958 = vmatpush1.bf16.msra.mxu0 0
      %959 = vmatprep.subr.bf16.mxu0 0
      %960 = vmatpush1.bf16.msra.mxu0 0
      %961 = vmatprep.subr.bf16.mxu0 0
      %962 = vmatpush1.bf16.msra.mxu0 0
      %963 = vmatprep.subr.bf16.mxu0 0
      %964 = vmatpush1.bf16.msra.mxu0 0
      %965 = vmatprep.subr.bf16.mxu0 0
      %966 = vmatpush1.bf16.msra.mxu0 0
      %967 = vmatprep.subr.bf16.mxu0 0
      %968 = vmatpush1.bf16.msra.mxu0 0
      %969 = vmatprep.subr.bf16.mxu0 0
      %970 = vmatpush1.bf16.msra.mxu0 0
      %971 = vmatprep.subr.bf16.mxu0 0
      %972 = vmatpush1.bf16.msra.mxu0 0
      %973 = vmatprep.mubr.bf16.mxu0 0
      %974 = vmatmul.mubr.bf16.gmra.mrb[0].mxu0 %v627
      %v975 = vpop.f32.mrb[0].mxu0
      %v976 = vadd.f32 0.0, %v975
      %v977 = vpop.f32.mrb[0].mxu0
      %v978 = vpop.f32.mrb[0].mxu0
      %v979 = vadd.f32 0.0, %v978
      %v980 = vpop.f32.mrb[0].mxu0
      %981 = vdwg.mxu0
      %v982 = vpack.c.bf16 %v979, %v976
      %v984 = vunpack.c.l.b16 %v982
      %v985 = vunpack.c.h.b16 %v982
      %v986 = vpack.c.b16 %v984, %v984
      %v987 = vpack.c.b16 %v985, %v985
      %s990 = scalar_lea.vmem %s398, 48
      %991 = vst.msk [vmem:[%s990] sm:$0xf] %vm678, %v986
      %992 = vst.msk [vmem:[%s990 + $0x4] sm:$0xf] %vm678, %v987
      %993 = vmatprep.subr.bf16.mxu0 0
      %994 = vmatpush1.bf16.msra.mxu0 %v620
      %995 = vmatprep.subr.bf16.mxu0 0
      %996 = vmatpush1.bf16.msra.mxu0 0
      %997 = vmatprep.subr.bf16.mxu0 0
      %998 = vmatpush1.bf16.msra.mxu0 0
      %999 = vmatprep.subr.bf16.mxu0 0
      %1000 = vmatpush1.bf16.msra.mxu0 0
      %1001 = vmatprep.subr.bf16.mxu0 0
      %1002 = vmatpush1.bf16.msra.mxu0 0
      %1003 = vmatprep.subr.bf16.mxu0 0
      %1004 = vmatpush1.bf16.msra.mxu0 0
      %1005 = vmatprep.subr.bf16.mxu0 0
      %1006 = vmatpush1.bf16.msra.mxu0 0
      %1007 = vmatprep.subr.bf16.mxu0 0
      %1008 = vmatpush1.bf16.msra.mxu0 0
      %1009 = vmatprep.subr.bf16.mxu0 0
      %1010 = vmatpush1.bf16.msra.mxu0 0
      %1011 = vmatprep.subr.bf16.mxu0 0
      %1012 = vmatpush1.bf16.msra.mxu0 0
      %1013 = vmatprep.subr.bf16.mxu0 0
      %1014 = vmatpush1.bf16.msra.mxu0 0
      %1015 = vmatprep.subr.bf16.mxu0 0
      %1016 = vmatpush1.bf16.msra.mxu0 0
      %1017 = vmatprep.subr.bf16.mxu0 0
      %1018 = vmatpush1.bf16.msra.mxu0 0
      %1019 = vmatprep.subr.bf16.mxu0 0
      %1020 = vmatpush1.bf16.msra.mxu0 0
      %1021 = vmatprep.subr.bf16.mxu0 0
      %1022 = vmatpush1.bf16.msra.mxu0 0
      %1023 = vmatprep.subr.bf16.mxu0 0
      %1024 = vmatpush1.bf16.msra.mxu0 0
      %1025 = vmatprep.mubr.bf16.mxu0 0
      %1026 = vmatmul.mubr.bf16.gmra.mrb[0].mxu0 %v627
      %v1027 = vpop.f32.mrb[0].mxu0
      %v1028 = vadd.f32 0.0, %v1027
      %v1029 = vpop.f32.mrb[0].mxu0
      %v1030 = vpop.f32.mrb[0].mxu0
      %v1031 = vadd.f32 0.0, %v1030
      %v1032 = vpop.f32.mrb[0].mxu0
      %1033 = vdwg.mxu0
      %v1034 = vpack.c.bf16 %v1031, %v1028
      %v1036 = vunpack.c.l.b16 %v1034
      %v1037 = vunpack.c.h.b16 %v1034
      %v1038 = vpack.c.b16 %v1036, %v1036
      %v1039 = vpack.c.b16 %v1037, %v1037
      %s1042 = scalar_lea.vmem %s398, 56
      %1043 = vst.msk [vmem:[%s1042] sm:$0xf] %vm678, %v1038
      %1044 = vst.msk [vmem:[%s1042 + $0x4] sm:$0xf] %vm678, %v1039
      %v1045 = vld [vmem:[%s398] sm:$0xf]
      %v1046 = vld [vmem:[%s398 + $0x4] sm:$0xf]
      %v1047 = vld [vmem:[%s398 + $0x8] sm:$0xf]
      %v1048 = vld [vmem:[%s398 + $0xc] sm:$0xf]
      %v1049 = vld [vmem:[%s398 + $0x10] sm:$0xf]
      %v1050 = vld [vmem:[%s398 + $0x14] sm:$0xf]
      %v1051 = vld [vmem:[%s398 + $0x18] sm:$0xf]
      %v1052 = vld [vmem:[%s398 + $0x1c] sm:$0xf]
      %v1053 = vld [vmem:[%s398 + $0x20] sm:$0xf]
      %v1054 = vld [vmem:[%s398 + $0x24] sm:$0xf]
      %v1055 = vld [vmem:[%s398 + $0x28] sm:$0xf]
      %v1056 = vld [vmem:[%s398 + $0x2c] sm:$0xf]
      %v1057 = vld [vmem:[%s398 + $0x30] sm:$0xf]
      %v1058 = vld [vmem:[%s398 + $0x34] sm:$0xf]
      %v1059 = vld [vmem:[%s398 + $0x38] sm:$0xf]
      %v1060 = vld [vmem:[%s398 + $0x3c] sm:$0xf]
      %v1061 = vunpack.c.l.bf16 %v1045
      %v1062 = vunpack.c.l.bf16 %v1046
      %v1063 = vunpack.c.l.bf16 %v1047
      %v1064 = vunpack.c.l.bf16 %v1048
      %v1065 = vunpack.c.l.bf16 %v1049
      %v1066 = vunpack.c.l.bf16 %v1050
      %v1067 = vunpack.c.l.bf16 %v1051
      %v1068 = vunpack.c.l.bf16 %v1052
      %v1069 = vunpack.c.l.bf16 %v1053
      %v1070 = vunpack.c.l.bf16 %v1054
      %v1071 = vunpack.c.l.bf16 %v1055
      %v1072 = vunpack.c.l.bf16 %v1056
      %v1073 = vunpack.c.l.bf16 %v1057
      %v1074 = vunpack.c.l.bf16 %v1058
      %v1075 = vunpack.c.l.bf16 %v1059
      %v1076 = vunpack.c.l.bf16 %v1060
      %v1077 = vsel %vm488, %v1061, 0.0
      %1078 = vadd.xlane.f32.xlu0 %v1077
      %v1079 = vpop.xlane.xlu0 %1078
      %v1080 = vsel %vm488, %v1062, 0.0
      %1081 = vadd.xlane.f32.xlu0 %v1080
      %v1082 = vpop.xlane.xlu0 %1081
      %v1083 = vsel %vm488, %v1063, 0.0
      %1084 = vadd.xlane.f32.xlu0 %v1083
      %v1085 = vpop.xlane.xlu0 %1084
      %v1086 = vsel %vm488, %v1064, 0.0
      %1087 = vadd.xlane.f32.xlu0 %v1086
      %v1088 = vpop.xlane.xlu0 %1087
      %v1089 = vsel %vm488, %v1065, 0.0
      %1090 = vadd.xlane.f32.xlu0 %v1089
      %v1091 = vpop.xlane.xlu0 %1090
      %v1092 = vsel %vm488, %v1066, 0.0
      %1093 = vadd.xlane.f32.xlu0 %v1092
      %v1094 = vpop.xlane.xlu0 %1093
      %v1095 = vsel %vm488, %v1067, 0.0
      %1096 = vadd.xlane.f32.xlu0 %v1095
      %v1097 = vpop.xlane.xlu0 %1096
      %v1098 = vsel %vm488, %v1068, 0.0
      %1099 = vadd.xlane.f32.xlu0 %v1098
      %v1100 = vpop.xlane.xlu0 %1099
      %v1101 = vsel %vm488, %v1069, 0.0
      %1102 = vadd.xlane.f32.xlu0 %v1101
      %v1103 = vpop.xlane.xlu0 %1102
      %v1104 = vsel %vm488, %v1070, 0.0
      %1105 = vadd.xlane.f32.xlu0 %v1104
      %v1106 = vpop.xlane.xlu0 %1105
      %v1107 = vsel %vm488, %v1071, 0.0
      %1108 = vadd.xlane.f32.xlu0 %v1107
      %v1109 = vpop.xlane.xlu0 %1108
      %v1110 = vsel %vm488, %v1072, 0.0
      %1111 = vadd.xlane.f32.xlu0 %v1110
      %v1112 = vpop.xlane.xlu0 %1111
      %v1113 = vsel %vm488, %v1073, 0.0
      %1114 = vadd.xlane.f32.xlu0 %v1113
      %v1115 = vpop.xlane.xlu0 %1114
      %v1116 = vsel %vm488, %v1074, 0.0
      %1117 = vadd.xlane.f32.xlu0 %v1116
      %v1118 = vpop.xlane.xlu0 %1117
      %v1119 = vsel %vm488, %v1075, 0.0
      %1120 = vadd.xlane.f32.xlu0 %v1119
      %v1121 = vpop.xlane.xlu0 %1120
      %v1122 = vsel %vm488, %v1076, 0.0
      %1123 = vadd.xlane.f32.xlu0 %v1122
      %v1124 = vpop.xlane.xlu0 %1123
      %v1141 = vlaneseq
      %v1142 = vand.u32 %v1141, 127
      %v1143 = vlaneseq
      %v1144 = vshrl.u32 %v1143, 7
      %v1145 = vsub.s32 %v1142, %v1144
      %v1146 = vrot.slane %v1079, %v1145
      %v1147 = vadd.s32 %v1142, 4294967288
      %v1148 = vlaneseq
      %v1149 = vshrl.u32 %v1148, 7
      %v1150 = vsub.s32 %v1147, %v1149
      %v1151 = vrot.slane %v1082, %v1150
      %vm1152 = vcmask 130112
      %v1153 = vsel %vm1152, %v1151, %v1146
      %v1154 = vlaneseq
      %v1155 = vshrl.u32 %v1154, 7
      %v1156 = vsub.s32 %v1142, %v1155
      %v1157 = vrot.slane %v1085, %v1156
      %v1158 = vlaneseq
      %v1159 = vshrl.u32 %v1158, 7
      %v1160 = vsub.s32 %v1147, %v1159
      %v1161 = vrot.slane %v1088, %v1160
      %v1162 = vsel %vm1152, %v1161, %v1157
      %v1163 = vlaneseq
      %v1164 = vshrl.u32 %v1163, 7
      %v1165 = vsub.s32 %v1142, %v1164
      %v1166 = vrot.slane %v1091, %v1165
      %v1167 = vlaneseq
      %v1168 = vshrl.u32 %v1167, 7
      %v1169 = vsub.s32 %v1147, %v1168
      %v1170 = vrot.slane %v1094, %v1169
      %v1171 = vsel %vm1152, %v1170, %v1166
      %v1172 = vlaneseq
      %v1173 = vshrl.u32 %v1172, 7
      %v1174 = vsub.s32 %v1142, %v1173
      %v1175 = vrot.slane %v1097, %v1174
      %v1176 = vlaneseq
      %v1177 = vshrl.u32 %v1176, 7
      %v1178 = vsub.s32 %v1147, %v1177
      %v1179 = vrot.slane %v1100, %v1178
      %v1180 = vsel %vm1152, %v1179, %v1175
      %v1181 = vlaneseq
      %v1182 = vshrl.u32 %v1181, 7
      %v1183 = vsub.s32 %v1142, %v1182
      %v1184 = vrot.slane %v1103, %v1183
      %v1185 = vlaneseq
      %v1186 = vshrl.u32 %v1185, 7
      %v1187 = vsub.s32 %v1147, %v1186
      %v1188 = vrot.slane %v1106, %v1187
      %v1189 = vsel %vm1152, %v1188, %v1184
      %v1190 = vlaneseq
      %v1191 = vshrl.u32 %v1190, 7
      %v1192 = vsub.s32 %v1142, %v1191
      %v1193 = vrot.slane %v1109, %v1192
      %v1194 = vlaneseq
      %v1195 = vshrl.u32 %v1194, 7
      %v1196 = vsub.s32 %v1147, %v1195
      %v1197 = vrot.slane %v1112, %v1196
      %v1198 = vsel %vm1152, %v1197, %v1193
      %v1199 = vlaneseq
      %v1200 = vshrl.u32 %v1199, 7
      %v1201 = vsub.s32 %v1142, %v1200
      %v1202 = vrot.slane %v1115, %v1201
      %v1203 = vlaneseq
      %v1204 = vshrl.u32 %v1203, 7
      %v1205 = vsub.s32 %v1147, %v1204
      %v1206 = vrot.slane %v1118, %v1205
      %v1207 = vsel %vm1152, %v1206, %v1202
      %v1208 = vlaneseq
      %v1209 = vshrl.u32 %v1208, 7
      %v1210 = vsub.s32 %v1142, %v1209
      %v1211 = vrot.slane %v1121, %v1210
      %v1212 = vlaneseq
      %v1213 = vshrl.u32 %v1212, 7
      %v1214 = vsub.s32 %v1147, %v1213
      %v1215 = vrot.slane %v1124, %v1214
      %v1216 = vsel %vm1152, %v1215, %v1211
      %vm1217 = vcmask 1041409
      %v1218 = vsel %vm1217, %v1162, %v1153
      %vm1219 = vcmask 1042434
      %v1220 = vsel %vm1219, %v1171, %v1218
      %vm1221 = vcmask 1043459
      %v1222 = vsel %vm1221, %v1180, %v1220
      %vm1223 = vcmask 1044484
      %v1224 = vsel %vm1223, %v1189, %v1222
      %vm1225 = vcmask 1045509
      %v1226 = vsel %vm1225, %v1198, %v1224
      %vm1227 = vcmask 1046534
      %v1228 = vsel %vm1227, %v1207, %v1226
      %vm1229 = vcmask 1047559
      %v1230 = vsel %vm1229, %v1216, %v1228
      %v1232 = vsel %vm488, %v1230, 0.0
      %1233 = vadd.xlane.f32.xlu0 %v1232
      %v1234 = vpop.xlane.xlu0 %1233
      %vm1235 = vcmask 7168
      %1236 = vst.msk [vmem:[%s410] sm:$0xff] %vm1235, %v1234
      %v1237 = vmul.f32 %v1061, %v1061
      %v1238 = vmul.f32 %v1062, %v1062
      %v1239 = vmul.f32 %v1063, %v1063
      %v1240 = vmul.f32 %v1064, %v1064
      %v1241 = vmul.f32 %v1065, %v1065
      %v1242 = vmul.f32 %v1066, %v1066
      %v1243 = vmul.f32 %v1067, %v1067
      %v1244 = vmul.f32 %v1068, %v1068
      %v1245 = vmul.f32 %v1069, %v1069
      %v1246 = vmul.f32 %v1070, %v1070
      %v1247 = vmul.f32 %v1071, %v1071
      %v1248 = vmul.f32 %v1072, %v1072
      %v1249 = vmul.f32 %v1073, %v1073
      %v1250 = vmul.f32 %v1074, %v1074
      %v1251 = vmul.f32 %v1075, %v1075
      %v1252 = vmul.f32 %v1076, %v1076
      %v1253 = vsel %vm488, %v1237, 0.0
      %1254 = vadd.xlane.f32.xlu0 %v1253
      %v1255 = vpop.xlane.xlu0 %1254
      %v1256 = vsel %vm488, %v1238, 0.0
      %1257 = vadd.xlane.f32.xlu0 %v1256
      %v1258 = vpop.xlane.xlu0 %1257
      %v1259 = vsel %vm488, %v1239, 0.0
      %1260 = vadd.xlane.f32.xlu0 %v1259
      %v1261 = vpop.xlane.xlu0 %1260
      %v1262 = vsel %vm488, %v1240, 0.0
      %1263 = vadd.xlane.f32.xlu0 %v1262
      %v1264 = vpop.xlane.xlu0 %1263
      %v1265 = vsel %vm488, %v1241, 0.0
      %1266 = vadd.xlane.f32.xlu0 %v1265
      %v1267 = vpop.xlane.xlu0 %1266
      %v1268 = vsel %vm488, %v1242, 0.0
      %1269 = vadd.xlane.f32.xlu0 %v1268
      %v1270 = vpop.xlane.xlu0 %1269
      %v1271 = vsel %vm488, %v1243, 0.0
      %1272 = vadd.xlane.f32.xlu0 %v1271
      %v1273 = vpop.xlane.xlu0 %1272
      %v1274 = vsel %vm488, %v1244, 0.0
      %1275 = vadd.xlane.f32.xlu0 %v1274
      %v1276 = vpop.xlane.xlu0 %1275
      %v1277 = vsel %vm488, %v1245, 0.0
      %1278 = vadd.xlane.f32.xlu0 %v1277
      %v1279 = vpop.xlane.xlu0 %1278
      %v1280 = vsel %vm488, %v1246, 0.0
      %1281 = vadd.xlane.f32.xlu0 %v1280
      %v1282 = vpop.xlane.xlu0 %1281
      %v1283 = vsel %vm488, %v1247, 0.0
      %1284 = vadd.xlane.f32.xlu0 %v1283
      %v1285 = vpop.xlane.xlu0 %1284
      %v1286 = vsel %vm488, %v1248, 0.0
      %1287 = vadd.xlane.f32.xlu0 %v1286
      %v1288 = vpop.xlane.xlu0 %1287
      %v1289 = vsel %vm488, %v1249, 0.0
      %1290 = vadd.xlane.f32.xlu0 %v1289
      %v1291 = vpop.xlane.xlu0 %1290
      %v1292 = vsel %vm488, %v1250, 0.0
      %1293 = vadd.xlane.f32.xlu0 %v1292
      %v1294 = vpop.xlane.xlu0 %1293
      %v1295 = vsel %vm488, %v1251, 0.0
      %1296 = vadd.xlane.f32.xlu0 %v1295
      %v1297 = vpop.xlane.xlu0 %1296
      %v1298 = vsel %vm488, %v1252, 0.0
      %1299 = vadd.xlane.f32.xlu0 %v1298
      %v1300 = vpop.xlane.xlu0 %1299
      %v1317 = vlaneseq
      %v1318 = vshrl.u32 %v1317, 7
      %v1319 = vsub.s32 %v1142, %v1318
      %v1320 = vrot.slane %v1255, %v1319
      %v1321 = vlaneseq
      %v1322 = vshrl.u32 %v1321, 7
      %v1323 = vsub.s32 %v1147, %v1322
      %v1324 = vrot.slane %v1258, %v1323
      %v1325 = vsel %vm1152, %v1324, %v1320
      %v1326 = vlaneseq
      %v1327 = vshrl.u32 %v1326, 7
      %v1328 = vsub.s32 %v1142, %v1327
      %v1329 = vrot.slane %v1261, %v1328
      %v1330 = vlaneseq
      %v1331 = vshrl.u32 %v1330, 7
      %v1332 = vsub.s32 %v1147, %v1331
      %v1333 = vrot.slane %v1264, %v1332
      %v1334 = vsel %vm1152, %v1333, %v1329
      %v1335 = vlaneseq
      %v1336 = vshrl.u32 %v1335, 7
      %v1337 = vsub.s32 %v1142, %v1336
      %v1338 = vrot.slane %v1267, %v1337
      %v1339 = vlaneseq
      %v1340 = vshrl.u32 %v1339, 7
      %v1341 = vsub.s32 %v1147, %v1340
      %v1342 = vrot.slane %v1270, %v1341
      %v1343 = vsel %vm1152, %v1342, %v1338
      %v1344 = vlaneseq
      %v1345 = vshrl.u32 %v1344, 7
      %v1346 = vsub.s32 %v1142, %v1345
      %v1347 = vrot.slane %v1273, %v1346
      %v1348 = vlaneseq
      %v1349 = vshrl.u32 %v1348, 7
      %v1350 = vsub.s32 %v1147, %v1349
      %v1351 = vrot.slane %v1276, %v1350
      %v1352 = vsel %vm1152, %v1351, %v1347
      %v1353 = vlaneseq
      %v1354 = vshrl.u32 %v1353, 7
      %v1355 = vsub.s32 %v1142, %v1354
      %v1356 = vrot.slane %v1279, %v1355
      %v1357 = vlaneseq
      %v1358 = vshrl.u32 %v1357, 7
      %v1359 = vsub.s32 %v1147, %v1358
      %v1360 = vrot.slane %v1282, %v1359
      %v1361 = vsel %vm1152, %v1360, %v1356
      %v1362 = vlaneseq
      %v1363 = vshrl.u32 %v1362, 7
      %v1364 = vsub.s32 %v1142, %v1363
      %v1365 = vrot.slane %v1285, %v1364
      %v1366 = vlaneseq
      %v1367 = vshrl.u32 %v1366, 7
      %v1368 = vsub.s32 %v1147, %v1367
      %v1369 = vrot.slane %v1288, %v1368
      %v1370 = vsel %vm1152, %v1369, %v1365
      %v1371 = vlaneseq
      %v1372 = vshrl.u32 %v1371, 7
      %v1373 = vsub.s32 %v1142, %v1372
      %v1374 = vrot.slane %v1291, %v1373
      %v1375 = vlaneseq
      %v1376 = vshrl.u32 %v1375, 7
      %v1377 = vsub.s32 %v1147, %v1376
      %v1378 = vrot.slane %v1294, %v1377
      %v1379 = vsel %vm1152, %v1378, %v1374
      %v1380 = vlaneseq
      %v1381 = vshrl.u32 %v1380, 7
      %v1382 = vsub.s32 %v1142, %v1381
      %v1383 = vrot.slane %v1297, %v1382
      %v1384 = vlaneseq
      %v1385 = vshrl.u32 %v1384, 7
      %v1386 = vsub.s32 %v1147, %v1385
      %v1387 = vrot.slane %v1300, %v1386
      %v1388 = vsel %vm1152, %v1387, %v1383
      %v1389 = vsel %vm1217, %v1334, %v1325
      %v1390 = vsel %vm1219, %v1343, %v1389
      %v1391 = vsel %vm1221, %v1352, %v1390
      %v1392 = vsel %vm1223, %v1361, %v1391
      %v1393 = vsel %vm1225, %v1370, %v1392
      %v1394 = vsel %vm1227, %v1379, %v1393
      %v1395 = vsel %vm1229, %v1388, %v1394
      %v1397 = vsel %vm488, %v1395, 0.0
      %1398 = vadd.xlane.f32.xlu0 %v1397
      %v1399 = vpop.xlane.xlu0 %1398
      %1400 = vst.msk [vmem:[%s421] sm:$0xff] %vm1235, %v1399
      %s1401 = smul.u32 8, %s24
      %p1402 = scmp.lt.s32.totalorder %s22, 1
      %s1403 = scalar_select %p1402, %s22, 1
      %p1404 = scmp.lt.s32.totalorder %s23, 1
      %s1405 = scalar_select %p1404, %s23, 1
      %p1406 = scmp.lt.s32.totalorder %s1401, 7
      %s1407 = scalar_select %p1406, %s1401, 7
      %s1408 = smul.addr %s1407, 2
      %s1409 = smul.addr %s1405, 16
      %s1410 = sadd.s32 %s1408, %s1409
      %s1411 = smul.addr %s1403, 32
      %s1412 = sadd.s32 %s1410, %s1411
      %s1413 = smul.addr %s1412, 4
      %s1414 = scalar_lea.vmem %s3, %s1413
      %p1415 = scmp.lt.s32.totalorder %s22, 1
      %s1416 = scalar_select %p1415, %s22, 1
      %p1417 = scmp.lt.s32.totalorder %s23, 1
      %s1418 = scalar_select %p1417, %s23, 1
      %p1419 = scmp.lt.s32.totalorder %s24, 0
      %s1420 = scalar_select %p1419, %s24, 0
      %s1421 = sadd.s32 %s1420, %s1418
      %s1422 = smul.addr %s1416, 2
      %s1423 = sadd.s32 %s1421, %s1422
      %s1424 = smul.addr %s1423, 8
      %s1425 = scalar_lea.vmem %s4, %s1424
      %p1426 = scmp.lt.s32.totalorder %s22, 1
      %s1427 = scalar_select %p1426, %s22, 1
      %p1428 = scmp.lt.s32.totalorder %s23, 1
      %s1429 = scalar_select %p1428, %s23, 1
      %p1430 = scmp.lt.s32.totalorder %s24, 0
      %s1431 = scalar_select %p1430, %s24, 0
      %s1432 = sadd.s32 %s1431, %s1429
      %s1433 = smul.addr %s1427, 2
      %s1434 = sadd.s32 %s1432, %s1433
      %s1435 = smul.addr %s1434, 8
      %s1436 = scalar_lea.vmem %s5, %s1435
      // Predicated region
      $region33: #{fa_block_2d.6} parent=31 // pred_check
        %p1437 = pneg %p144
      $region34: #{fa_block_2d.6} parent=31 // pred_check_branch
        %1439 = sbr.rel (%p1437) target = $region36
      $region35: #{fa_block_2d.6} parent=31 // pred_region
        %s1440 = smul.u32 8, %s24
      $region36: #{fa_block_2d.6} parent=31 // pred_fallthru
        _
      // Predicated region
      $region37: #{fa_block_2d.6} parent=31 // pred_check
        %p1441 = pneg %p174
      $region38: #{fa_block_2d.6} parent=31 // pred_check_branch
        %1443 = sbr.rel (%p1441) target = $region40
      $region39: #{fa_block_2d.6} parent=31 // pred_region
        _
      $region40: #{fa_block_2d.6} parent=31 // pred_fallthru
        _
      // Predicated region
      $region41: #{fa_block_2d.6} parent=31 // pred_check
        %p1444 = pneg %p204
      $region42: #{fa_block_2d.6} parent=31 // pred_check_branch
        %1446 = sbr.rel (%p1444) target = $region44
      $region43: #{fa_block_2d.6} parent=31 // pred_region
        _
      $region44: #{fa_block_2d.6} parent=31 // pred_fallthru
        _
    $region32: #{fa_block_2d.6} parent=5 // pred_fallthru
      _
    %p1447 = scmp.le.s32.totalorder 2, %s12
    // Predicated region
    $region45: #{fa_block_2d.6} parent=5 // pred_check
      %p1448 = pneg %p1447
    $region46: #{fa_block_2d.6} parent=5 // pred_check_branch
      %1450 = sbr.rel (%p1448) target = $region48
    $region47: #{fa_block_2d.6} parent=5 // pred_region
      %s1451 = ssub.s32 %s12, 2
      // Predicated region
      $region49: #{fa_block_2d.6} parent=47 // pred_check
        %p1452 = pneg %p150
      $region50: #{fa_block_2d.6} parent=47 // pred_check_branch
        %1454 = sbr.rel (%p1452) target = $region52
      $region51: #{fa_block_2d.6} parent=47 // pred_region
        %s1455 = smul.u32 8, %s27
        %p1456 = scmp.lt.s32.totalorder %s25, 1
        %s1457 = scalar_select %p1456, %s25, 1
        %p1458 = scmp.lt.s32.totalorder %s26, 1
        %s1459 = scalar_select %p1458, %s26, 1
        %p1460 = scmp.lt.s32.totalorder %s1455, 7
        %s1461 = scalar_select %p1460, %s1455, 7
        %s1462 = smul.addr %s1461, 2
        %s1463 = smul.addr %s1459, 16
        %s1464 = sadd.s32 %s1462, %s1463
        %s1465 = smul.addr %s1457, 32
        %s1466 = sadd.s32 %s1464, %s1465
        %s1467 = smul.addr %s1466, 4
        %s1468 = scalar_lea.vmem %s3, %s1467
      $region52: #{fa_block_2d.6} parent=47 // pred_fallthru
        _
      // Predicated region
      $region53: #{fa_block_2d.6} parent=47 // pred_check
        %p1469 = pneg %p180
      $region54: #{fa_block_2d.6} parent=47 // pred_check_branch
        %1471 = sbr.rel (%p1469) target = $region56
      $region55: #{fa_block_2d.6} parent=47 // pred_region
        %p1472 = scmp.lt.s32.totalorder %s25, 1
        %s1473 = scalar_select %p1472, %s25, 1
        %p1474 = scmp.lt.s32.totalorder %s26, 1
        %s1475 = scalar_select %p1474, %s26, 1
        %p1476 = scmp.lt.s32.totalorder %s27, 0
        %s1477 = scalar_select %p1476, %s27, 0
        %s1478 = sadd.s32 %s1477, %s1475
        %s1479 = smul.addr %s1473, 2
        %s1480 = sadd.s32 %s1478, %s1479
        %s1481 = smul.addr %s1480, 8
        %s1482 = scalar_lea.vmem %s4, %s1481
      $region56: #{fa_block_2d.6} parent=47 // pred_fallthru
        _
      // Predicated region
      $region57: #{fa_block_2d.6} parent=47 // pred_check
        %p1483 = pneg %p210
      $region58: #{fa_block_2d.6} parent=47 // pred_check_branch
        %1485 = sbr.rel (%p1483) target = $region60
      $region59: #{fa_block_2d.6} parent=47 // pred_region
        %p1486 = scmp.lt.s32.totalorder %s25, 1
        %s1487 = scalar_select %p1486, %s25, 1
        %p1488 = scmp.lt.s32.totalorder %s26, 1
        %s1489 = scalar_select %p1488, %s26, 1
        %p1490 = scmp.lt.s32.totalorder %s27, 0
        %s1491 = scalar_select %p1490, %s27, 0
        %s1492 = sadd.s32 %s1491, %s1489
        %s1493 = smul.addr %s1487, 2
        %s1494 = sadd.s32 %s1492, %s1493
        %s1495 = smul.addr %s1494, 8
        %s1496 = scalar_lea.vmem %s5, %s1495
      $region60: #{fa_block_2d.6} parent=47 // pred_fallthru
        _
    $region48: #{fa_block_2d.6} parent=5 // pred_fallthru
      _
  $region6: #{fa_block_2d.6} parent=0 // loop_footer
    %s16 = sadd.s32 1, %s12
  $region7: #{fa_block_2d.6} parent=0 // loop_footer_branch
    %11 = sbr.rel target = $region3
  $region8: #{fa_block_2d.6} parent=0 // loop_exit
    _

// kernel: fa_block_2d.7
$region0: #{fa_block_2d.7}
  #allocation0 [shape = 'u32[]', space=smem, size = 0x4, offset = 0x4, fixed_abs, tag = 'smem constant byte address 0x4 - core index']
  #allocation1 [shape = 'u32[144,128]{1,0:T(1,128)}', space=vmem, size = 0x12000, scoped, tag = 'internal scratch']
  %s0 = inlined_call_operand.vmem [shape: bf16[2,16,256], index: 0, kind: input, shape index: {}]
  %s1 = inlined_call_operand.vmem [shape: f32[2,16,1], index: 1, kind: input, shape index: {}]
  %s2 = inlined_call_operand.vmem [shape: f32[2,16,1], index: 2, kind: input, shape index: {}]
  %s3 = inlined_call_operand.vmem [shape: bf16[8,16], index: 3, kind: input, shape index: {}]
  %s4 = inlined_call_operand.vmem [shape: bf16[8,8], index: 4, kind: input, shape index: {}]
  %s5 = inlined_call_operand.vmem [shape: f32[2,8,256], index: 5, kind: input, shape index: {}]
  %s6 = inlined_call_operand.vmem [shape: f32[2,8,256], index: 6, kind: output, shape index: {}]
  %s7 = sld [smem:[#allocation0]]
  $region57: #{fa_block_2d.7} parent=0
    _
  %s9 = ssub.s32 1, %s7
  %s10 = scalar_select 0, %s9, %s7
  loop: start=0, step=1, limit=4
  $region2: #{fa_block_2d.7} parent=0 // loop_pre_header
    _
  $region3: #{fa_block_2d.7} parent=0 // loop_header
    %s12 = sphi 0, %s16
    %p13 = scmp.ge.s32.totalorder %s12, 4
    %s19 = sphi 0, %s31
    %s20 = sphi 0, %s27
    %s21 = sphi 0, %s19
    %s22 = sphi 0, %s20
    %s23 = sphi 0, %s21
    %s24 = sphi 0, %s22
    %s36 = sphi 0, %s38
    %s39 = sphi 0, %s36
    %s40 = sphi 0, %s39
    %s56 = sphi 0, %s40
    %s62 = sphi 0, %s64
    %s65 = sphi 0, %s62
    %s66 = sphi 0, %s65
    %s82 = sphi 0, %s66
    %s88 = sphi 0, %s90
    %s91 = sphi 0, %s88
    %s92 = sphi 0, %s91
    %s108 = sphi 0, %s92
    %s112 = sphi 0, %s112
    %s114 = sphi 0, %s112
    %s115 = sphi 0, %s114
    %s129 = sphi 0, %s115
    %s133 = sphi 0, %s133
    %s135 = sphi 0, %s133
    %s136 = sphi 0, %s135
    %s150 = sphi 0, %s136
    %s158 = sphi 0, %s160
    %s161 = sphi 0, %s158
    %s162 = sphi 0, %s161
    %s178 = sphi 0, %s162
    %s186 = sphi 0, %s188
    %s189 = sphi 0, %s186
    %s190 = sphi 0, %s189
    %s206 = sphi 0, %s190
  $region4: #{fa_block_2d.7} parent=0 // loop_header_branch
    %15 = sbr.rel (%p13) target = $region8
  $region5: #{fa_block_2d.7} parent=0 // loop_body
    %s17 = ssub.s32 %s12, 1
    %s18 = ssub.s32 %s12, 2
    %s25 = sadd.s32 1, %s20
    %p26 = scmp.ge.s32.totalorder %s25, 1
    %s27 = scalar_select %p26, 0, %s25
    %s28 = sadd.s32 1, %s19
    %s29 = scalar_select %p26, %s28, %s19
    %p30 = scmp.ge.s32.totalorder %s29, 2
    %s31 = scalar_select %p30, 0, %s29
    %s32 = ssub.s32 %s19, %s31
    %s33 = ssub.s32 %s20, %s27
    %s34 = sor.u32 %s32, %s33
    %p35 = scmp.eq.s32.totalorder %s34, 0
    %s37 = sadd.s32 %s36, 1
    %s38 = scalar_select %p35, %s36, %s37
    %p41 = pneg %p35
    %p42 = scmp.eq.s32.totalorder %s12, 1
    %p43 = por %p41, %p42
    %p44 = scmp.ne.s32.totalorder %s36, %s39
    %p45 = scmp.eq.s32.totalorder %s12, 0
    %p46 = por %p44, %p45
    %p47 = scmp.ne.s32.totalorder %s36, %s39
    %p48 = scmp.eq.s32.totalorder %s17, 1
    %p49 = por %p47, %p48
    %p50 = scmp.ne.s32.totalorder %s39, %s40
    %p51 = scmp.eq.s32.totalorder %s17, 0
    %p52 = por %p50, %p51
    %p53 = scmp.ne.s32.totalorder %s39, %s40
    %p54 = scmp.eq.s32.totalorder %s18, 1
    %p55 = por %p53, %p54
    %p57 = scmp.ne.s32.totalorder %s40, %s56
    %p58 = scmp.eq.s32.totalorder %s18, 0
    %p59 = por %p57, %p58
    %s60 = ssub.s32 %s19, %s31
    %p61 = scmp.eq.s32.totalorder %s60, 0
    %s63 = sadd.s32 %s62, 1
    %s64 = scalar_select %p61, %s62, %s63
    %p67 = pneg %p61
    %p68 = scmp.eq.s32.totalorder %s12, 1
    %p69 = por %p67, %p68
    %p70 = scmp.ne.s32.totalorder %s62, %s65
    %p71 = scmp.eq.s32.totalorder %s12, 0
    %p72 = por %p70, %p71
    %p73 = scmp.ne.s32.totalorder %s62, %s65
    %p74 = scmp.eq.s32.totalorder %s17, 1
    %p75 = por %p73, %p74
    %p76 = scmp.ne.s32.totalorder %s65, %s66
    %p77 = scmp.eq.s32.totalorder %s17, 0
    %p78 = por %p76, %p77
    %p79 = scmp.ne.s32.totalorder %s65, %s66
    %p80 = scmp.eq.s32.totalorder %s18, 1
    %p81 = por %p79, %p80
    %p83 = scmp.ne.s32.totalorder %s66, %s82
    %p84 = scmp.eq.s32.totalorder %s18, 0
    %p85 = por %p83, %p84
    %s86 = ssub.s32 %s19, %s31
    %p87 = scmp.eq.s32.totalorder %s86, 0
    %s89 = sadd.s32 %s88, 1
    %s90 = scalar_select %p87, %s88, %s89
    %p93 = pneg %p87
    %p94 = scmp.eq.s32.totalorder %s12, 1
    %p95 = por %p93, %p94
    %p96 = scmp.ne.s32.totalorder %s88, %s91
    %p97 = scmp.eq.s32.totalorder %s12, 0
    %p98 = por %p96, %p97
    %p99 = scmp.ne.s32.totalorder %s88, %s91
    %p100 = scmp.eq.s32.totalorder %s17, 1
    %p101 = por %p99, %p100
    %p102 = scmp.ne.s32.totalorder %s91, %s92
    %p103 = scmp.eq.s32.totalorder %s17, 0
    %p104 = por %p102, %p103
    %p105 = scmp.ne.s32.totalorder %s91, %s92
    %p106 = scmp.eq.s32.totalorder %s18, 1
    %p107 = por %p105, %p106
    %p109 = scmp.ne.s32.totalorder %s92, %s108
    %p110 = scmp.eq.s32.totalorder %s18, 0
    %p111 = por %p109, %p110
    %s113 = sadd.s32 %s112, 1
    %p116 = scmp.eq.s32.totalorder %s12, 1
    %p117 = scmp.ne.s32.totalorder %s112, %s114
    %p118 = scmp.eq.s32.totalorder %s12, 0
    %p119 = por %p117, %p118
    %p120 = scmp.ne.s32.totalorder %s112, %s114
    %p121 = scmp.eq.s32.totalorder %s17, 1
    %p122 = por %p120, %p121
    %p123 = scmp.ne.s32.totalorder %s114, %s115
    %p124 = scmp.eq.s32.totalorder %s17, 0
    %p125 = por %p123, %p124
    %p126 = scmp.ne.s32.totalorder %s114, %s115
    %p127 = scmp.eq.s32.totalorder %s18, 1
    %p128 = por %p126, %p127
    %p130 = scmp.ne.s32.totalorder %s115, %s129
    %p131 = scmp.eq.s32.totalorder %s18, 0
    %p132 = por %p130, %p131
    %s134 = sadd.s32 %s133, 1
    %p137 = scmp.eq.s32.totalorder %s12, 1
    %p138 = scmp.ne.s32.totalorder %s133, %s135
    %p139 = scmp.eq.s32.totalorder %s12, 0
    %p140 = por %p138, %p139
    %p141 = scmp.ne.s32.totalorder %s133, %s135
    %p142 = scmp.eq.s32.totalorder %s17, 1
    %p143 = por %p141, %p142
    %p144 = scmp.ne.s32.totalorder %s135, %s136
    %p145 = scmp.eq.s32.totalorder %s17, 0
    %p146 = por %p144, %p145
    %p147 = scmp.ne.s32.totalorder %s135, %s136
    %p148 = scmp.eq.s32.totalorder %s18, 1
    %p149 = por %p147, %p148
    %p151 = scmp.ne.s32.totalorder %s136, %s150
    %p152 = scmp.eq.s32.totalorder %s18, 0
    %p153 = por %p151, %p152
    %s154 = ssub.s32 %s19, %s31
    %s155 = ssub.s32 %s20, %s27
    %s156 = sor.u32 %s154, %s155
    %p157 = scmp.eq.s32.totalorder %s156, 0
    %s159 = sadd.s32 %s158, 1
    %s160 = scalar_select %p157, %s158, %s159
    %p163 = pneg %p157
    %p164 = scmp.eq.s32.totalorder %s12, 1
    %p165 = por %p163, %p164
    %p166 = scmp.ne.s32.totalorder %s158, %s161
    %p167 = scmp.eq.s32.totalorder %s12, 0
    %p168 = por %p166, %p167
    %p169 = scmp.ne.s32.totalorder %s158, %s161
    %p170 = scmp.eq.s32.totalorder %s17, 1
    %p171 = por %p169, %p170
    %p172 = scmp.ne.s32.totalorder %s161, %s162
    %p173 = scmp.eq.s32.totalorder %s17, 0
    %p174 = por %p172, %p173
    %p175 = scmp.ne.s32.totalorder %s161, %s162
    %p176 = scmp.eq.s32.totalorder %s18, 1
    %p177 = por %p175, %p176
    %p179 = scmp.ne.s32.totalorder %s162, %s178
    %p180 = scmp.eq.s32.totalorder %s18, 0
    %p181 = por %p179, %p180
    %s182 = ssub.s32 %s19, %s31
    %s183 = ssub.s32 %s20, %s27
    %s184 = sor.u32 %s182, %s183
    %p185 = scmp.eq.s32.totalorder %s184, 0
    %s187 = sadd.s32 %s186, 1
    %s188 = scalar_select %p185, %s186, %s187
    %p191 = pneg %p185
    %p192 = scmp.eq.s32.totalorder %s12, 1
    %p193 = por %p191, %p192
    %p194 = scmp.ne.s32.totalorder %s186, %s189
    %p195 = scmp.eq.s32.totalorder %s12, 0
    %p196 = por %p194, %p195
    %p197 = scmp.ne.s32.totalorder %s186, %s189
    %p198 = scmp.eq.s32.totalorder %s17, 1
    %p199 = por %p197, %p198
    %p200 = scmp.ne.s32.totalorder %s189, %s190
    %p201 = scmp.eq.s32.totalorder %s17, 0
    %p202 = por %p200, %p201
    %p203 = scmp.ne.s32.totalorder %s189, %s190
    %p204 = scmp.eq.s32.totalorder %s18, 1
    %p205 = por %p203, %p204
    %p207 = scmp.ne.s32.totalorder %s190, %s206
    %p208 = scmp.eq.s32.totalorder %s18, 0
    %p209 = por %p207, %p208
    %p210 = scmp.le.s32.totalorder 1, %s12
    %p211 = scmp.lt.s32.totalorder %s12, 3
    %p212 = pnand %p210, %p211
    %p213 = pneg %p212
    // Predicated region
    $region9: #{fa_block_2d.7} parent=5 // pred_check
      _
    $region10: #{fa_block_2d.7} parent=5 // pred_check_branch
      %215 = sbr.rel (%p212) target = $region12
    $region11: #{fa_block_2d.7} parent=5 // pred_region
      %s216 = ssub.s32 %s12, 1
      // Predicated region
      $region13: #{fa_block_2d.7} parent=11 // pred_check
        %p217 = pneg %p125
      $region14: #{fa_block_2d.7} parent=11 // pred_check_branch
        %219 = sbr.rel (%p217) target = $region16
      $region15: #{fa_block_2d.7} parent=11 // pred_region
        _
      $region16: #{fa_block_2d.7} parent=11 // pred_fallthru
        _
      // Predicated region
      $region17: #{fa_block_2d.7} parent=11 // pred_check
        %p220 = pneg %p146
      $region18: #{fa_block_2d.7} parent=11 // pred_check_branch
        %222 = sbr.rel (%p220) target = $region20
      $region19: #{fa_block_2d.7} parent=11 // pred_region
        _
      $region20: #{fa_block_2d.7} parent=11 // pred_fallthru
        _
    $region12: #{fa_block_2d.7} parent=5 // pred_fallthru
      _
    %p223 = scmp.lt.s32.totalorder %s12, 2
    // Predicated region
    $region21: #{fa_block_2d.7} parent=5 // pred_check
      %p224 = pneg %p223
    $region22: #{fa_block_2d.7} parent=5 // pred_check_branch
      %226 = sbr.rel (%p224) target = $region24
    $region23: #{fa_block_2d.7} parent=5 // pred_region
      // Predicated region
      $region25: #{fa_block_2d.7} parent=23 // pred_check
        %p227 = pneg %p46
      $region26: #{fa_block_2d.7} parent=23 // pred_check_branch
        %229 = sbr.rel (%p227) target = $region28
      $region27: #{fa_block_2d.7} parent=23 // pred_region
        %s230 = smul.u32 2, %s20
        %p231 = scmp.lt.s32.totalorder %s19, 1
        %s232 = scalar_select %p231, %s19, 1
        %p233 = scmp.lt.s32.totalorder %s230, 1
        %s234 = scalar_select %p233, %s230, 1
        %s235 = smul.addr %s232, 4
        %s236 = sadd.s32 %s234, %s235
        %s237 = smul.addr %s236, 4
        %s238 = scalar_lea.vmem %s0, %s237
        %s239 = smul.u32 2, %s20
      $region28: #{fa_block_2d.7} parent=23 // pred_fallthru
        _
      // Predicated region
      $region29: #{fa_block_2d.7} parent=23 // pred_check
        %p240 = pneg %p72
      $region30: #{fa_block_2d.7} parent=23 // pred_check_branch
        %242 = sbr.rel (%p240) target = $region32
      $region31: #{fa_block_2d.7} parent=23 // pred_region
        %p243 = scmp.lt.s32.totalorder %s19, 1
        %s244 = scalar_select %p243, %s19, 1
        %s245 = smul.addr %s244, 2
        %s246 = smul.addr %s245, 8
        %s247 = scalar_lea.vmem %s1, %s246
      $region32: #{fa_block_2d.7} parent=23 // pred_fallthru
        _
      // Predicated region
      $region33: #{fa_block_2d.7} parent=23 // pred_check
        %p248 = pneg %p98
      $region34: #{fa_block_2d.7} parent=23 // pred_check_branch
        %250 = sbr.rel (%p248) target = $region36
      $region35: #{fa_block_2d.7} parent=23 // pred_region
        %p251 = scmp.lt.s32.totalorder %s19, 1
        %s252 = scalar_select %p251, %s19, 1
        %s253 = smul.addr %s252, 2
        %s254 = smul.addr %s253, 8
        %s255 = scalar_lea.vmem %s2, %s254
      $region36: #{fa_block_2d.7} parent=23 // pred_fallthru
        _
      // Predicated region
      $region37: #{fa_block_2d.7} parent=23 // pred_check
        %p256 = pneg %p168
      $region38: #{fa_block_2d.7} parent=23 // pred_check_branch
        %258 = sbr.rel (%p256) target = $region40
      $region39: #{fa_block_2d.7} parent=23 // pred_region
        %s259 = smul.u32 2, %s20
        %p260 = scmp.lt.s32.totalorder %s19, 1
        %s261 = scalar_select %p260, %s19, 1
        %p262 = scmp.lt.s32.totalorder %s259, 1
        %s263 = scalar_select %p262, %s259, 1
        %s264 = smul.addr %s261, 2
        %s265 = sadd.s32 %s263, %s264
        %s266 = smul.addr %s265, 8
        %s267 = scalar_lea.vmem %s5, %s266
        %s268 = smul.u32 2, %s20
      $region40: #{fa_block_2d.7} parent=23 // pred_fallthru
        _
    $region24: #{fa_block_2d.7} parent=5 // pred_fallthru
      _
    %p269 = scmp.le.s32.totalorder 1, %s12
    %p270 = scmp.lt.s32.totalorder %s12, 3
    %p271 = pnand %p269, %p270
    %p272 = pneg %p271
    // Predicated region
    $region41: #{fa_block_2d.7} parent=5 // pred_check
      _
    $region42: #{fa_block_2d.7} parent=5 // pred_check_branch
      %274 = sbr.rel (%p271) target = $region44
    $region43: #{fa_block_2d.7} parent=5 // pred_region
      %s275 = ssub.s32 %s12, 1
      %s276 = smul.u32 2, %s22
      %p277 = scmp.lt.s32.totalorder %s21, 1
      %s278 = scalar_select %p277, %s21, 1
      %p279 = scmp.lt.s32.totalorder %s276, 1
      %s280 = scalar_select %p279, %s276, 1
      %s281 = smul.addr %s278, 4
      %s282 = sadd.s32 %s280, %s281
      %s283 = smul.addr %s282, 4
      %s284 = scalar_lea.vmem %s0, %s283
      %p285 = pneg %p52
      %p286 = pneg %p49
      %p287 = scmp.lt.s32.totalorder %s21, 1
      %s288 = scalar_select %p287, %s21, 1
      %s289 = smul.addr %s288, 2
      %s290 = smul.addr %s289, 8
      %s291 = scalar_lea.vmem %s1, %s290
      %p292 = pneg %p78
      %p293 = pneg %p75
      %p294 = scmp.lt.s32.totalorder %s21, 1
      %s295 = scalar_select %p294, %s21, 1
      %s296 = smul.addr %s295, 2
      %s297 = smul.addr %s296, 8
      %s298 = scalar_lea.vmem %s2, %s297
      %p299 = pneg %p104
      %p300 = pneg %p101
      %p301 = pneg %p125
      %p302 = pneg %p122
      %p303 = pneg %p146
      %p304 = pneg %p143
      %s305 = smul.u32 2, %s22
      %p306 = scmp.lt.s32.totalorder %s21, 1
      %s307 = scalar_select %p306, %s21, 1
      %p308 = scmp.lt.s32.totalorder %s305, 1
      %s309 = scalar_select %p308, %s305, 1
      %s310 = smul.addr %s307, 2
      %s311 = sadd.s32 %s309, %s310
      %s312 = smul.addr %s311, 8
      %s313 = scalar_lea.vmem %s5, %s312
      %p314 = pneg %p174
      %p315 = pneg %p171
      %p316 = pneg %p202
      %p317 = pneg %p199
      %s318 = smul.u32 2, %s22
      %p319 = scmp.lt.s32.totalorder %s21, 1
      %s320 = scalar_select %p319, %s21, 1
      %p321 = scmp.lt.s32.totalorder %s318, 1
      %s322 = scalar_select %p321, %s318, 1
      %s323 = smul.addr %s320, 2
      %s324 = sadd.s32 %s322, %s323
      %s325 = smul.addr %s324, 8
      %s326 = scalar_lea.vmem %s6, %s325
      %s327 = smul.u32 2, %s22
      %p328 = scmp.lt.s32.totalorder %s21, 1
      %s329 = scalar_select %p328, %s21, 1
      %p330 = scmp.lt.s32.totalorder %s327, 1
      %s331 = scalar_select %p330, %s327, 1
      %s332 = smul.addr %s329, 4
      %s333 = sadd.s32 %s331, %s332
      %s334 = smul.addr %s333, 4
      %s335 = scalar_lea.vmem %s0, %s334
      %s336 = smul.u32 2, %s22
      %p337 = scmp.lt.s32.totalorder %s21, 1
      %s338 = scalar_select %p337, %s21, 1
      %s339 = smul.addr %s338, 2
      %s340 = smul.addr %s339, 8
      %s341 = scalar_lea.vmem %s1, %s340
      %p342 = scmp.lt.s32.totalorder %s21, 1
      %s343 = scalar_select %p342, %s21, 1
      %s344 = smul.addr %s343, 2
      %s345 = smul.addr %s344, 8
      %s346 = scalar_lea.vmem %s2, %s345
      %s347 = smul.u32 2, %s22
      %p348 = scmp.lt.s32.totalorder %s21, 1
      %s349 = scalar_select %p348, %s21, 1
      %p350 = scmp.lt.s32.totalorder %s347, 1
      %s351 = scalar_select %p350, %s347, 1
      %s352 = smul.addr %s349, 2
      %s353 = sadd.s32 %s351, %s352
      %s354 = smul.addr %s353, 8
      %s355 = scalar_lea.vmem %s5, %s354
      %s356 = smul.u32 2, %s22
      %s357 = smul.u32 2, %s22
      %p358 = scmp.lt.s32.totalorder %s21, 1
      %s359 = scalar_select %p358, %s21, 1
      %p360 = scmp.lt.s32.totalorder %s357, 1
      %s361 = scalar_select %p360, %s357, 1
      %s362 = smul.addr %s359, 2
      %s363 = sadd.s32 %s361, %s362
      %s364 = smul.addr %s363, 8
      %s365 = scalar_lea.vmem %s6, %s364
      %s366 = smul.u32 2, %s22
      %v368 = vld [vmem:[%s335] sm:$0xff]
      %v369 = vld [vmem:[%s335 + $0x8] sm:$0xff]
      %v370 = vunpack.c.l.bf16 %v368
      %v371 = vunpack.c.h.bf16 %v368
      %v372 = vunpack.c.l.bf16 %v369
      %v373 = vunpack.c.h.bf16 %v369
      %v374 = vld [vmem:[%s341] sm:$0xff]
      %v375 = vld [vmem:[%s341 + $0x8] sm:$0xff]
      %377 = vset.pattern.permute.xlu0 0
      %378 = vperm.xlu0 %377, %v374
      %v379 = vpop.permute.xlu0 %378
      %382 = vset.pattern.permute.xlu0 0
      %383 = vperm.xlu0 %382, %v375
      %v384 = vpop.permute.xlu0 %383
      %v386 = vmul.f32 %v370, %v379
      %v387 = vmul.f32 %v371, %v379
      %v388 = vmul.f32 %v372, %v384
      %v389 = vmul.f32 %v373, %v384
      %v390 = vld [vmem:[%s346] sm:$0xff]
      %v391 = vld [vmem:[%s346 + $0x8] sm:$0xff]
      %393 = vset.pattern.permute.xlu0 0
      %394 = vperm.xlu0 %393, %v390
      %v395 = vpop.permute.xlu0 %394
      %398 = vset.pattern.permute.xlu0 0
      %399 = vperm.xlu0 %398, %v391
      %v400 = vpop.permute.xlu0 %399
      %v402 = vadd.f32 %v386, %v395
      %v403 = vadd.f32 %v387, %v395
      %v404 = vadd.f32 %v388, %v400
      %v405 = vadd.f32 %v389, %v400
      %v406 = vld [vmem:[%s3] sm:$0xf]
      %v407 = vpack.c.bf16 %v404, %v402
      %v408 = vpack.c.bf16 %v405, %v403
      %vm409 = vcmask 130048
      %v411 = vsel %vm409, %v406, 0
      %413 = vmatprep.subr.bf16.mxu0 %v408
      %414 = vmatpush1.bf16.msra.mxu0 %v407
      %415 = vmatprep.subr.bf16.mxu0 0
      %416 = vmatpush1.bf16.msra.mxu0 0
      %417 = vmatprep.subr.bf16.mxu0 0
      %418 = vmatpush1.bf16.msra.mxu0 0
      %419 = vmatprep.subr.bf16.mxu0 0
      %420 = vmatpush1.bf16.msra.mxu0 0
      %421 = vmatprep.subr.bf16.mxu0 0
      %422 = vmatpush1.bf16.msra.mxu0 0
      %423 = vmatprep.subr.bf16.mxu0 0
      %424 = vmatpush1.bf16.msra.mxu0 0
      %425 = vmatprep.subr.bf16.mxu0 0
      %426 = vmatpush1.bf16.msra.mxu0 0
      %427 = vmatprep.subr.bf16.mxu0 0
      %428 = vmatpush1.bf16.msra.mxu0 0
      %429 = vmatprep.subr.bf16.mxu0 0
      %430 = vmatpush1.bf16.msra.mxu0 0
      %431 = vmatprep.subr.bf16.mxu0 0
      %432 = vmatpush1.bf16.msra.mxu0 0
      %433 = vmatprep.subr.bf16.mxu0 0
      %434 = vmatpush1.bf16.msra.mxu0 0
      %435 = vmatprep.subr.bf16.mxu0 0
      %436 = vmatpush1.bf16.msra.mxu0 0
      %437 = vmatprep.subr.bf16.mxu0 0
      %438 = vmatpush1.bf16.msra.mxu0 0
      %439 = vmatprep.subr.bf16.mxu0 0
      %440 = vmatpush1.bf16.msra.mxu0 0
      %441 = vmatprep.subr.bf16.mxu0 0
      %442 = vmatpush1.bf16.msra.mxu0 0
      %443 = vmatprep.subr.bf16.mxu0 0
      %444 = vmatpush1.bf16.msra.mxu0 0
      %445 = vmatprep.mubr.bf16.mxu0 0
      %446 = vmatmul.mubr.bf16.gmra.mrb[0].mxu0 %v411
      %v447 = vpop.f32.mrb[0].mxu0
      %v448 = vadd.f32 0.0, %v447
      %v449 = vpop.f32.mrb[0].mxu0
      %v450 = vadd.f32 0.0, %v449
      %v451 = vpop.f32.mrb[0].mxu0
      %v452 = vpop.f32.mrb[0].mxu0
      %453 = vdwg.mxu0
      %v454 = vmul.f32 %v448, 0.5
      %v455 = vmul.f32 %v450, 0.5
      %v456 = vmul.f32 %v448, 0.70710677
      %v457 = vmul.f32 %v450, 0.70710677
      %v458 = vand.u32 2147483647, %v456
      %v459 = vand.u32 2147483647, %v457
      %v460 = vmul.f32 %v458, 0.3275911
      %v461 = vmul.f32 %v459, 0.3275911
      %v462 = vadd.f32 %v460, 1.0
      %v463 = vadd.f32 %v461, 1.0
      %v464 = vrcp.pop %v462
      %v465 = vmul.f32 1.0, %v464
      %v466 = vrcp.pop %v463
      %v467 = vmul.f32 1.0, %v466
      %v468 = vmul.f32 %v465, 1.0614054
      %v469 = vmul.f32 %v467, 1.0614054
      %v470 = vadd.f32 %v468, -1.4531521
      %v471 = vadd.f32 %v469, -1.4531521
      %v472 = vmul.f32 %v470, %v465
      %v473 = vmul.f32 %v471, %v467
      %v474 = vadd.f32 %v472, 1.4214138
      %v475 = vadd.f32 %v473, 1.4214138
      %v476 = vmul.f32 %v474, %v465
      %v477 = vmul.f32 %v475, %v467
      %v478 = vadd.f32 %v476, -0.28449672
      %v479 = vadd.f32 %v477, -0.28449672
      %v480 = vmul.f32 %v478, %v465
      %v481 = vmul.f32 %v479, %v467
      %v482 = vadd.f32 %v480, 0.2548296
      %v483 = vadd.f32 %v481, 0.2548296
      %v484 = vmul.f32 %v482, %v465
      %v485 = vmul.f32 %v483, %v467
      %v486 = vsub.f32 0.0, %v458
      %v487 = vsub.f32 0.0, %v459
      %v488 = vmul.f32 %v486, %v458
      %v489 = vmul.f32 %v487, %v459
      %v490 = vmul.f32 %v488, 1.442695
      %v491 = vpow.pop %v490
      %v492 = vmul.f32 %v489, 1.442695
      %v493 = vpow.pop %v492
      %v494 = vmul.f32 %v484, %v491
      %v495 = vmul.f32 %v485, %v493
      %v496 = vsub.f32 1.0, %v494
      %v497 = vsub.f32 1.0, %v495
      %vm498 = vcmp.ge.f32.partialorder %v456, 0.0
      %vm499 = vcmp.ge.f32.partialorder %v457, 0.0
      %v500 = vsub.f32 0.0, %v496
      %v501 = vsub.f32 0.0, %v497
      %v502 = vsel %vm498, %v496, %v500
      %v503 = vsel %vm499, %v497, %v501
      %v504 = vadd.f32 %v502, 1.0
      %v505 = vadd.f32 %v503, 1.0
      %v506 = vmul.f32 %v454, %v504
      %v507 = vmul.f32 %v455, %v505
      %v508 = vld [vmem:[%s4] sm:$0xf]
      %v509 = vpack.c.bf16 %v506, %v506
      %v510 = vpack.c.bf16 %v507, %v507
      %v511 = vld [vmem:[%s355] sm:$0xff]
      %v512 = vld [vmem:[%s355 + $0x8] sm:$0xff]
      %vm513 = vcmask 64512
      %v515 = vsel %vm513, %v508, 0
      %vm517 = vcmask 1043456
      %v519 = vsel %vm517, %v509, 0
      %v522 = vsel %vm517, %v510, 0
      %524 = vmatprep.subr.bf16.mxu0 %v522
      %525 = vmatpush1.bf16.msra.mxu0 %v519
      %526 = vmatprep.subr.bf16.mxu0 0
      %527 = vmatpush1.bf16.msra.mxu0 0
      %528 = vmatprep.subr.bf16.mxu0 0
      %529 = vmatpush1.bf16.msra.mxu0 0
      %530 = vmatprep.subr.bf16.mxu0 0
      %531 = vmatpush1.bf16.msra.mxu0 0
      %532 = vmatprep.subr.bf16.mxu0 0
      %533 = vmatpush1.bf16.msra.mxu0 0
      %534 = vmatprep.subr.bf16.mxu0 0
      %535 = vmatpush1.bf16.msra.mxu0 0
      %536 = vmatprep.subr.bf16.mxu0 0
      %537 = vmatpush1.bf16.msra.mxu0 0
      %538 = vmatprep.subr.bf16.mxu0 0
      %539 = vmatpush1.bf16.msra.mxu0 0
      %540 = vmatprep.subr.bf16.mxu0 0
      %541 = vmatpush1.bf16.msra.mxu0 0
      %542 = vmatprep.subr.bf16.mxu0 0
      %543 = vmatpush1.bf16.msra.mxu0 0
      %544 = vmatprep.subr.bf16.mxu0 0
      %545 = vmatpush1.bf16.msra.mxu0 0
      %546 = vmatprep.subr.bf16.mxu0 0
      %547 = vmatpush1.bf16.msra.mxu0 0
      %548 = vmatprep.subr.bf16.mxu0 0
      %549 = vmatpush1.bf16.msra.mxu0 0
      %550 = vmatprep.subr.bf16.mxu0 0
      %551 = vmatpush1.bf16.msra.mxu0 0
      %552 = vmatprep.subr.bf16.mxu0 0
      %553 = vmatpush1.bf16.msra.mxu0 0
      %554 = vmatprep.subr.bf16.mxu0 0
      %555 = vmatpush1.bf16.msra.mxu0 0
      %556 = vmatprep.mubr.bf16.mxu0 0
      %557 = vmatmul.mubr.bf16.gmra.mrb[0].mxu0 %v515
      %v558 = vpop.f32.mrb[0].mxu0
      %v559 = vadd.f32 %v511, %v558
      %v560 = vpop.f32.mrb[0].mxu0
      %v561 = vadd.f32 %v512, %v560
      %v562 = vpop.f32.mrb[0].mxu0
      %v563 = vpop.f32.mrb[0].mxu0
      %564 = vdwg.mxu0
      %565 = vst [vmem:[%s365] sm:$0xff] %v559
      %566 = vst [vmem:[%s365 + $0x8] sm:$0xff] %v561
      %s567 = smul.u32 2, %s22
      %p568 = scmp.lt.s32.totalorder %s21, 1
      %s569 = scalar_select %p568, %s21, 1
      %p570 = scmp.lt.s32.totalorder %s567, 1
      %s571 = scalar_select %p570, %s567, 1
      %s572 = smul.addr %s569, 2
      %s573 = sadd.s32 %s571, %s572
      %s574 = smul.addr %s573, 8
      %s575 = scalar_lea.vmem %s6, %s574
      // Predicated region
      $region45: #{fa_block_2d.7} parent=43 // pred_check
        %p576 = pneg %p199
      $region46: #{fa_block_2d.7} parent=43 // pred_check_branch
        %578 = sbr.rel (%p576) target = $region48
      $region47: #{fa_block_2d.7} parent=43 // pred_region
        %s579 = smul.u32 2, %s22
      $region48: #{fa_block_2d.7} parent=43 // pred_fallthru
        _
    $region44: #{fa_block_2d.7} parent=5 // pred_fallthru
      _
    %p580 = scmp.le.s32.totalorder 2, %s12
    // Predicated region
    $region49: #{fa_block_2d.7} parent=5 // pred_check
      %p581 = pneg %p580
    $region50: #{fa_block_2d.7} parent=5 // pred_check_branch
      %583 = sbr.rel (%p581) target = $region52
    $region51: #{fa_block_2d.7} parent=5 // pred_region
      %s584 = ssub.s32 %s12, 2
      // Predicated region
      $region53: #{fa_block_2d.7} parent=51 // pred_check
        %p585 = pneg %p205
      $region54: #{fa_block_2d.7} parent=51 // pred_check_branch
        %587 = sbr.rel (%p585) target = $region56
      $region55: #{fa_block_2d.7} parent=51 // pred_region
        %s588 = smul.u32 2, %s24
        %p589 = scmp.lt.s32.totalorder %s23, 1
        %s590 = scalar_select %p589, %s23, 1
        %p591 = scmp.lt.s32.totalorder %s588, 1
        %s592 = scalar_select %p591, %s588, 1
        %s593 = smul.addr %s590, 2
        %s594 = sadd.s32 %s592, %s593
        %s595 = smul.addr %s594, 8
        %s596 = scalar_lea.vmem %s6, %s595
      $region56: #{fa_block_2d.7} parent=51 // pred_fallthru
        _
    $region52: #{fa_block_2d.7} parent=5 // pred_fallthru
      _
  $region6: #{fa_block_2d.7} parent=0 // loop_footer
    %s16 = sadd.s32 1, %s12
  $region7: #{fa_block_2d.7} parent=0 // loop_footer_branch
    %11 = sbr.rel target = $region3
  $region8: #{fa_block_2d.7} parent=0 // loop_exit
    _

</llo_original>
